<compile_context>
chip_gen: v6e
topology: v6e:2x2x1
jax: 0.10.0
libtpu: 0.0.40
codegen_flags: <defaults>
</compile_context>

<pallas_src>
import functools

import jax
import jax.numpy as jnp
from jax.experimental import pallas as pl
from jax.experimental.pallas import tpu as pltpu


# ----------------------------------------------------------------------------
# Generation-aware tiling constants
# ----------------------------------------------------------------------------

def _query_vmem_bytes():
    try:
        return int(pltpu.get_tpu_info().vmem_capacity_bytes)
    except Exception:
        return 64 * 1024 * 1024          # assume v7x-like budget if query fails


_VMEM_BYTES = _query_vmem_bytes()
if _VMEM_BYTES >= 100 * 1024 * 1024:     # v5e / v6e: 128 MiB VMEM
    _TM, _TN, _TK = 1024, 1024, 1024
    _VMEM_LIMIT = 100 * 1024 * 1024
else:                                    # v7x: 64 MiB VMEM
    _TM, _TN, _TK = 1024, 512, 512
    _VMEM_LIMIT = 48 * 1024 * 1024


def _round_up(x, m):
    return (x + m - 1) // m * m


def _tile(dim, max_tile):
    """(tile, padded_dim). Small dims use one full-extent block (no padding)."""
    if dim <= max_tile:
        return dim, dim
    return max_tile, _round_up(dim, max_tile)


# ----------------------------------------------------------------------------
# Tiled linear:  o = act(x @ w + b)   (bf16 in / bf16 out, f32 accumulate)
# ----------------------------------------------------------------------------

def _bias_act(y, b, activation):
    y = y + b
    if activation == "relu":
        y = jnp.maximum(y, 0.0)
    elif activation == "gelu":
        # TODO(synk): HF XLM-R uses exact erf GELU; tanh approximation here.
        y = jax.nn.gelu(y)
    return y


def _linear_kernel(x_ref, w_ref, b_ref, o_ref, *acc, activation):
    if acc:                                        # multi-step K reduction
        acc_ref = acc[0]

        @pl.when(pl.program_id(2) == 0)
        def _():
            acc_ref[...] = jnp.zeros_like(acc_ref)

        acc_ref[...] += jnp.dot(x_ref[...], w_ref[...],
                                preferred_element_type=jnp.float32)

        @pl.when(pl.program_id(2) == pl.num_programs(2) - 1)
        def _():
            o_ref[...] = _bias_act(acc_ref[...], b_ref[...],
                                   activation).astype(o_ref.dtype)
    else:                                          # K fits one tile: no scratch
        y = jnp.dot(x_ref[...], w_ref[...], preferred_element_type=jnp.float32)
        o_ref[...] = _bias_act(y, b_ref[...], activation).astype(o_ref.dtype)


def linear(x, w, b, activation=None, out_dtype=jnp.bfloat16):
    """x:[M,K] bf16, w:[K,N] bf16, b:[1,N] f32 -> [M,N] out_dtype."""
    M, K = x.shape
    Kw, N = w.shape
    assert K == Kw and b.shape == (1, N)

    tm, Mp = _tile(M, _TM)
    tn, Np = _tile(N, _TN)
    tk, Kp = _tile(K, _TK)

    if (Mp, Kp) != (M, K):                 # activation pad; no-op at these shapes
        x = jnp.pad(x, ((0, Mp - M), (0, Kp - K)))
    if (Kp, Np) != (K, N):                 # fallback only; params come pre-shaped
        w = jnp.pad(w, ((0, Kp - K), (0, Np - N)))
    if Np != N:
        b = jnp.pad(b, ((0, 0), (0, Np - N)))

    n_k = Kp // tk
    grid = (Mp // tm, Np // tn, n_k)
    scratch = [pltpu.VMEM((tm, tn), jnp.float32)] if n_k > 1 else []

    out = pl.pallas_call(
        functools.partial(_linear_kernel, activation=activation),
        out_shape=jax.ShapeDtypeStruct((Mp, Np), out_dtype),
        grid=grid,
        in_specs=[
            pl.BlockSpec((tm, tk), lambda i, j, k: (i, k)),
            pl.BlockSpec((tk, tn), lambda i, j, k: (k, j)),
            pl.BlockSpec((1, tn), lambda i, j, k: (0, j)),
        ],
        out_specs=pl.BlockSpec((tm, tn), lambda i, j, k: (i, j)),
        scratch_shapes=scratch,
        compiler_params=pltpu.CompilerParams(
            dimension_semantics=("parallel", "parallel", "arbitrary"),
            vmem_limit_bytes=_VMEM_LIMIT,
        ),
    )(x, w, b)

    if (Mp, Np) != (M, N):
        out = out[:M, :N]
    return out


# ----------------------------------------------------------------------------
# LayerNorm (standalone) and fused linear + residual-add + LayerNorm
# ----------------------------------------------------------------------------

def _ln_core(x, g, b, eps):
    mean = jnp.mean(x, axis=-1, keepdims=True)
    xc = x - mean
    var = jnp.mean(xc * xc, axis=-1, keepdims=True)
    return xc * jax.lax.rsqrt(var + eps) * g + b


def _layernorm_kernel(x_ref, g_ref, b_ref, o_ref, *, eps):
    x = x_ref[...].astype(jnp.float32)
    o_ref[...] = _ln_core(x, g_ref[...], b_ref[...], eps).astype(o_ref.dtype)


def layernorm(x, g, b, eps=1e-5, out_dtype=jnp.bfloat16):
    M, E = x.shape
    tm, Mp = _tile(M, _TM)
    if Mp != M:
        x = jnp.pad(x, ((0, Mp - M), (0, 0)))
    row = pl.BlockSpec((tm, E), lambda i: (i, 0))
    vec = pl.BlockSpec((1, E), lambda i: (0, 0))
    out = pl.pallas_call(
        functools.partial(_layernorm_kernel, eps=eps),
        out_shape=jax.ShapeDtypeStruct((Mp, E), out_dtype),
        grid=(Mp // tm,),
        in_specs=[row, vec, vec],
        out_specs=row,
        compiler_params=pltpu.CompilerParams(
            dimension_semantics=("parallel",),
            vmem_limit_bytes=_VMEM_LIMIT,
        ),
    )(x, g, b)
    return out[:M] if Mp != M else out


def _linear_add_ln_kernel(x_ref, w_ref, b_ref, r_ref, g_ref, bt_ref, o_ref,
                          *acc, eps):
    if acc:                                        # multi-step K reduction
        acc_ref = acc[0]

        @pl.when(pl.program_id(1) == 0)
        def _():
            acc_ref[...] = jnp.zeros_like(acc_ref)

        acc_ref[...] += jnp.dot(x_ref[...], w_ref[...],
                                preferred_element_type=jnp.float32)

        @pl.when(pl.program_id(1) == pl.num_programs(1) - 1)
        def _():
            y = acc_ref[...] + b_ref[...] + r_ref[...].astype(jnp.float32)
            o_ref[...] = _ln_core(y, g_ref[...], bt_ref[...],
                                  eps).astype(o_ref.dtype)
    else:
        y = jnp.dot(x_ref[...], w_ref[...], preferred_element_type=jnp.float32)
        y = y + b_ref[...] + r_ref[...].astype(jnp.float32)
        o_ref[...] = _ln_core(y, g_ref[...], bt_ref[...], eps).astype(o_ref.dtype)


def linear_add_ln(x, w, b, residual, gamma, beta, eps=1e-5):
    """out = LayerNorm(x @ w + b + residual); projection/add/LN in one kernel."""
    M, K = x.shape
    Kw, E = w.shape
    assert K == Kw and residual.shape == (M, E)

    tm, Mp = _tile(M, _TM)
    tk, Kp = _tile(K, _TK)
    if (Mp, Kp) != (M, K):
        x = jnp.pad(x, ((0, Mp - M), (0, Kp - K)))
    if Kp != K:                               # fallback only
        w = jnp.pad(w, ((0, Kp - K), (0, 0)))
    if Mp != M:
        residual = jnp.pad(residual, ((0, Mp - M), (0, 0)))

    n_k = Kp // tk
    grid = (Mp // tm, n_k)
    scratch = [pltpu.VMEM((tm, E), jnp.float32)] if n_k > 1 else []

    out = pl.pallas_call(
        functools.partial(_linear_add_ln_kernel, eps=eps),
        out_shape=jax.ShapeDtypeStruct((Mp, E), jnp.bfloat16),
        grid=grid,
        in_specs=[
            pl.BlockSpec((tm, tk), lambda i, k: (i, k)),
            pl.BlockSpec((tk, E), lambda i, k: (k, 0)),
            pl.BlockSpec((1, E), lambda i, k: (0, 0)),
            pl.BlockSpec((tm, E), lambda i, k: (i, 0)),
            pl.BlockSpec((1, E), lambda i, k: (0, 0)),
            pl.BlockSpec((1, E), lambda i, k: (0, 0)),
        ],
        out_specs=pl.BlockSpec((tm, E), lambda i, k: (i, 0)),
        scratch_shapes=scratch,
        compiler_params=pltpu.CompilerParams(
            dimension_semantics=("parallel", "arbitrary"),
            vmem_limit_bytes=_VMEM_LIMIT,
        ),
    )(x, w, b, residual, gamma, beta)
    return out[:M] if Mp != M else out


# ----------------------------------------------------------------------------
# Multi-head self-attention (all heads of one batch element per grid step)
# ----------------------------------------------------------------------------

def _mha_kernel(qkv_ref, o_ref, *, n_heads, scale):
    """qkv block: [1, S, 3E] bf16. Heads merged in-register, one [S,E] store."""
    S = qkv_ref.shape[1]
    E = qkv_ref.shape[2] // 3
    Dh = E // n_heads

    ctx = []
    for h in range(n_heads):          # small static loop, fully unrolled
        # fold the 1/sqrt(Dh) scale into q ([S,Dh] mult instead of [S,S])
        q = (qkv_ref[0, :, h * Dh:(h + 1) * Dh].astype(jnp.float32)
             * scale).astype(jnp.bfloat16)
        k = qkv_ref[0, :, E + h * Dh:E + (h + 1) * Dh]
        v = qkv_ref[0, :, 2 * E + h * Dh:2 * E + (h + 1) * Dh]

        # scores = q @ k^T (transposed contraction, no materialized k.T)
        s = jax.lax.dot_general(q, k, (((1,), (1,)), ((), ())),
                                preferred_element_type=jnp.float32)
        s = s - jnp.max(s, axis=-1, keepdims=True)
        p = jnp.exp(s)
        p = p * pl.reciprocal(jnp.sum(p, axis=-1, keepdims=True), approx=True)

        ctx.append(jax.lax.dot_general(
            p.astype(jnp.bfloat16), v, (((1,), (0,)), ((), ())),
            preferred_element_type=jnp.float32))

    # single lane-dense store of the merged [S, E] context
    o_ref[0, :, :] = jnp.concatenate(ctx, axis=-1).astype(o_ref.dtype)


def mha_attention(qkv, n_heads):
    """qkv: [B, S, 3E] bf16 fused projection output -> [B, S, E] bf16 context."""
    B, S, E3 = qkv.shape
    E = E3 // 3
    Dh = E // n_heads
    scale = 1.0 / (Dh ** 0.5)
    # TODO(synk): for S >~ 1K, tile queries flash-style instead of the full
    # [S, S] score temporary (VMEM cliff on v7x's 64 MiB).
    return pl.pallas_call(
        functools.partial(_mha_kernel, n_heads=n_heads, scale=scale),
        out_shape=jax.ShapeDtypeStruct((B, S, E), jnp.bfloat16),
        grid=(B,),
        in_specs=[pl.BlockSpec((1, S, E3), lambda b: (b, 0, 0))],
        out_specs=pl.BlockSpec((1, S, E), lambda b: (b, 0, 0)),
        compiler_params=pltpu.CompilerParams(
            dimension_semantics=("parallel",),
            vmem_limit_bytes=_VMEM_LIMIT,
        ),
    )(qkv)


# ----------------------------------------------------------------------------
# Fused MLP head (all layers in one pallas_call, weights VMEM-resident)
# ----------------------------------------------------------------------------

def _mlp_kernel(*refs, n_layers):
    x_ref = refs[0]
    w_refs = refs[1:1 + n_layers]
    b_refs = refs[1 + n_layers:1 + 2 * n_layers]
    o_ref = refs[-1]

    h = x_ref[...]
    for i in range(n_layers):
        y = jnp.dot(h.astype(jnp.bfloat16), w_refs[i][...],
                    preferred_element_type=jnp.float32)
        y = y + b_refs[i][...]
        if i < n_layers - 1:
            h = jnp.maximum(y, 0.0).astype(jnp.bfloat16)   # ReLU on hidden layers
        else:
            h = y                                          # final logits in f32
    o_ref[...] = h.astype(o_ref.dtype)


def mlp_forward(layers, x):
    """MultiLayerPerceptron head as one kernel: Linear+ReLU stack, last Linear plain."""
    M, K = x.shape
    n_layers = len(layers)
    N = layers[-1][0].shape[1]

    tm, Mp = _tile(M, _TM)
    if Mp != M:
        x = jnp.pad(x, ((0, Mp - M), (0, 0)))
    ws = [w for w, _ in layers]
    bs = [b for _, b in layers]

    in_specs = [pl.BlockSpec((tm, K), lambda i: (i, 0))]
    in_specs += [pl.BlockSpec(w.shape, lambda i: (0, 0)) for w in ws]
    in_specs += [pl.BlockSpec(b.shape, lambda i: (0, 0)) for b in bs]

    out = pl.pallas_call(
        functools.partial(_mlp_kernel, n_layers=n_layers),
        out_shape=jax.ShapeDtypeStruct((Mp, N), jnp.float32),
        grid=(Mp // tm,),
        in_specs=in_specs,
        out_specs=pl.BlockSpec((tm, N), lambda i: (i, 0)),
        compiler_params=pltpu.CompilerParams(
            dimension_semantics=("parallel",),
            vmem_limit_bytes=_VMEM_LIMIT,
        ),
    )(x, *ws, *bs)
    return out[:M] if Mp != M else out


# ----------------------------------------------------------------------------
# Encoder layer + full forward (plain-JAX glue around Pallas kernels)
# ----------------------------------------------------------------------------

def encoder_layer(p, x, n_heads):
    B, S, E = x.shape
    xf = x.reshape(B * S, E)

    # Fused QKV projection: one [E, 3E] matmul instead of three [E, E].
    qkv = linear(xf, p["w_qkv"], p["b_qkv"])                     # [B*S, 3E] bf16
    attn = mha_attention(qkv.reshape(B, S, 3 * E), n_heads)      # [B, S, E] bf16
    # attention out-proj + residual + LayerNorm fused in one kernel
    h1 = linear_add_ln(attn.reshape(B * S, E), p["wo"], p["bo"],
                       xf, p["ln1_g"], p["ln1_b"])
    f = linear(h1, p["w1"], p["b1"], activation="gelu")          # [B*S, ffn] bf16
    # FFN down-proj + residual + LayerNorm fused in one kernel
    h2 = linear_add_ln(f, p["w2"], p["b2"], h1, p["ln2_g"], p["ln2_b"])
    return h2.reshape(B, S, E)


def xlmr_ic_ner_forward(params, token_ids, n_heads, apply_softmax=False):
    """Mirrors XLMRobertaForIcAndNer.forward: returns (ic_out, ner_out)."""
    B, S = token_ids.shape
    E = params["word_emb"].shape[1]

    # Embedding gather is XLA glue; LayerNorm runs in Pallas (bf16 out).
    h = jnp.take(params["word_emb"], token_ids, axis=0) \
        + params["pos_emb"][:S][None, :, :]
    h = layernorm(h.reshape(B * S, E),
                  params["emb_ln_g"], params["emb_ln_b"]).reshape(B, S, E)

    for lyr in params["layers"]:
        h = encoder_layer(lyr, h, n_heads)

    cls_tok = h[:, 0, :]                                 # [B, E] bf16
    tokens = h[:, 1:, :].reshape(B * (S - 1), E)         # [B*(S-1), E] bf16

    ic_out = mlp_forward(params["mlp_ic"], cls_tok)      # [B, intent_vocab] f32
    ner_out = mlp_forward(params["mlp_ner"], tokens)     # [B*(S-1), label_vocab]
    ner_out = ner_out.reshape(B, S - 1, -1)

    if apply_softmax:
        ic_out = jax.nn.softmax(ic_out, axis=-1)
        ner_out = jax.nn.softmax(ner_out, axis=-1)
    return ic_out, ner_out


# ----------------------------------------------------------------------------
# Deterministic parameter construction (weights pre-cast bf16, biases/LN f32)
# ----------------------------------------------------------------------------

def _dense_init(key, shape, scale=0.02, dtype=jnp.bfloat16):
    return (scale * jax.random.normal(key, shape)).astype(dtype)


def make_params(key, *, vocab_size, max_pos, E, n_layers, n_heads, ffn,
                hidden_size, label_vocab_size, intent_vocab_size, n_hidden_layers):
    keys = iter(jax.random.split(key, 256))

    def layer_params():
        return {
            "w_qkv": _dense_init(next(keys), (E, 3 * E)),
            "b_qkv": jnp.zeros((1, 3 * E), jnp.float32),
            "wo": _dense_init(next(keys), (E, E)), "bo": jnp.zeros((1, E), jnp.float32),
            "w1": _dense_init(next(keys), (E, ffn)), "b1": jnp.zeros((1, ffn), jnp.float32),
            "w2": _dense_init(next(keys), (ffn, E)), "b2": jnp.zeros((1, E), jnp.float32),
            "ln1_g": jnp.ones((1, E), jnp.float32), "ln1_b": jnp.zeros((1, E), jnp.float32),
            "ln2_g": jnp.ones((1, E), jnp.float32), "ln2_b": jnp.zeros((1, E), jnp.float32),
        }

    def mlp_params(in_dim, out_dim):
        dims = [in_dim] + [hidden_size] * n_hidden_layers + [out_dim]
        return [(_dense_init(next(keys), (dims[i], dims[i + 1])),
                 jnp.zeros((1, dims[i + 1]), jnp.float32))
                for i in range(len(dims) - 1)]

    return {
        "word_emb": _dense_init(next(keys), (vocab_size, E), dtype=jnp.float32),
        "pos_emb": _dense_init(next(keys), (max_pos, E), dtype=jnp.float32),
        "emb_ln_g": jnp.ones((1, E), jnp.float32),
        "emb_ln_b": jnp.zeros((1, E), jnp.float32),
        "layers": [layer_params() for _ in range(n_layers)],
        "mlp_ner": mlp_params(E, label_vocab_size),
        "mlp_ic": mlp_params(E, intent_vocab_size),
    }


# ----------------------------------------------------------------------------
if __name__ == "__main__":
    B, S = 2, 8
    E = 32                 # encoding_size
    HIDDEN = 64            # hidden_size of the MLP heads
    LABEL_VOCAB = 5        # label_vocab_size (NER)
    INTENT_VOCAB = 7       # intent_vocab_size (IC)
    N_HIDDEN_LAYERS = 5    # module default
    VOCAB, MAX_POS = 100, 16
    ENC_LAYERS, N_HEADS, FFN = 2, 4, 64

    root = jax.random.PRNGKey(0)
    k_params, k_ids = jax.random.split(root)

    params = make_params(
        k_params, vocab_size=VOCAB, max_pos=MAX_POS, E=E, n_layers=ENC_LAYERS,
        n_heads=N_HEADS, ffn=FFN, hidden_size=HIDDEN,
        label_vocab_size=LABEL_VOCAB, intent_vocab_size=INTENT_VOCAB,
        n_hidden_layers=N_HIDDEN_LAYERS,
    )

    token_ids = jax.random.randint(k_ids, (B, S), 0, VOCAB, dtype=jnp.int32)

    forward = jax.jit(xlmr_ic_ner_forward,
                      static_argnames=("n_heads", "apply_softmax"))
    ic_out, ner_out = forward(params, token_ids,
                              n_heads=N_HEADS, apply_softmax=False)
    jax.block_until_ready((ic_out, ner_out))

    assert ic_out.shape == (B, INTENT_VOCAB), ic_out.shape
    assert ner_out.shape == (B, S - 1, LABEL_VOCAB), ner_out.shape
    assert bool(jnp.all(jnp.isfinite(ic_out))) and bool(jnp.all(jnp.isfinite(ner_out)))
    print("KERNEL_OK")
</pallas_src>

<mosaic_0001>
module attributes {stable_mosaic.version = 11 : i64} {
  func.func @_linear_kernel(%arg0: i32, %arg1: i32, %arg2: i32, %arg3: memref<16x32xbf16, #tpu.memory_space<vmem>>, %arg4: memref<32x96xbf16, #tpu.memory_space<vmem>>, %arg5: memref<1x96xf32, #tpu.memory_space<vmem>>, %arg6: memref<16x96xbf16, #tpu.memory_space<vmem>>) attributes {dimension_semantics = [#tpu.dimension_semantics<parallel>, #tpu.dimension_semantics<parallel>, #tpu.dimension_semantics<arbitrary>], iteration_bounds = array<i64: 1, 1, 1>, scalar_prefetch = 0 : i64, scratch_operands = 0 : i64, tpu.core_type = #tpu.core_type<tc>, window_params = [{transform_indices = @transform_0, window_bounds = array<i64: 16, 32>}, {transform_indices = @transform_1, window_bounds = array<i64: 32, 96>}, {transform_indices = @transform_2, window_bounds = array<i64: 1, 96>}, {transform_indices = @transform_3, window_bounds = array<i64: 16, 96>}]} {
    %c0 = arith.constant 0 : index
    %c0_0 = arith.constant 0 : index
    %0 = vector.load %arg3[%c0, %c0_0] : memref<16x32xbf16, #tpu.memory_space<vmem>>, vector<16x32xbf16>
    %c0_1 = arith.constant 0 : index
    %c0_2 = arith.constant 0 : index
    %1 = vector.load %arg4[%c0_1, %c0_2] : memref<32x96xbf16, #tpu.memory_space<vmem>>, vector<32x96xbf16>
    %cst = arith.constant dense<0.000000e+00> : vector<16x96xf32>
    %2 = tpu.matmul %0, %1, %cst {dimension_numbers = #tpu.dot_dimension_numbers<[1], [0], [0], [1], [0, 0, 1, 1], [], []>} : vector<16x32xbf16>, vector<32x96xbf16>, vector<16x96xf32> -> vector<16x96xf32>
    %c0_3 = arith.constant 0 : index
    %c0_4 = arith.constant 0 : index
    %3 = vector.load %arg5[%c0_3, %c0_4] : memref<1x96xf32, #tpu.memory_space<vmem>>, vector<1x96xf32>
    %4 = vector.broadcast %3 : vector<1x96xf32> to vector<16x96xf32>
    %5 = arith.addf %2, %4 : vector<16x96xf32>
    %6 = arith.truncf %5 : vector<16x96xf32> to vector<16x96xbf16>
    %c0_5 = arith.constant 0 : index
    %c0_6 = arith.constant 0 : index
    %7 = vector.load %arg6[%c0_5, %c0_6] : memref<16x96xbf16, #tpu.memory_space<vmem>>, vector<16x96xbf16>
    tpu.vector_store %arg6[%c0_5, %c0_6], %6 {strides = array<i32>} : memref<16x96xbf16, #tpu.memory_space<vmem>>, vector<16x96xbf16>,
    return
  }
  func.func @transform_0(%arg0: i32, %arg1: i32, %arg2: i32) -> (i32, i32) {
    %c0_i32 = arith.constant 0 : i32
    return %arg0, %arg2 : i32, i32
  }
  func.func @transform_1(%arg0: i32, %arg1: i32, %arg2: i32) -> (i32, i32) {
    %c0_i32 = arith.constant 0 : i32
    return %arg2, %arg1 : i32, i32
  }
  func.func @transform_2(%arg0: i32, %arg1: i32, %arg2: i32) -> (i32, i32) {
    %c0_i32 = arith.constant 0 : i32
    %c0_i32_0 = arith.constant 0 : i32
    return %c0_i32, %arg1 : i32, i32
  }
  func.func @transform_3(%arg0: i32, %arg1: i32, %arg2: i32) -> (i32, i32) {
    %c0_i32 = arith.constant 0 : i32
    return %arg0, %arg1 : i32, i32
  }
}

module attributes {stable_mosaic.version = 11 : i64} {
  func.func @_layernorm_kernel(%arg0: i32, %arg1: memref<16x32xf32, #tpu.memory_space<vmem>>, %arg2: memref<1x32xf32, #tpu.memory_space<vmem>>, %arg3: memref<1x32xf32, #tpu.memory_space<vmem>>, %arg4: memref<16x32xbf16, #tpu.memory_space<vmem>>) attributes {dimension_semantics = [#tpu.dimension_semantics<parallel>], iteration_bounds = array<i64: 1>, scalar_prefetch = 0 : i64, scratch_operands = 0 : i64, tpu.core_type = #tpu.core_type<tc>, window_params = [{transform_indices = @transform_0, window_bounds = array<i64: 16, 32>}, {pipeline_mode = #tpu.pipeline_mode<synchronous>, transform_indices = @transform_1, window_bounds = array<i64: 1, 32>}, {pipeline_mode = #tpu.pipeline_mode<synchronous>, transform_indices = @transform_2, window_bounds = array<i64: 1, 32>}, {transform_indices = @transform_3, window_bounds = array<i64: 16, 32>}]} {
    %c0 = arith.constant 0 : index
    %c0_0 = arith.constant 0 : index
    %0 = vector.load %arg1[%c0, %c0_0] : memref<16x32xf32, #tpu.memory_space<vmem>>, vector<16x32xf32>
    %c0_1 = arith.constant 0 : index
    %c0_2 = arith.constant 0 : index
    %1 = vector.load %arg2[%c0_1, %c0_2] : memref<1x32xf32, #tpu.memory_space<vmem>>, vector<1x32xf32>
    %c0_3 = arith.constant 0 : index
    %c0_4 = arith.constant 0 : index
    %2 = vector.load %arg3[%c0_3, %c0_4] : memref<1x32xf32, #tpu.memory_space<vmem>>, vector<1x32xf32>
    %cst = arith.constant dense<0.000000e+00> : vector<16xf32>
    %3 = vector.multi_reduction <add>, %0, %cst [1] : vector<16x32xf32> to vector<16xf32>
    %4 = vector.shape_cast %3 : vector<16xf32> to vector<16x1xf32>
    %cst_5 = arith.constant 3.200000e+01 : f32
    %5 = vector.broadcast %cst_5 : f32 to vector<16x1xf32>
    %6 = arith.divf %4, %5 : vector<16x1xf32>
    %7 = vector.broadcast %6 : vector<16x1xf32> to vector<16x32xf32>
    %8 = arith.subf %0, %7 : vector<16x32xf32>
    %9 = arith.mulf %8, %8 : vector<16x32xf32>
    %cst_6 = arith.constant dense<0.000000e+00> : vector<16xf32>
    %10 = vector.multi_reduction <add>, %9, %cst_6 [1] : vector<16x32xf32> to vector<16xf32>
    %11 = vector.shape_cast %10 : vector<16xf32> to vector<16x1xf32>
    %cst_7 = arith.constant 3.200000e+01 : f32
    %12 = vector.broadcast %cst_7 : f32 to vector<16x1xf32>
    %13 = arith.divf %11, %12 : vector<16x1xf32>
    %cst_8 = arith.constant 9.99999974E-6 : f32
    %14 = vector.broadcast %cst_8 : f32 to vector<16x1xf32>
    %15 = arith.addf %13, %14 : vector<16x1xf32>
    %16 = math.rsqrt %15 : vector<16x1xf32>
    %17 = vector.broadcast %16 : vector<16x1xf32> to vector<16x32xf32>
    %18 = arith.mulf %8, %17 : vector<16x32xf32>
    %19 = vector.broadcast %1 : vector<1x32xf32> to vector<16x32xf32>
    %20 = arith.mulf %18, %19 : vector<16x32xf32>
    %21 = vector.broadcast %2 : vector<1x32xf32> to vector<16x32xf32>
    %22 = arith.addf %20, %21 : vector<16x32xf32>
    %23 = arith.truncf %22 : vector<16x32xf32> to vector<16x32xbf16>
    %c0_9 = arith.constant 0 : index
    %c0_10 = arith.constant 0 : index
    %24 = vector.load %arg4[%c0_9, %c0_10] : memref<16x32xbf16, #tpu.memory_space<vmem>>, vector<16x32xbf16>
    tpu.vector_store %arg4[%c0_9, %c0_10], %23 {strides = array<i32>} : memref<16x32xbf16, #tpu.memory_space<vmem>>, vector<16x32xbf16>,
    return
  }
  func.func @transform_0(%arg0: i32) -> (i32, i32) {
    %c0_i32 = arith.constant 0 : i32
    %c0_i32_0 = arith.constant 0 : i32
    return %arg0, %c0_i32 : i32, i32
  }
  func.func @transform_1(%arg0: i32) -> (i32, i32) {
    %c0_i32 = arith.constant 0 : i32
    %c0_i32_0 = arith.constant 0 : i32
    %c0_i32_1 = arith.constant 0 : i32
    return %c0_i32, %c0_i32_0 : i32, i32
  }
  func.func @transform_2(%arg0: i32) -> (i32, i32) {
    %c0_i32 = arith.constant 0 : i32
    %c0_i32_0 = arith.constant 0 : i32
    %c0_i32_1 = arith.constant 0 : i32
    return %c0_i32, %c0_i32_0 : i32, i32
  }
  func.func @transform_3(%arg0: i32) -> (i32, i32) {
    %c0_i32 = arith.constant 0 : i32
    %c0_i32_0 = arith.constant 0 : i32
    return %arg0, %c0_i32 : i32, i32
  }
}

module attributes {stable_mosaic.version = 11 : i64} {
  func.func @_linear_add_ln_kernel(%arg0: i32, %arg1: i32, %arg2: memref<16x32xbf16, #tpu.memory_space<vmem>>, %arg3: memref<32x32xbf16, #tpu.memory_space<vmem>>, %arg4: memref<1x32xf32, #tpu.memory_space<vmem>>, %arg5: memref<16x32xbf16, #tpu.memory_space<vmem>>, %arg6: memref<1x32xf32, #tpu.memory_space<vmem>>, %arg7: memref<1x32xf32, #tpu.memory_space<vmem>>, %arg8: memref<16x32xbf16, #tpu.memory_space<vmem>>) attributes {dimension_semantics = [#tpu.dimension_semantics<parallel>, #tpu.dimension_semantics<arbitrary>], iteration_bounds = array<i64: 1, 1>, scalar_prefetch = 0 : i64, scratch_operands = 0 : i64, tpu.core_type = #tpu.core_type<tc>, window_params = [{transform_indices = @transform_0, window_bounds = array<i64: 16, 32>}, {transform_indices = @transform_1, window_bounds = array<i64: 32, 32>}, {pipeline_mode = #tpu.pipeline_mode<synchronous>, transform_indices = @transform_2, window_bounds = array<i64: 1, 32>}, {transform_indices = @transform_3, window_bounds = array<i64: 16, 32>}, {pipeline_mode = #tpu.pipeline_mode<synchronous>, transform_indices = @transform_4, window_bounds = array<i64: 1, 32>}, {pipeline_mode = #tpu.pipeline_mode<synchronous>, transform_indices = @transform_5, window_bounds = array<i64: 1, 32>}, {transform_indices = @transform_6, window_bounds = array<i64: 16, 32>}]} {
    %c0 = arith.constant 0 : index
    %c0_0 = arith.constant 0 : index
    %0 = vector.load %arg2[%c0, %c0_0] : memref<16x32xbf16, #tpu.memory_space<vmem>>, vector<16x32xbf16>
    %c0_1 = arith.constant 0 : index
    %c0_2 = arith.constant 0 : index
    %1 = vector.load %arg3[%c0_1, %c0_2] : memref<32x32xbf16, #tpu.memory_space<vmem>>, vector<32x32xbf16>
    %cst = arith.constant dense<0.000000e+00> : vector<16x32xf32>
    %2 = tpu.matmul %0, %1, %cst {dimension_numbers = #tpu.dot_dimension_numbers<[1], [0], [0], [1], [0, 0, 1, 1], [], []>} : vector<16x32xbf16>, vector<32x32xbf16>, vector<16x32xf32> -> vector<16x32xf32>
    %c0_3 = arith.constant 0 : index
    %c0_4 = arith.constant 0 : index
    %3 = vector.load %arg4[%c0_3, %c0_4] : memref<1x32xf32, #tpu.memory_space<vmem>>, vector<1x32xf32>
    %4 = vector.broadcast %3 : vector<1x32xf32> to vector<16x32xf32>
    %5 = arith.addf %2, %4 : vector<16x32xf32>
    %c0_5 = arith.constant 0 : index
    %c0_6 = arith.constant 0 : index
    %6 = vector.load %arg5[%c0_5, %c0_6] : memref<16x32xbf16, #tpu.memory_space<vmem>>, vector<16x32xbf16>
    %7 = arith.extf %6 : vector<16x32xbf16> to vector<16x32xf32>
    %8 = arith.addf %5, %7 : vector<16x32xf32>
    %c0_7 = arith.constant 0 : index
    %c0_8 = arith.constant 0 : index
    %9 = vector.load %arg6[%c0_7, %c0_8] : memref<1x32xf32, #tpu.memory_space<vmem>>, vector<1x32xf32>
    %c0_9 = arith.constant 0 : index
    %c0_10 = arith.constant 0 : index
    %10 = vector.load %arg7[%c0_9, %c0_10] : memref<1x32xf32, #tpu.memory_space<vmem>>, vector<1x32xf32>
    %cst_11 = arith.constant dense<0.000000e+00> : vector<16xf32>
    %11 = vector.multi_reduction <add>, %8, %cst_11 [1] : vector<16x32xf32> to vector<16xf32>
    %12 = vector.shape_cast %11 : vector<16xf32> to vector<16x1xf32>
    %cst_12 = arith.constant 3.200000e+01 : f32
    %13 = vector.broadcast %cst_12 : f32 to vector<16x1xf32>
    %14 = arith.divf %12, %13 : vector<16x1xf32>
    %15 = vector.broadcast %14 : vector<16x1xf32> to vector<16x32xf32>
    %16 = arith.subf %8, %15 : vector<16x32xf32>
    %17 = arith.mulf %16, %16 : vector<16x32xf32>
    %cst_13 = arith.constant dense<0.000000e+00> : vector<16xf32>
    %18 = vector.multi_reduction <add>, %17, %cst_13 [1] : vector<16x32xf32> to vector<16xf32>
    %19 = vector.shape_cast %18 : vector<16xf32> to vector<16x1xf32>
    %cst_14 = arith.constant 3.200000e+01 : f32
    %20 = vector.broadcast %cst_14 : f32 to vector<16x1xf32>
    %21 = arith.divf %19, %20 : vector<16x1xf32>
    %cst_15 = arith.constant 9.99999974E-6 : f32
    %22 = vector.broadcast %cst_15 : f32 to vector<16x1xf32>
    %23 = arith.addf %21, %22 : vector<16x1xf32>
    %24 = math.rsqrt %23 : vector<16x1xf32>
    %25 = vector.broadcast %24 : vector<16x1xf32> to vector<16x32xf32>
    %26 = arith.mulf %16, %25 : vector<16x32xf32>
    %27 = vector.broadcast %9 : vector<1x32xf32> to vector<16x32xf32>
    %28 = arith.mulf %26, %27 : vector<16x32xf32>
    %29 = vector.broadcast %10 : vector<1x32xf32> to vector<16x32xf32>
    %30 = arith.addf %28, %29 : vector<16x32xf32>
    %31 = arith.truncf %30 : vector<16x32xf32> to vector<16x32xbf16>
    %c0_16 = arith.constant 0 : index
    %c0_17 = arith.constant 0 : index
    %32 = vector.load %arg8[%c0_16, %c0_17] : memref<16x32xbf16, #tpu.memory_space<vmem>>, vector<16x32xbf16>
    tpu.vector_store %arg8[%c0_16, %c0_17], %31 {strides = array<i32>} : memref<16x32xbf16, #tpu.memory_space<vmem>>, vector<16x32xbf16>,
    return
  }
  func.func @transform_0(%arg0: i32, %arg1: i32) -> (i32, i32) {
    %c0_i32 = arith.constant 0 : i32
    return %arg0, %arg1 : i32, i32
  }
  func.func @transform_1(%arg0: i32, %arg1: i32) -> (i32, i32) {
    %c0_i32 = arith.constant 0 : i32
    %c0_i32_0 = arith.constant 0 : i32
    return %arg1, %c0_i32 : i32, i32
  }
  func.func @transform_2(%arg0: i32, %arg1: i32) -> (i32, i32) {
    %c0_i32 = arith.constant 0 : i32
    %c0_i32_0 = arith.constant 0 : i32
    %c0_i32_1 = arith.constant 0 : i32
    return %c0_i32, %c0_i32_0 : i32, i32
  }
  func.func @transform_3(%arg0: i32, %arg1: i32) -> (i32, i32) {
    %c0_i32 = arith.constant 0 : i32
    %c0_i32_0 = arith.constant 0 : i32
    return %arg0, %c0_i32 : i32, i32
  }
  func.func @transform_4(%arg0: i32, %arg1: i32) -> (i32, i32) {
    %c0_i32 = arith.constant 0 : i32
    %c0_i32_0 = arith.constant 0 : i32
    %c0_i32_1 = arith.constant 0 : i32
    return %c0_i32, %c0_i32_0 : i32, i32
  }
  func.func @transform_5(%arg0: i32, %arg1: i32) -> (i32, i32) {
    %c0_i32 = arith.constant 0 : i32
    %c0_i32_0 = arith.constant 0 : i32
    %c0_i32_1 = arith.constant 0 : i32
    return %c0_i32, %c0_i32_0 : i32, i32
  }
  func.func @transform_6(%arg0: i32, %arg1: i32) -> (i32, i32) {
    %c0_i32 = arith.constant 0 : i32
    %c0_i32_0 = arith.constant 0 : i32
    return %arg0, %c0_i32 : i32, i32
  }
}

module attributes {stable_mosaic.version = 11 : i64} {
  func.func @_mha_kernel(%arg0: i32, %arg1: memref<1x8x96xbf16, #tpu.memory_space<vmem>>, %arg2: memref<1x8x32xbf16, #tpu.memory_space<vmem>>) attributes {dimension_semantics = [#tpu.dimension_semantics<parallel>], iteration_bounds = array<i64: 2>, scalar_prefetch = 0 : i64, scratch_operands = 0 : i64, tpu.core_type = #tpu.core_type<tc>, window_params = [{transform_indices = @transform_0, window_bounds = array<i64: 1, 8, 96>}, {transform_indices = @transform_1, window_bounds = array<i64: 1, 8, 32>}]} {
    %c0 = arith.constant 0 : index
    %c0_0 = arith.constant 0 : index
    %c0_1 = arith.constant 0 : index
    %0 = vector.load %arg1[%c0, %c0_0, %c0_1] : memref<1x8x96xbf16, #tpu.memory_space<vmem>>, vector<1x8x8xbf16>
    %1 = vector.shape_cast %0 : vector<1x8x8xbf16> to vector<8x8xbf16>
    %2 = arith.extf %1 : vector<8x8xbf16> to vector<8x8xf32>
    %cst = arith.constant 0.353553385 : f32
    %3 = vector.broadcast %cst : f32 to vector<8x8xf32>
    %4 = arith.mulf %2, %3 : vector<8x8xf32>
    %5 = arith.truncf %4 : vector<8x8xf32> to vector<8x8xbf16>
    %c0_2 = arith.constant 0 : index
    %c0_3 = arith.constant 0 : index
    %c32 = arith.constant 32 : index
    %6 = vector.load %arg1[%c0_2, %c0_3, %c32] : memref<1x8x96xbf16, #tpu.memory_space<vmem>>, vector<1x8x8xbf16>
    %7 = vector.shape_cast %6 : vector<1x8x8xbf16> to vector<8x8xbf16>
    %c0_4 = arith.constant 0 : index
    %c0_5 = arith.constant 0 : index
    %c64 = arith.constant 64 : index
    %8 = vector.load %arg1[%c0_4, %c0_5, %c64] : memref<1x8x96xbf16, #tpu.memory_space<vmem>>, vector<1x8x8xbf16>
    %9 = vector.shape_cast %8 : vector<1x8x8xbf16> to vector<8x8xbf16>
    %cst_6 = arith.constant dense<0.000000e+00> : vector<8x8xf32>
    %10 = tpu.matmul %5, %7, %cst_6 {dimension_numbers = #tpu.dot_dimension_numbers<[1], [1], [0], [0], [0, 0, 1, 0], [], []>} : vector<8x8xbf16>, vector<8x8xbf16>, vector<8x8xf32> -> vector<8x8xf32>
    %cst_7 = arith.constant dense<0xFF800000> : vector<8xf32>
    %11 = vector.multi_reduction <maximumf>, %10, %cst_7 [1] : vector<8x8xf32> to vector<8xf32>
    %12 = vector.shape_cast %11 : vector<8xf32> to vector<8x1xf32>
    %13 = vector.broadcast %12 : vector<8x1xf32> to vector<8x8xf32>
    %14 = arith.subf %10, %13 : vector<8x8xf32>
    %15 = math.exp %14 : vector<8x8xf32>
    %cst_8 = arith.constant dense<0.000000e+00> : vector<8xf32>
    %16 = vector.multi_reduction <add>, %15, %cst_8 [1] : vector<8x8xf32> to vector<8xf32>
    %17 = vector.shape_cast %16 : vector<8xf32> to vector<8x1xf32>
    %18 = tpu.reciprocal %17 {approx = true} : vector<8x1xf32> -> vector<8x1xf32>
    %19 = vector.broadcast %18 : vector<8x1xf32> to vector<8x8xf32>
    %20 = arith.mulf %15, %19 : vector<8x8xf32>
    %21 = arith.truncf %20 : vector<8x8xf32> to vector<8x8xbf16>
    %cst_9 = arith.constant dense<0.000000e+00> : vector<8x8xf32>
    %22 = tpu.matmul %21, %9, %cst_9 {dimension_numbers = #tpu.dot_dimension_numbers<[1], [0], [0], [1], [0, 0, 1, 1], [], []>} : vector<8x8xbf16>, vector<8x8xbf16>, vector<8x8xf32> -> vector<8x8xf32>
    %c0_10 = arith.constant 0 : index
    %c0_11 = arith.constant 0 : index
    %c8 = arith.constant 8 : index
    %23 = vector.load %arg1[%c0_10, %c0_11, %c8] : memref<1x8x96xbf16, #tpu.memory_space<vmem>>, vector<1x8x8xbf16>
    %24 = vector.shape_cast %23 : vector<1x8x8xbf16> to vector<8x8xbf16>
    %25 = arith.extf %24 : vector<8x8xbf16> to vector<8x8xf32>
    %cst_12 = arith.constant 0.353553385 : f32
    %26 = vector.broadcast %cst_12 : f32 to vector<8x8xf32>
    %27 = arith.mulf %25, %26 : vector<8x8xf32>
    %28 = arith.truncf %27 : vector<8x8xf32> to vector<8x8xbf16>
    %c0_13 = arith.constant 0 : index
    %c0_14 = arith.constant 0 : index
    %c40 = arith.constant 40 : index
    %29 = vector.load %arg1[%c0_13, %c0_14, %c40] : memref<1x8x96xbf16, #tpu.memory_space<vmem>>, vector<1x8x8xbf16>
    %30 = vector.shape_cast %29 : vector<1x8x8xbf16> to vector<8x8xbf16>
    %c0_15 = arith.constant 0 : index
    %c0_16 = arith.constant 0 : index
    %c72 = arith.constant 72 : index
    %31 = vector.load %arg1[%c0_15, %c0_16, %c72] : memref<1x8x96xbf16, #tpu.memory_space<vmem>>, vector<1x8x8xbf16>
    %32 = vector.shape_cast %31 : vector<1x8x8xbf16> to vector<8x8xbf16>
    %cst_17 = arith.constant dense<0.000000e+00> : vector<8x8xf32>
    %33 = tpu.matmul %28, %30, %cst_17 {dimension_numbers = #tpu.dot_dimension_numbers<[1], [1], [0], [0], [0, 0, 1, 0], [], []>} : vector<8x8xbf16>, vector<8x8xbf16>, vector<8x8xf32> -> vector<8x8xf32>
    %cst_18 = arith.constant dense<0xFF800000> : vector<8xf32>
    %34 = vector.multi_reduction <maximumf>, %33, %cst_18 [1] : vector<8x8xf32> to vector<8xf32>
    %35 = vector.shape_cast %34 : vector<8xf32> to vector<8x1xf32>
    %36 = vector.broadcast %35 : vector<8x1xf32> to vector<8x8xf32>
    %37 = arith.subf %33, %36 : vector<8x8xf32>
    %38 = math.exp %37 : vector<8x8xf32>
    %cst_19 = arith.constant dense<0.000000e+00> : vector<8xf32>
    %39 = vector.multi_reduction <add>, %38, %cst_19 [1] : vector<8x8xf32> to vector<8xf32>
    %40 = vector.shape_cast %39 : vector<8xf32> to vector<8x1xf32>
    %41 = tpu.reciprocal %40 {approx = true} : vector<8x1xf32> -> vector<8x1xf32>
    %42 = vector.broadcast %41 : vector<8x1xf32> to vector<8x8xf32>
    %43 = arith.mulf %38, %42 : vector<8x8xf32>
    %44 = arith.truncf %43 : vector<8x8xf32> to vector<8x8xbf16>
    %cst_20 = arith.constant dense<0.000000e+00> : vector<8x8xf32>
    %45 = tpu.matmul %44, %32, %cst_20 {dimension_numbers = #tpu.dot_dimension_numbers<[1], [0], [0], [1], [0, 0, 1, 1], [], []>} : vector<8x8xbf16>, vector<8x8xbf16>, vector<8x8xf32> -> vector<8x8xf32>
    %c0_21 = arith.constant 0 : index
    %c0_22 = arith.constant 0 : index
    %c16 = arith.constant 16 : index
    %46 = vector.load %arg1[%c0_21, %c0_22, %c16] : memref<1x8x96xbf16, #tpu.memory_space<vmem>>, vector<1x8x8xbf16>
    %47 = vector.shape_cast %46 : vector<1x8x8xbf16> to vector<8x8xbf16>
    %48 = arith.extf %47 : vector<8x8xbf16> to vector<8x8xf32>
    %cst_23 = arith.constant 0.353553385 : f32
    %49 = vector.broadcast %cst_23 : f32 to vector<8x8xf32>
    %50 = arith.mulf %48, %49 : vector<8x8xf32>
    %51 = arith.truncf %50 : vector<8x8xf32> to vector<8x8xbf16>
    %c0_24 = arith.constant 0 : index
    %c0_25 = arith.constant 0 : index
    %c48 = arith.constant 48 : index
    %52 = vector.load %arg1[%c0_24, %c0_25, %c48] : memref<1x8x96xbf16, #tpu.memory_space<vmem>>, vector<1x8x8xbf16>
    %53 = vector.shape_cast %52 : vector<1x8x8xbf16> to vector<8x8xbf16>
    %c0_26 = arith.constant 0 : index
    %c0_27 = arith.constant 0 : index
    %c80 = arith.constant 80 : index
    %54 = vector.load %arg1[%c0_26, %c0_27, %c80] : memref<1x8x96xbf16, #tpu.memory_space<vmem>>, vector<1x8x8xbf16>
    %55 = vector.shape_cast %54 : vector<1x8x8xbf16> to vector<8x8xbf16>
    %cst_28 = arith.constant dense<0.000000e+00> : vector<8x8xf32>
    %56 = tpu.matmul %51, %53, %cst_28 {dimension_numbers = #tpu.dot_dimension_numbers<[1], [1], [0], [0], [0, 0, 1, 0], [], []>} : vector<8x8xbf16>, vector<8x8xbf16>, vector<8x8xf32> -> vector<8x8xf32>
    %cst_29 = arith.constant dense<0xFF800000> : vector<8xf32>
    %57 = vector.multi_reduction <maximumf>, %56, %cst_29 [1] : vector<8x8xf32> to vector<8xf32>
    %58 = vector.shape_cast %57 : vector<8xf32> to vector<8x1xf32>
    %59 = vector.broadcast %58 : vector<8x1xf32> to vector<8x8xf32>
    %60 = arith.subf %56, %59 : vector<8x8xf32>
    %61 = math.exp %60 : vector<8x8xf32>
    %cst_30 = arith.constant dense<0.000000e+00> : vector<8xf32>
    %62 = vector.multi_reduction <add>, %61, %cst_30 [1] : vector<8x8xf32> to vector<8xf32>
    %63 = vector.shape_cast %62 : vector<8xf32> to vector<8x1xf32>
    %64 = tpu.reciprocal %63 {approx = true} : vector<8x1xf32> -> vector<8x1xf32>
    %65 = vector.broadcast %64 : vector<8x1xf32> to vector<8x8xf32>
    %66 = arith.mulf %61, %65 : vector<8x8xf32>
    %67 = arith.truncf %66 : vector<8x8xf32> to vector<8x8xbf16>
    %cst_31 = arith.constant dense<0.000000e+00> : vector<8x8xf32>
    %68 = tpu.matmul %67, %55, %cst_31 {dimension_numbers = #tpu.dot_dimension_numbers<[1], [0], [0], [1], [0, 0, 1, 1], [], []>} : vector<8x8xbf16>, vector<8x8xbf16>, vector<8x8xf32> -> vector<8x8xf32>
    %c0_32 = arith.constant 0 : index
    %c0_33 = arith.constant 0 : index
    %c24 = arith.constant 24 : index
    %69 = vector.load %arg1[%c0_32, %c0_33, %c24] : memref<1x8x96xbf16, #tpu.memory_space<vmem>>, vector<1x8x8xbf16>
    %70 = vector.shape_cast %69 : vector<1x8x8xbf16> to vector<8x8xbf16>
    %71 = arith.extf %70 : vector<8x8xbf16> to vector<8x8xf32>
    %cst_34 = arith.constant 0.353553385 : f32
    %72 = vector.broadcast %cst_34 : f32 to vector<8x8xf32>
    %73 = arith.mulf %71, %72 : vector<8x8xf32>
    %74 = arith.truncf %73 : vector<8x8xf32> to vector<8x8xbf16>
    %c0_35 = arith.constant 0 : index
    %c0_36 = arith.constant 0 : index
    %c56 = arith.constant 56 : index
    %75 = vector.load %arg1[%c0_35, %c0_36, %c56] : memref<1x8x96xbf16, #tpu.memory_space<vmem>>, vector<1x8x8xbf16>
    %76 = vector.shape_cast %75 : vector<1x8x8xbf16> to vector<8x8xbf16>
    %c0_37 = arith.constant 0 : index
    %c0_38 = arith.constant 0 : index
    %c88 = arith.constant 88 : index
    %77 = vector.load %arg1[%c0_37, %c0_38, %c88] : memref<1x8x96xbf16, #tpu.memory_space<vmem>>, vector<1x8x8xbf16>
    %78 = vector.shape_cast %77 : vector<1x8x8xbf16> to vector<8x8xbf16>
    %cst_39 = arith.constant dense<0.000000e+00> : vector<8x8xf32>
    %79 = tpu.matmul %74, %76, %cst_39 {dimension_numbers = #tpu.dot_dimension_numbers<[1], [1], [0], [0], [0, 0, 1, 0], [], []>} : vector<8x8xbf16>, vector<8x8xbf16>, vector<8x8xf32> -> vector<8x8xf32>
    %cst_40 = arith.constant dense<0xFF800000> : vector<8xf32>
    %80 = vector.multi_reduction <maximumf>, %79, %cst_40 [1] : vector<8x8xf32> to vector<8xf32>
    %81 = vector.shape_cast %80 : vector<8xf32> to vector<8x1xf32>
    %82 = vector.broadcast %81 : vector<8x1xf32> to vector<8x8xf32>
    %83 = arith.subf %79, %82 : vector<8x8xf32>
    %84 = math.exp %83 : vector<8x8xf32>
    %cst_41 = arith.constant dense<0.000000e+00> : vector<8xf32>
    %85 = vector.multi_reduction <add>, %84, %cst_41 [1] : vector<8x8xf32> to vector<8xf32>
    %86 = vector.shape_cast %85 : vector<8xf32> to vector<8x1xf32>
    %87 = tpu.reciprocal %86 {approx = true} : vector<8x1xf32> -> vector<8x1xf32>
    %88 = vector.broadcast %87 : vector<8x1xf32> to vector<8x8xf32>
    %89 = arith.mulf %84, %88 : vector<8x8xf32>
    %90 = arith.truncf %89 : vector<8x8xf32> to vector<8x8xbf16>
    %cst_42 = arith.constant dense<0.000000e+00> : vector<8x8xf32>
    %91 = tpu.matmul %90, %78, %cst_42 {dimension_numbers = #tpu.dot_dimension_numbers<[1], [0], [0], [1], [0, 0, 1, 1], [], []>} : vector<8x8xbf16>, vector<8x8xbf16>, vector<8x8xf32> -> vector<8x8xf32>
    %92 = tpu.concatenate %22, %45, %68, %91 in 1 : vector<8x8xf32>, vector<8x8xf32>, vector<8x8xf32>, vector<8x8xf32> -> vector<8x32xf32>
    %93 = arith.truncf %92 : vector<8x32xf32> to vector<8x32xbf16>
    %c0_43 = arith.constant 0 : index
    %c0_44 = arith.constant 0 : index
    %c0_45 = arith.constant 0 : index
    %94 = vector.load %arg2[%c0_43, %c0_44, %c0_45] : memref<1x8x32xbf16, #tpu.memory_space<vmem>>, vector<1x8x32xbf16>
    %95 = vector.shape_cast %94 : vector<1x8x32xbf16> to vector<8x32xbf16>
    %96 = vector.shape_cast %93 : vector<8x32xbf16> to vector<1x8x32xbf16>
    tpu.vector_store %arg2[%c0_43, %c0_44, %c0_45], %96 {strides = array<i32>} : memref<1x8x32xbf16, #tpu.memory_space<vmem>>, vector<1x8x32xbf16>,
    return
  }
  func.func @transform_0(%arg0: i32) -> (i32, i32, i32) {
    %c0_i32 = arith.constant 0 : i32
    %c0_i32_0 = arith.constant 0 : i32
    %c0_i32_1 = arith.constant 0 : i32
    return %arg0, %c0_i32, %c0_i32_0 : i32, i32, i32
  }
  func.func @transform_1(%arg0: i32) -> (i32, i32, i32) {
    %c0_i32 = arith.constant 0 : i32
    %c0_i32_0 = arith.constant 0 : i32
    %c0_i32_1 = arith.constant 0 : i32
    return %arg0, %c0_i32, %c0_i32_0 : i32, i32, i32
  }
}

module attributes {stable_mosaic.version = 11 : i64} {
  func.func @_linear_kernel(%arg0: i32, %arg1: i32, %arg2: i32, %arg3: memref<16x32xbf16, #tpu.memory_space<vmem>>, %arg4: memref<32x64xbf16, #tpu.memory_space<vmem>>, %arg5: memref<1x64xf32, #tpu.memory_space<vmem>>, %arg6: memref<16x64xbf16, #tpu.memory_space<vmem>>) attributes {dimension_semantics = [#tpu.dimension_semantics<parallel>, #tpu.dimension_semantics<parallel>, #tpu.dimension_semantics<arbitrary>], iteration_bounds = array<i64: 1, 1, 1>, scalar_prefetch = 0 : i64, scratch_operands = 0 : i64, tpu.core_type = #tpu.core_type<tc>, window_params = [{transform_indices = @transform_0, window_bounds = array<i64: 16, 32>}, {transform_indices = @transform_1, window_bounds = array<i64: 32, 64>}, {transform_indices = @transform_2, window_bounds = array<i64: 1, 64>}, {transform_indices = @transform_3, window_bounds = array<i64: 16, 64>}]} {
    %c0 = arith.constant 0 : index
    %c0_0 = arith.constant 0 : index
    %0 = vector.load %arg3[%c0, %c0_0] : memref<16x32xbf16, #tpu.memory_space<vmem>>, vector<16x32xbf16>
    %c0_1 = arith.constant 0 : index
    %c0_2 = arith.constant 0 : index
    %1 = vector.load %arg4[%c0_1, %c0_2] : memref<32x64xbf16, #tpu.memory_space<vmem>>, vector<32x64xbf16>
    %cst = arith.constant dense<0.000000e+00> : vector<16x64xf32>
    %2 = tpu.matmul %0, %1, %cst {dimension_numbers = #tpu.dot_dimension_numbers<[1], [0], [0], [1], [0, 0, 1, 1], [], []>} : vector<16x32xbf16>, vector<32x64xbf16>, vector<16x64xf32> -> vector<16x64xf32>
    %c0_3 = arith.constant 0 : index
    %c0_4 = arith.constant 0 : index
    %3 = vector.load %arg5[%c0_3, %c0_4] : memref<1x64xf32, #tpu.memory_space<vmem>>, vector<1x64xf32>
    %4 = vector.broadcast %3 : vector<1x64xf32> to vector<16x64xf32>
    %5 = arith.addf %2, %4 : vector<16x64xf32>
    %6 = arith.mulf %5, %5 : vector<16x64xf32>
    %7 = arith.mulf %5, %6 : vector<16x64xf32>
    %cst_5 = arith.constant 4.471500e-02 : f32
    %8 = vector.broadcast %cst_5 : f32 to vector<16x64xf32>
    %9 = arith.mulf %8, %7 : vector<16x64xf32>
    %10 = arith.addf %5, %9 : vector<16x64xf32>
    %cst_6 = arith.constant 0.797884583 : f32
    %11 = vector.broadcast %cst_6 : f32 to vector<16x64xf32>
    %12 = arith.mulf %11, %10 : vector<16x64xf32>
    %13 = math.tanh %12 : vector<16x64xf32>
    %cst_7 = arith.constant 1.000000e+00 : f32
    %14 = vector.broadcast %cst_7 : f32 to vector<16x64xf32>
    %15 = arith.addf %14, %13 : vector<16x64xf32>
    %cst_8 = arith.constant 5.000000e-01 : f32
    %16 = vector.broadcast %cst_8 : f32 to vector<16x64xf32>
    %17 = arith.mulf %16, %15 : vector<16x64xf32>
    %18 = arith.mulf %5, %17 : vector<16x64xf32>
    %19 = arith.truncf %18 : vector<16x64xf32> to vector<16x64xbf16>
    %c0_9 = arith.constant 0 : index
    %c0_10 = arith.constant 0 : index
    %20 = vector.load %arg6[%c0_9, %c0_10] : memref<16x64xbf16, #tpu.memory_space<vmem>>, vector<16x64xbf16>
    tpu.vector_store %arg6[%c0_9, %c0_10], %19 {strides = array<i32>} : memref<16x64xbf16, #tpu.memory_space<vmem>>, vector<16x64xbf16>,
    return
  }
  func.func @transform_0(%arg0: i32, %arg1: i32, %arg2: i32) -> (i32, i32) {
    %c0_i32 = arith.constant 0 : i32
    return %arg0, %arg2 : i32, i32
  }
  func.func @transform_1(%arg0: i32, %arg1: i32, %arg2: i32) -> (i32, i32) {
    %c0_i32 = arith.constant 0 : i32
    return %arg2, %arg1 : i32, i32
  }
  func.func @transform_2(%arg0: i32, %arg1: i32, %arg2: i32) -> (i32, i32) {
    %c0_i32 = arith.constant 0 : i32
    %c0_i32_0 = arith.constant 0 : i32
    return %c0_i32, %arg1 : i32, i32
  }
  func.func @transform_3(%arg0: i32, %arg1: i32, %arg2: i32) -> (i32, i32) {
    %c0_i32 = arith.constant 0 : i32
    return %arg0, %arg1 : i32, i32
  }
}

module attributes {stable_mosaic.version = 11 : i64} {
  func.func @_linear_add_ln_kernel(%arg0: i32, %arg1: i32, %arg2: memref<16x64xbf16, #tpu.memory_space<vmem>>, %arg3: memref<64x32xbf16, #tpu.memory_space<vmem>>, %arg4: memref<1x32xf32, #tpu.memory_space<vmem>>, %arg5: memref<16x32xbf16, #tpu.memory_space<vmem>>, %arg6: memref<1x32xf32, #tpu.memory_space<vmem>>, %arg7: memref<1x32xf32, #tpu.memory_space<vmem>>, %arg8: memref<16x32xbf16, #tpu.memory_space<vmem>>) attributes {dimension_semantics = [#tpu.dimension_semantics<parallel>, #tpu.dimension_semantics<arbitrary>], iteration_bounds = array<i64: 1, 1>, scalar_prefetch = 0 : i64, scratch_operands = 0 : i64, tpu.core_type = #tpu.core_type<tc>, window_params = [{transform_indices = @transform_0, window_bounds = array<i64: 16, 64>}, {transform_indices = @transform_1, window_bounds = array<i64: 64, 32>}, {pipeline_mode = #tpu.pipeline_mode<synchronous>, transform_indices = @transform_2, window_bounds = array<i64: 1, 32>}, {transform_indices = @transform_3, window_bounds = array<i64: 16, 32>}, {pipeline_mode = #tpu.pipeline_mode<synchronous>, transform_indices = @transform_4, window_bounds = array<i64: 1, 32>}, {pipeline_mode = #tpu.pipeline_mode<synchronous>, transform_indices = @transform_5, window_bounds = array<i64: 1, 32>}, {transform_indices = @transform_6, window_bounds = array<i64: 16, 32>}]} {
    %c0 = arith.constant 0 : index
    %c0_0 = arith.constant 0 : index
    %0 = vector.load %arg2[%c0, %c0_0] : memref<16x64xbf16, #tpu.memory_space<vmem>>, vector<16x64xbf16>
    %c0_1 = arith.constant 0 : index
    %c0_2 = arith.constant 0 : index
    %1 = vector.load %arg3[%c0_1, %c0_2] : memref<64x32xbf16, #tpu.memory_space<vmem>>, vector<64x32xbf16>
    %cst = arith.constant dense<0.000000e+00> : vector<16x32xf32>
    %2 = tpu.matmul %0, %1, %cst {dimension_numbers = #tpu.dot_dimension_numbers<[1], [0], [0], [1], [0, 0, 1, 1], [], []>} : vector<16x64xbf16>, vector<64x32xbf16>, vector<16x32xf32> -> vector<16x32xf32>
    %c0_3 = arith.constant 0 : index
    %c0_4 = arith.constant 0 : index
    %3 = vector.load %arg4[%c0_3, %c0_4] : memref<1x32xf32, #tpu.memory_space<vmem>>, vector<1x32xf32>
    %4 = vector.broadcast %3 : vector<1x32xf32> to vector<16x32xf32>
    %5 = arith.addf %2, %4 : vector<16x32xf32>
    %c0_5 = arith.constant 0 : index
    %c0_6 = arith.constant 0 : index
    %6 = vector.load %arg5[%c0_5, %c0_6] : memref<16x32xbf16, #tpu.memory_space<vmem>>, vector<16x32xbf16>
    %7 = arith.extf %6 : vector<16x32xbf16> to vector<16x32xf32>
    %8 = arith.addf %5, %7 : vector<16x32xf32>
    %c0_7 = arith.constant 0 : index
    %c0_8 = arith.constant 0 : index
    %9 = vector.load %arg6[%c0_7, %c0_8] : memref<1x32xf32, #tpu.memory_space<vmem>>, vector<1x32xf32>
    %c0_9 = arith.constant 0 : index
    %c0_10 = arith.constant 0 : index
    %10 = vector.load %arg7[%c0_9, %c0_10] : memref<1x32xf32, #tpu.memory_space<vmem>>, vector<1x32xf32>
    %cst_11 = arith.constant dense<0.000000e+00> : vector<16xf32>
    %11 = vector.multi_reduction <add>, %8, %cst_11 [1] : vector<16x32xf32> to vector<16xf32>
    %12 = vector.shape_cast %11 : vector<16xf32> to vector<16x1xf32>
    %cst_12 = arith.constant 3.200000e+01 : f32
    %13 = vector.broadcast %cst_12 : f32 to vector<16x1xf32>
    %14 = arith.divf %12, %13 : vector<16x1xf32>
    %15 = vector.broadcast %14 : vector<16x1xf32> to vector<16x32xf32>
    %16 = arith.subf %8, %15 : vector<16x32xf32>
    %17 = arith.mulf %16, %16 : vector<16x32xf32>
    %cst_13 = arith.constant dense<0.000000e+00> : vector<16xf32>
    %18 = vector.multi_reduction <add>, %17, %cst_13 [1] : vector<16x32xf32> to vector<16xf32>
    %19 = vector.shape_cast %18 : vector<16xf32> to vector<16x1xf32>
    %cst_14 = arith.constant 3.200000e+01 : f32
    %20 = vector.broadcast %cst_14 : f32 to vector<16x1xf32>
    %21 = arith.divf %19, %20 : vector<16x1xf32>
    %cst_15 = arith.constant 9.99999974E-6 : f32
    %22 = vector.broadcast %cst_15 : f32 to vector<16x1xf32>
    %23 = arith.addf %21, %22 : vector<16x1xf32>
    %24 = math.rsqrt %23 : vector<16x1xf32>
    %25 = vector.broadcast %24 : vector<16x1xf32> to vector<16x32xf32>
    %26 = arith.mulf %16, %25 : vector<16x32xf32>
    %27 = vector.broadcast %9 : vector<1x32xf32> to vector<16x32xf32>
    %28 = arith.mulf %26, %27 : vector<16x32xf32>
    %29 = vector.broadcast %10 : vector<1x32xf32> to vector<16x32xf32>
    %30 = arith.addf %28, %29 : vector<16x32xf32>
    %31 = arith.truncf %30 : vector<16x32xf32> to vector<16x32xbf16>
    %c0_16 = arith.constant 0 : index
    %c0_17 = arith.constant 0 : index
    %32 = vector.load %arg8[%c0_16, %c0_17] : memref<16x32xbf16, #tpu.memory_space<vmem>>, vector<16x32xbf16>
    tpu.vector_store %arg8[%c0_16, %c0_17], %31 {strides = array<i32>} : memref<16x32xbf16, #tpu.memory_space<vmem>>, vector<16x32xbf16>,
    return
  }
  func.func @transform_0(%arg0: i32, %arg1: i32) -> (i32, i32) {
    %c0_i32 = arith.constant 0 : i32
    return %arg0, %arg1 : i32, i32
  }
  func.func @transform_1(%arg0: i32, %arg1: i32) -> (i32, i32) {
    %c0_i32 = arith.constant 0 : i32
    %c0_i32_0 = arith.constant 0 : i32
    return %arg1, %c0_i32 : i32, i32
  }
  func.func @transform_2(%arg0: i32, %arg1: i32) -> (i32, i32) {
    %c0_i32 = arith.constant 0 : i32
    %c0_i32_0 = arith.constant 0 : i32
    %c0_i32_1 = arith.constant 0 : i32
    return %c0_i32, %c0_i32_0 : i32, i32
  }
  func.func @transform_3(%arg0: i32, %arg1: i32) -> (i32, i32) {
    %c0_i32 = arith.constant 0 : i32
    %c0_i32_0 = arith.constant 0 : i32
    return %arg0, %c0_i32 : i32, i32
  }
  func.func @transform_4(%arg0: i32, %arg1: i32) -> (i32, i32) {
    %c0_i32 = arith.constant 0 : i32
    %c0_i32_0 = arith.constant 0 : i32
    %c0_i32_1 = arith.constant 0 : i32
    return %c0_i32, %c0_i32_0 : i32, i32
  }
  func.func @transform_5(%arg0: i32, %arg1: i32) -> (i32, i32) {
    %c0_i32 = arith.constant 0 : i32
    %c0_i32_0 = arith.constant 0 : i32
    %c0_i32_1 = arith.constant 0 : i32
    return %c0_i32, %c0_i32_0 : i32, i32
  }
  func.func @transform_6(%arg0: i32, %arg1: i32) -> (i32, i32) {
    %c0_i32 = arith.constant 0 : i32
    %c0_i32_0 = arith.constant 0 : i32
    return %arg0, %c0_i32 : i32, i32
  }
}

module attributes {stable_mosaic.version = 11 : i64} {
  func.func @_mlp_kernel(%arg0: i32, %arg1: memref<14x32xbf16, #tpu.memory_space<vmem>>, %arg2: memref<32x64xbf16, #tpu.memory_space<vmem>>, %arg3: memref<64x64xbf16, #tpu.memory_space<vmem>>, %arg4: memref<64x64xbf16, #tpu.memory_space<vmem>>, %arg5: memref<64x64xbf16, #tpu.memory_space<vmem>>, %arg6: memref<64x64xbf16, #tpu.memory_space<vmem>>, %arg7: memref<64x5xbf16, #tpu.memory_space<vmem>>, %arg8: memref<1x64xf32, #tpu.memory_space<vmem>>, %arg9: memref<1x64xf32, #tpu.memory_space<vmem>>, %arg10: memref<1x64xf32, #tpu.memory_space<vmem>>, %arg11: memref<1x64xf32, #tpu.memory_space<vmem>>, %arg12: memref<1x64xf32, #tpu.memory_space<vmem>>, %arg13: memref<1x5xf32, #tpu.memory_space<vmem>>, %arg14: memref<14x5xf32, #tpu.memory_space<vmem>>) attributes {dimension_semantics = [#tpu.dimension_semantics<parallel>], iteration_bounds = array<i64: 1>, scalar_prefetch = 0 : i64, scratch_operands = 0 : i64, tpu.core_type = #tpu.core_type<tc>, window_params = [{transform_indices = @transform_0, window_bounds = array<i64: 14, 32>}, {pipeline_mode = #tpu.pipeline_mode<synchronous>, transform_indices = @transform_1, window_bounds = array<i64: 32, 64>}, {pipeline_mode = #tpu.pipeline_mode<synchronous>, transform_indices = @transform_2, window_bounds = array<i64: 64, 64>}, {pipeline_mode = #tpu.pipeline_mode<synchronous>, transform_indices = @transform_3, window_bounds = array<i64: 64, 64>}, {pipeline_mode = #tpu.pipeline_mode<synchronous>, transform_indices = @transform_4, window_bounds = array<i64: 64, 64>}, {pipeline_mode = #tpu.pipeline_mode<synchronous>, transform_indices = @transform_5, window_bounds = array<i64: 64, 64>}, {pipeline_mode = #tpu.pipeline_mode<synchronous>, transform_indices = @transform_6, window_bounds = array<i64: 64, 5>}, {pipeline_mode = #tpu.pipeline_mode<synchronous>, transform_indices = @transform_7, window_bounds = array<i64: 1, 64>}, {pipeline_mode = #tpu.pipeline_mode<synchronous>, transform_indices = @transform_8, window_bounds = array<i64: 1, 64>}, {pipeline_mode = #tpu.pipeline_mode<synchronous>, transform_indices = @transform_9, window_bounds = array<i64: 1, 64>}, {pipeline_mode = #tpu.pipeline_mode<synchronous>, transform_indices = @transform_10, window_bounds = array<i64: 1, 64>}, {pipeline_mode = #tpu.pipeline_mode<synchronous>, transform_indices = @transform_11, window_bounds = array<i64: 1, 64>}, {pipeline_mode = #tpu.pipeline_mode<synchronous>, transform_indices = @transform_12, window_bounds = array<i64: 1, 5>}, {transform_indices = @transform_13, window_bounds = array<i64: 14, 5>}]} {
    %c0 = arith.constant 0 : index
    %c0_0 = arith.constant 0 : index
    %0 = vector.load %arg1[%c0, %c0_0] : memref<14x32xbf16, #tpu.memory_space<vmem>>, vector<14x32xbf16>
    %c0_1 = arith.constant 0 : index
    %c0_2 = arith.constant 0 : index
    %1 = vector.load %arg2[%c0_1, %c0_2] : memref<32x64xbf16, #tpu.memory_space<vmem>>, vector<32x64xbf16>
    %cst = arith.constant dense<0.000000e+00> : vector<14x64xf32>
    %2 = tpu.matmul %0, %1, %cst {dimension_numbers = #tpu.dot_dimension_numbers<[1], [0], [0], [1], [0, 0, 1, 1], [], []>} : vector<14x32xbf16>, vector<32x64xbf16>, vector<14x64xf32> -> vector<14x64xf32>
    %c0_3 = arith.constant 0 : index
    %c0_4 = arith.constant 0 : index
    %3 = vector.load %arg8[%c0_3, %c0_4] : memref<1x64xf32, #tpu.memory_space<vmem>>, vector<1x64xf32>
    %4 = vector.broadcast %3 : vector<1x64xf32> to vector<14x64xf32>
    %5 = arith.addf %2, %4 : vector<14x64xf32>
    %cst_5 = arith.constant 0.000000e+00 : f32
    %6 = vector.broadcast %cst_5 : f32 to vector<14x64xf32>
    %7 = arith.maximumf %5, %6 : vector<14x64xf32>
    %8 = arith.truncf %7 : vector<14x64xf32> to vector<14x64xbf16>
    %c0_6 = arith.constant 0 : index
    %c0_7 = arith.constant 0 : index
    %9 = vector.load %arg3[%c0_6, %c0_7] : memref<64x64xbf16, #tpu.memory_space<vmem>>, vector<64x64xbf16>
    %cst_8 = arith.constant dense<0.000000e+00> : vector<14x64xf32>
    %10 = tpu.matmul %8, %9, %cst_8 {dimension_numbers = #tpu.dot_dimension_numbers<[1], [0], [0], [1], [0, 0, 1, 1], [], []>} : vector<14x64xbf16>, vector<64x64xbf16>, vector<14x64xf32> -> vector<14x64xf32>
    %c0_9 = arith.constant 0 : index
    %c0_10 = arith.constant 0 : index
    %11 = vector.load %arg9[%c0_9, %c0_10] : memref<1x64xf32, #tpu.memory_space<vmem>>, vector<1x64xf32>
    %12 = vector.broadcast %11 : vector<1x64xf32> to vector<14x64xf32>
    %13 = arith.addf %10, %12 : vector<14x64xf32>
    %cst_11 = arith.constant 0.000000e+00 : f32
    %14 = vector.broadcast %cst_11 : f32 to vector<14x64xf32>
    %15 = arith.maximumf %13, %14 : vector<14x64xf32>
    %16 = arith.truncf %15 : vector<14x64xf32> to vector<14x64xbf16>
    %c0_12 = arith.constant 0 : index
    %c0_13 = arith.constant 0 : index
    %17 = vector.load %arg4[%c0_12, %c0_13] : memref<64x64xbf16, #tpu.memory_space<vmem>>, vector<64x64xbf16>
    %cst_14 = arith.constant dense<0.000000e+00> : vector<14x64xf32>
    %18 = tpu.matmul %16, %17, %cst_14 {dimension_numbers = #tpu.dot_dimension_numbers<[1], [0], [0], [1], [0, 0, 1, 1], [], []>} : vector<14x64xbf16>, vector<64x64xbf16>, vector<14x64xf32> -> vector<14x64xf32>
    %c0_15 = arith.constant 0 : index
    %c0_16 = arith.constant 0 : index
    %19 = vector.load %arg10[%c0_15, %c0_16] : memref<1x64xf32, #tpu.memory_space<vmem>>, vector<1x64xf32>
    %20 = vector.broadcast %19 : vector<1x64xf32> to vector<14x64xf32>
    %21 = arith.addf %18, %20 : vector<14x64xf32>
    %cst_17 = arith.constant 0.000000e+00 : f32
    %22 = vector.broadcast %cst_17 : f32 to vector<14x64xf32>
    %23 = arith.maximumf %21, %22 : vector<14x64xf32>
    %24 = arith.truncf %23 : vector<14x64xf32> to vector<14x64xbf16>
    %c0_18 = arith.constant 0 : index
    %c0_19 = arith.constant 0 : index
    %25 = vector.load %arg5[%c0_18, %c0_19] : memref<64x64xbf16, #tpu.memory_space<vmem>>, vector<64x64xbf16>
    %cst_20 = arith.constant dense<0.000000e+00> : vector<14x64xf32>
    %26 = tpu.matmul %24, %25, %cst_20 {dimension_numbers = #tpu.dot_dimension_numbers<[1], [0], [0], [1], [0, 0, 1, 1], [], []>} : vector<14x64xbf16>, vector<64x64xbf16>, vector<14x64xf32> -> vector<14x64xf32>
    %c0_21 = arith.constant 0 : index
    %c0_22 = arith.constant 0 : index
    %27 = vector.load %arg11[%c0_21, %c0_22] : memref<1x64xf32, #tpu.memory_space<vmem>>, vector<1x64xf32>
    %28 = vector.broadcast %27 : vector<1x64xf32> to vector<14x64xf32>
    %29 = arith.addf %26, %28 : vector<14x64xf32>
    %cst_23 = arith.constant 0.000000e+00 : f32
    %30 = vector.broadcast %cst_23 : f32 to vector<14x64xf32>
    %31 = arith.maximumf %29, %30 : vector<14x64xf32>
    %32 = arith.truncf %31 : vector<14x64xf32> to vector<14x64xbf16>
    %c0_24 = arith.constant 0 : index
    %c0_25 = arith.constant 0 : index
    %33 = vector.load %arg6[%c0_24, %c0_25] : memref<64x64xbf16, #tpu.memory_space<vmem>>, vector<64x64xbf16>
    %cst_26 = arith.constant dense<0.000000e+00> : vector<14x64xf32>
    %34 = tpu.matmul %32, %33, %cst_26 {dimension_numbers = #tpu.dot_dimension_numbers<[1], [0], [0], [1], [0, 0, 1, 1], [], []>} : vector<14x64xbf16>, vector<64x64xbf16>, vector<14x64xf32> -> vector<14x64xf32>
    %c0_27 = arith.constant 0 : index
    %c0_28 = arith.constant 0 : index
    %35 = vector.load %arg12[%c0_27, %c0_28] : memref<1x64xf32, #tpu.memory_space<vmem>>, vector<1x64xf32>
    %36 = vector.broadcast %35 : vector<1x64xf32> to vector<14x64xf32>
    %37 = arith.addf %34, %36 : vector<14x64xf32>
    %cst_29 = arith.constant 0.000000e+00 : f32
    %38 = vector.broadcast %cst_29 : f32 to vector<14x64xf32>
    %39 = arith.maximumf %37, %38 : vector<14x64xf32>
    %40 = arith.truncf %39 : vector<14x64xf32> to vector<14x64xbf16>
    %c0_30 = arith.constant 0 : index
    %c0_31 = arith.constant 0 : index
    %41 = vector.load %arg7[%c0_30, %c0_31] : memref<64x5xbf16, #tpu.memory_space<vmem>>, vector<64x5xbf16>
    %cst_32 = arith.constant dense<0.000000e+00> : vector<14x5xf32>
    %42 = tpu.matmul %40, %41, %cst_32 {dimension_numbers = #tpu.dot_dimension_numbers<[1], [0], [0], [1], [0, 0, 1, 1], [], []>} : vector<14x64xbf16>, vector<64x5xbf16>, vector<14x5xf32> -> vector<14x5xf32>
    %c0_33 = arith.constant 0 : index
    %c0_34 = arith.constant 0 : index
    %43 = vector.load %arg13[%c0_33, %c0_34] : memref<1x5xf32, #tpu.memory_space<vmem>>, vector<1x5xf32>
    %44 = vector.broadcast %43 : vector<1x5xf32> to vector<14x5xf32>
    %45 = arith.addf %42, %44 : vector<14x5xf32>
    %c0_35 = arith.constant 0 : index
    %c0_36 = arith.constant 0 : index
    %46 = vector.load %arg14[%c0_35, %c0_36] : memref<14x5xf32, #tpu.memory_space<vmem>>, vector<14x5xf32>
    tpu.vector_store %arg14[%c0_35, %c0_36], %45 {strides = array<i32>} : memref<14x5xf32, #tpu.memory_space<vmem>>, vector<14x5xf32>,
    return
  }
  func.func @transform_0(%arg0: i32) -> (i32, i32) {
    %c0_i32 = arith.constant 0 : i32
    %c0_i32_0 = arith.constant 0 : i32
    return %arg0, %c0_i32 : i32, i32
  }
  func.func @transform_1(%arg0: i32) -> (i32, i32) {
    %c0_i32 = arith.constant 0 : i32
    %c0_i32_0 = arith.constant 0 : i32
    %c0_i32_1 = arith.constant 0 : i32
    return %c0_i32, %c0_i32_0 : i32, i32
  }
  func.func @transform_2(%arg0: i32) -> (i32, i32) {
    %c0_i32 = arith.constant 0 : i32
    %c0_i32_0 = arith.constant 0 : i32
    %c0_i32_1 = arith.constant 0 : i32
    return %c0_i32, %c0_i32_0 : i32, i32
  }
  func.func @transform_3(%arg0: i32) -> (i32, i32) {
    %c0_i32 = arith.constant 0 : i32
    %c0_i32_0 = arith.constant 0 : i32
    %c0_i32_1 = arith.constant 0 : i32
    return %c0_i32, %c0_i32_0 : i32, i32
  }
  func.func @transform_4(%arg0: i32) -> (i32, i32) {
    %c0_i32 = arith.constant 0 : i32
    %c0_i32_0 = arith.constant 0 : i32
    %c0_i32_1 = arith.constant 0 : i32
    return %c0_i32, %c0_i32_0 : i32, i32
  }
  func.func @transform_5(%arg0: i32) -> (i32, i32) {
    %c0_i32 = arith.constant 0 : i32
    %c0_i32_0 = arith.constant 0 : i32
    %c0_i32_1 = arith.constant 0 : i32
    return %c0_i32, %c0_i32_0 : i32, i32
  }
  func.func @transform_6(%arg0: i32) -> (i32, i32) {
    %c0_i32 = arith.constant 0 : i32
    %c0_i32_0 = arith.constant 0 : i32
    %c0_i32_1 = arith.constant 0 : i32
    return %c0_i32, %c0_i32_0 : i32, i32
  }
  func.func @transform_7(%arg0: i32) -> (i32, i32) {
    %c0_i32 = arith.constant 0 : i32
    %c0_i32_0 = arith.constant 0 : i32
    %c0_i32_1 = arith.constant 0 : i32
    return %c0_i32, %c0_i32_0 : i32, i32
  }
  func.func @transform_8(%arg0: i32) -> (i32, i32) {
    %c0_i32 = arith.constant 0 : i32
    %c0_i32_0 = arith.constant 0 : i32
    %c0_i32_1 = arith.constant 0 : i32
    return %c0_i32, %c0_i32_0 : i32, i32
  }
  func.func @transform_9(%arg0: i32) -> (i32, i32) {
    %c0_i32 = arith.constant 0 : i32
    %c0_i32_0 = arith.constant 0 : i32
    %c0_i32_1 = arith.constant 0 : i32
    return %c0_i32, %c0_i32_0 : i32, i32
  }
  func.func @transform_10(%arg0: i32) -> (i32, i32) {
    %c0_i32 = arith.constant 0 : i32
    %c0_i32_0 = arith.constant 0 : i32
    %c0_i32_1 = arith.constant 0 : i32
    return %c0_i32, %c0_i32_0 : i32, i32
  }
  func.func @transform_11(%arg0: i32) -> (i32, i32) {
    %c0_i32 = arith.constant 0 : i32
    %c0_i32_0 = arith.constant 0 : i32
    %c0_i32_1 = arith.constant 0 : i32
    return %c0_i32, %c0_i32_0 : i32, i32
  }
  func.func @transform_12(%arg0: i32) -> (i32, i32) {
    %c0_i32 = arith.constant 0 : i32
    %c0_i32_0 = arith.constant 0 : i32
    %c0_i32_1 = arith.constant 0 : i32
    return %c0_i32, %c0_i32_0 : i32, i32
  }
  func.func @transform_13(%arg0: i32) -> (i32, i32) {
    %c0_i32 = arith.constant 0 : i32
    %c0_i32_0 = arith.constant 0 : i32
    return %arg0, %c0_i32 : i32, i32
  }
}

module attributes {stable_mosaic.version = 11 : i64} {
  func.func @_mlp_kernel(%arg0: i32, %arg1: memref<2x32xbf16, #tpu.memory_space<vmem>>, %arg2: memref<32x64xbf16, #tpu.memory_space<vmem>>, %arg3: memref<64x64xbf16, #tpu.memory_space<vmem>>, %arg4: memref<64x64xbf16, #tpu.memory_space<vmem>>, %arg5: memref<64x64xbf16, #tpu.memory_space<vmem>>, %arg6: memref<64x64xbf16, #tpu.memory_space<vmem>>, %arg7: memref<64x7xbf16, #tpu.memory_space<vmem>>, %arg8: memref<1x64xf32, #tpu.memory_space<vmem>>, %arg9: memref<1x64xf32, #tpu.memory_space<vmem>>, %arg10: memref<1x64xf32, #tpu.memory_space<vmem>>, %arg11: memref<1x64xf32, #tpu.memory_space<vmem>>, %arg12: memref<1x64xf32, #tpu.memory_space<vmem>>, %arg13: memref<1x7xf32, #tpu.memory_space<vmem>>, %arg14: memref<2x7xf32, #tpu.memory_space<vmem>>) attributes {dimension_semantics = [#tpu.dimension_semantics<parallel>], iteration_bounds = array<i64: 1>, scalar_prefetch = 0 : i64, scratch_operands = 0 : i64, tpu.core_type = #tpu.core_type<tc>, window_params = [{transform_indices = @transform_0, window_bounds = array<i64: 2, 32>}, {pipeline_mode = #tpu.pipeline_mode<synchronous>, transform_indices = @transform_1, window_bounds = array<i64: 32, 64>}, {pipeline_mode = #tpu.pipeline_mode<synchronous>, transform_indices = @transform_2, window_bounds = array<i64: 64, 64>}, {pipeline_mode = #tpu.pipeline_mode<synchronous>, transform_indices = @transform_3, window_bounds = array<i64: 64, 64>}, {pipeline_mode = #tpu.pipeline_mode<synchronous>, transform_indices = @transform_4, window_bounds = array<i64: 64, 64>}, {pipeline_mode = #tpu.pipeline_mode<synchronous>, transform_indices = @transform_5, window_bounds = array<i64: 64, 64>}, {pipeline_mode = #tpu.pipeline_mode<synchronous>, transform_indices = @transform_6, window_bounds = array<i64: 64, 7>}, {pipeline_mode = #tpu.pipeline_mode<synchronous>, transform_indices = @transform_7, window_bounds = array<i64: 1, 64>}, {pipeline_mode = #tpu.pipeline_mode<synchronous>, transform_indices = @transform_8, window_bounds = array<i64: 1, 64>}, {pipeline_mode = #tpu.pipeline_mode<synchronous>, transform_indices = @transform_9, window_bounds = array<i64: 1, 64>}, {pipeline_mode = #tpu.pipeline_mode<synchronous>, transform_indices = @transform_10, window_bounds = array<i64: 1, 64>}, {pipeline_mode = #tpu.pipeline_mode<synchronous>, transform_indices = @transform_11, window_bounds = array<i64: 1, 64>}, {pipeline_mode = #tpu.pipeline_mode<synchronous>, transform_indices = @transform_12, window_bounds = array<i64: 1, 7>}, {transform_indices = @transform_13, window_bounds = array<i64: 2, 7>}]} {
    %c0 = arith.constant 0 : index
    %c0_0 = arith.constant 0 : index
    %0 = vector.load %arg1[%c0, %c0_0] : memref<2x32xbf16, #tpu.memory_space<vmem>>, vector<2x32xbf16>
    %c0_1 = arith.constant 0 : index
    %c0_2 = arith.constant 0 : index
    %1 = vector.load %arg2[%c0_1, %c0_2] : memref<32x64xbf16, #tpu.memory_space<vmem>>, vector<32x64xbf16>
    %cst = arith.constant dense<0.000000e+00> : vector<2x64xf32>
    %2 = tpu.matmul %0, %1, %cst {dimension_numbers = #tpu.dot_dimension_numbers<[1], [0], [0], [1], [0, 0, 1, 1], [], []>} : vector<2x32xbf16>, vector<32x64xbf16>, vector<2x64xf32> -> vector<2x64xf32>
    %c0_3 = arith.constant 0 : index
    %c0_4 = arith.constant 0 : index
    %3 = vector.load %arg8[%c0_3, %c0_4] : memref<1x64xf32, #tpu.memory_space<vmem>>, vector<1x64xf32>
    %4 = vector.broadcast %3 : vector<1x64xf32> to vector<2x64xf32>
    %5 = arith.addf %2, %4 : vector<2x64xf32>
    %cst_5 = arith.constant 0.000000e+00 : f32
    %6 = vector.broadcast %cst_5 : f32 to vector<2x64xf32>
    %7 = arith.maximumf %5, %6 : vector<2x64xf32>
    %8 = arith.truncf %7 : vector<2x64xf32> to vector<2x64xbf16>
    %c0_6 = arith.constant 0 : index
    %c0_7 = arith.constant 0 : index
    %9 = vector.load %arg3[%c0_6, %c0_7] : memref<64x64xbf16, #tpu.memory_space<vmem>>, vector<64x64xbf16>
    %cst_8 = arith.constant dense<0.000000e+00> : vector<2x64xf32>
    %10 = tpu.matmul %8, %9, %cst_8 {dimension_numbers = #tpu.dot_dimension_numbers<[1], [0], [0], [1], [0, 0, 1, 1], [], []>} : vector<2x64xbf16>, vector<64x64xbf16>, vector<2x64xf32> -> vector<2x64xf32>
    %c0_9 = arith.constant 0 : index
    %c0_10 = arith.constant 0 : index
    %11 = vector.load %arg9[%c0_9, %c0_10] : memref<1x64xf32, #tpu.memory_space<vmem>>, vector<1x64xf32>
    %12 = vector.broadcast %11 : vector<1x64xf32> to vector<2x64xf32>
    %13 = arith.addf %10, %12 : vector<2x64xf32>
    %cst_11 = arith.constant 0.000000e+00 : f32
    %14 = vector.broadcast %cst_11 : f32 to vector<2x64xf32>
    %15 = arith.maximumf %13, %14 : vector<2x64xf32>
    %16 = arith.truncf %15 : vector<2x64xf32> to vector<2x64xbf16>
    %c0_12 = arith.constant 0 : index
    %c0_13 = arith.constant 0 : index
    %17 = vector.load %arg4[%c0_12, %c0_13] : memref<64x64xbf16, #tpu.memory_space<vmem>>, vector<64x64xbf16>
    %cst_14 = arith.constant dense<0.000000e+00> : vector<2x64xf32>
    %18 = tpu.matmul %16, %17, %cst_14 {dimension_numbers = #tpu.dot_dimension_numbers<[1], [0], [0], [1], [0, 0, 1, 1], [], []>} : vector<2x64xbf16>, vector<64x64xbf16>, vector<2x64xf32> -> vector<2x64xf32>
    %c0_15 = arith.constant 0 : index
    %c0_16 = arith.constant 0 : index
    %19 = vector.load %arg10[%c0_15, %c0_16] : memref<1x64xf32, #tpu.memory_space<vmem>>, vector<1x64xf32>
    %20 = vector.broadcast %19 : vector<1x64xf32> to vector<2x64xf32>
    %21 = arith.addf %18, %20 : vector<2x64xf32>
    %cst_17 = arith.constant 0.000000e+00 : f32
    %22 = vector.broadcast %cst_17 : f32 to vector<2x64xf32>
    %23 = arith.maximumf %21, %22 : vector<2x64xf32>
    %24 = arith.truncf %23 : vector<2x64xf32> to vector<2x64xbf16>
    %c0_18 = arith.constant 0 : index
    %c0_19 = arith.constant 0 : index
    %25 = vector.load %arg5[%c0_18, %c0_19] : memref<64x64xbf16, #tpu.memory_space<vmem>>, vector<64x64xbf16>
    %cst_20 = arith.constant dense<0.000000e+00> : vector<2x64xf32>
    %26 = tpu.matmul %24, %25, %cst_20 {dimension_numbers = #tpu.dot_dimension_numbers<[1], [0], [0], [1], [0, 0, 1, 1], [], []>} : vector<2x64xbf16>, vector<64x64xbf16>, vector<2x64xf32> -> vector<2x64xf32>
    %c0_21 = arith.constant 0 : index
    %c0_22 = arith.constant 0 : index
    %27 = vector.load %arg11[%c0_21, %c0_22] : memref<1x64xf32, #tpu.memory_space<vmem>>, vector<1x64xf32>
    %28 = vector.broadcast %27 : vector<1x64xf32> to vector<2x64xf32>
    %29 = arith.addf %26, %28 : vector<2x64xf32>
    %cst_23 = arith.constant 0.000000e+00 : f32
    %30 = vector.broadcast %cst_23 : f32 to vector<2x64xf32>
    %31 = arith.maximumf %29, %30 : vector<2x64xf32>
    %32 = arith.truncf %31 : vector<2x64xf32> to vector<2x64xbf16>
    %c0_24 = arith.constant 0 : index
    %c0_25 = arith.constant 0 : index
    %33 = vector.load %arg6[%c0_24, %c0_25] : memref<64x64xbf16, #tpu.memory_space<vmem>>, vector<64x64xbf16>
    %cst_26 = arith.constant dense<0.000000e+00> : vector<2x64xf32>
    %34 = tpu.matmul %32, %33, %cst_26 {dimension_numbers = #tpu.dot_dimension_numbers<[1], [0], [0], [1], [0, 0, 1, 1], [], []>} : vector<2x64xbf16>, vector<64x64xbf16>, vector<2x64xf32> -> vector<2x64xf32>
    %c0_27 = arith.constant 0 : index
    %c0_28 = arith.constant 0 : index
    %35 = vector.load %arg12[%c0_27, %c0_28] : memref<1x64xf32, #tpu.memory_space<vmem>>, vector<1x64xf32>
    %36 = vector.broadcast %35 : vector<1x64xf32> to vector<2x64xf32>
    %37 = arith.addf %34, %36 : vector<2x64xf32>
    %cst_29 = arith.constant 0.000000e+00 : f32
    %38 = vector.broadcast %cst_29 : f32 to vector<2x64xf32>
    %39 = arith.maximumf %37, %38 : vector<2x64xf32>
    %40 = arith.truncf %39 : vector<2x64xf32> to vector<2x64xbf16>
    %c0_30 = arith.constant 0 : index
    %c0_31 = arith.constant 0 : index
    %41 = vector.load %arg7[%c0_30, %c0_31] : memref<64x7xbf16, #tpu.memory_space<vmem>>, vector<64x7xbf16>
    %cst_32 = arith.constant dense<0.000000e+00> : vector<2x7xf32>
    %42 = tpu.matmul %40, %41, %cst_32 {dimension_numbers = #tpu.dot_dimension_numbers<[1], [0], [0], [1], [0, 0, 1, 1], [], []>} : vector<2x64xbf16>, vector<64x7xbf16>, vector<2x7xf32> -> vector<2x7xf32>
    %c0_33 = arith.constant 0 : index
    %c0_34 = arith.constant 0 : index
    %43 = vector.load %arg13[%c0_33, %c0_34] : memref<1x7xf32, #tpu.memory_space<vmem>>, vector<1x7xf32>
    %44 = vector.broadcast %43 : vector<1x7xf32> to vector<2x7xf32>
    %45 = arith.addf %42, %44 : vector<2x7xf32>
    %c0_35 = arith.constant 0 : index
    %c0_36 = arith.constant 0 : index
    %46 = vector.load %arg14[%c0_35, %c0_36] : memref<2x7xf32, #tpu.memory_space<vmem>>, vector<2x7xf32>
    tpu.vector_store %arg14[%c0_35, %c0_36], %45 {strides = array<i32>} : memref<2x7xf32, #tpu.memory_space<vmem>>, vector<2x7xf32>,
    return
  }
  func.func @transform_0(%arg0: i32) -> (i32, i32) {
    %c0_i32 = arith.constant 0 : i32
    %c0_i32_0 = arith.constant 0 : i32
    return %arg0, %c0_i32 : i32, i32
  }
  func.func @transform_1(%arg0: i32) -> (i32, i32) {
    %c0_i32 = arith.constant 0 : i32
    %c0_i32_0 = arith.constant 0 : i32
    %c0_i32_1 = arith.constant 0 : i32
    return %c0_i32, %c0_i32_0 : i32, i32
  }
  func.func @transform_2(%arg0: i32) -> (i32, i32) {
    %c0_i32 = arith.constant 0 : i32
    %c0_i32_0 = arith.constant 0 : i32
    %c0_i32_1 = arith.constant 0 : i32
    return %c0_i32, %c0_i32_0 : i32, i32
  }
  func.func @transform_3(%arg0: i32) -> (i32, i32) {
    %c0_i32 = arith.constant 0 : i32
    %c0_i32_0 = arith.constant 0 : i32
    %c0_i32_1 = arith.constant 0 : i32
    return %c0_i32, %c0_i32_0 : i32, i32
  }
  func.func @transform_4(%arg0: i32) -> (i32, i32) {
    %c0_i32 = arith.constant 0 : i32
    %c0_i32_0 = arith.constant 0 : i32
    %c0_i32_1 = arith.constant 0 : i32
    return %c0_i32, %c0_i32_0 : i32, i32
  }
  func.func @transform_5(%arg0: i32) -> (i32, i32) {
    %c0_i32 = arith.constant 0 : i32
    %c0_i32_0 = arith.constant 0 : i32
    %c0_i32_1 = arith.constant 0 : i32
    return %c0_i32, %c0_i32_0 : i32, i32
  }
  func.func @transform_6(%arg0: i32) -> (i32, i32) {
    %c0_i32 = arith.constant 0 : i32
    %c0_i32_0 = arith.constant 0 : i32
    %c0_i32_1 = arith.constant 0 : i32
    return %c0_i32, %c0_i32_0 : i32, i32
  }
  func.func @transform_7(%arg0: i32) -> (i32, i32) {
    %c0_i32 = arith.constant 0 : i32
    %c0_i32_0 = arith.constant 0 : i32
    %c0_i32_1 = arith.constant 0 : i32
    return %c0_i32, %c0_i32_0 : i32, i32
  }
  func.func @transform_8(%arg0: i32) -> (i32, i32) {
    %c0_i32 = arith.constant 0 : i32
    %c0_i32_0 = arith.constant 0 : i32
    %c0_i32_1 = arith.constant 0 : i32
    return %c0_i32, %c0_i32_0 : i32, i32
  }
  func.func @transform_9(%arg0: i32) -> (i32, i32) {
    %c0_i32 = arith.constant 0 : i32
    %c0_i32_0 = arith.constant 0 : i32
    %c0_i32_1 = arith.constant 0 : i32
    return %c0_i32, %c0_i32_0 : i32, i32
  }
  func.func @transform_10(%arg0: i32) -> (i32, i32) {
    %c0_i32 = arith.constant 0 : i32
    %c0_i32_0 = arith.constant 0 : i32
    %c0_i32_1 = arith.constant 0 : i32
    return %c0_i32, %c0_i32_0 : i32, i32
  }
  func.func @transform_11(%arg0: i32) -> (i32, i32) {
    %c0_i32 = arith.constant 0 : i32
    %c0_i32_0 = arith.constant 0 : i32
    %c0_i32_1 = arith.constant 0 : i32
    return %c0_i32, %c0_i32_0 : i32, i32
  }
  func.func @transform_12(%arg0: i32) -> (i32, i32) {
    %c0_i32 = arith.constant 0 : i32
    %c0_i32_0 = arith.constant 0 : i32
    %c0_i32_1 = arith.constant 0 : i32
    return %c0_i32, %c0_i32_0 : i32, i32
  }
  func.func @transform_13(%arg0: i32) -> (i32, i32) {
    %c0_i32 = arith.constant 0 : i32
    %c0_i32_0 = arith.constant 0 : i32
    return %arg0, %c0_i32 : i32, i32
  }
}

</mosaic_0001>

<llo_original>
// kernel: xlmr_ic_ner_forward.16
$region0: #{xlmr_ic_ner_forward.16}
  #allocation0 [shape = 'u32[]', space=smem, size = 0x4, offset = 0x4, fixed_abs, tag = 'smem constant byte address 0x4 - core index']
  #allocation1 [shape = 'u32[144,128]{1,0:T(1,128)}', space=vmem, size = 0x12000, scoped, tag = 'internal scratch']
  %s0 = inlined_call_operand.vmem [shape: bf16[16,32], index: 0, kind: input, shape index: {}]
  %s1 = inlined_call_operand.vmem [shape: bf16[32,32], index: 1, kind: input, shape index: {}]
  %s2 = inlined_call_operand.vmem [shape: f32[1,32], index: 2, kind: input, shape index: {}]
  %s3 = inlined_call_operand.vmem [shape: bf16[16,32], index: 3, kind: input, shape index: {}]
  %s4 = inlined_call_operand.vmem [shape: f32[1,32], index: 4, kind: input, shape index: {}]
  %s5 = inlined_call_operand.vmem [shape: f32[1,32], index: 5, kind: input, shape index: {}]
  %s6 = inlined_call_operand.vmem [shape: bf16[16,32], index: 6, kind: output, shape index: {}]
  %s7 = sld [smem:[#allocation0]]
  $region34: #{xlmr_ic_ner_forward.16} parent=0
    _
  %s9 = ssub.s32 1, %s7
  %s10 = scalar_select 0, %s9, %s7
  // Predicated region
  $region2: #{xlmr_ic_ner_forward.16} parent=0 // pred_check
    _
  $region3: #{xlmr_ic_ner_forward.16} parent=0 // pred_check_branch
    %12 = sbr.rel (0) target = $region5
  $region4: #{xlmr_ic_ner_forward.16} parent=0 // pred_region
    _
  $region5: #{xlmr_ic_ner_forward.16} parent=0 // pred_fallthru
    _
  // Predicated region
  $region6: #{xlmr_ic_ner_forward.16} parent=0 // pred_check
    _
  $region7: #{xlmr_ic_ner_forward.16} parent=0 // pred_check_branch
    %14 = sbr.rel (0) target = $region9
  $region8: #{xlmr_ic_ner_forward.16} parent=0 // pred_region
    _
  $region9: #{xlmr_ic_ner_forward.16} parent=0 // pred_fallthru
    _
  // Predicated region
  $region10: #{xlmr_ic_ner_forward.16} parent=0 // pred_check
    _
  $region11: #{xlmr_ic_ner_forward.16} parent=0 // pred_check_branch
    %16 = sbr.rel (0) target = $region13
  $region12: #{xlmr_ic_ner_forward.16} parent=0 // pred_region
    _
  $region13: #{xlmr_ic_ner_forward.16} parent=0 // pred_fallthru
    _
  // Predicated region
  $region14: #{xlmr_ic_ner_forward.16} parent=0 // pred_check
    _
  $region15: #{xlmr_ic_ner_forward.16} parent=0 // pred_check_branch
    %18 = sbr.rel (0) target = $region17
  $region16: #{xlmr_ic_ner_forward.16} parent=0 // pred_region
    _
  $region17: #{xlmr_ic_ner_forward.16} parent=0 // pred_fallthru
    _
  // Predicated region
  $region18: #{xlmr_ic_ner_forward.16} parent=0 // pred_check
    _
  $region19: #{xlmr_ic_ner_forward.16} parent=0 // pred_check_branch
    %20 = sbr.rel (0) target = $region21
  $region20: #{xlmr_ic_ner_forward.16} parent=0 // pred_region
    _
  $region21: #{xlmr_ic_ner_forward.16} parent=0 // pred_fallthru
    _
  // Predicated region
  $region22: #{xlmr_ic_ner_forward.16} parent=0 // pred_check
    _
  $region23: #{xlmr_ic_ner_forward.16} parent=0 // pred_check_branch
    %22 = sbr.rel (0) target = $region25
  $region24: #{xlmr_ic_ner_forward.16} parent=0 // pred_region
    _
  $region25: #{xlmr_ic_ner_forward.16} parent=0 // pred_fallthru
    _
  %v24 = vld [vmem:[%s0] sm:$0xf]
  %v25 = vld [vmem:[%s0 + $0x4] sm:$0xf]
  %v26 = vld [vmem:[%s1] sm:$0xf]
  %v27 = vld [vmem:[%s1 + $0x4] sm:$0xf]
  %v28 = vld [vmem:[%s1 + $0x8] sm:$0xf]
  %v29 = vld [vmem:[%s1 + $0xc] sm:$0xf]
  %v30 = vld [vmem:[%s2] sm:$0x1]
  %v32 = vlaneseq
  %v33 = vshrl.u32 %v32, 7
  %v34 = vsub.s32 0, %v33
  %v35 = vrot.slane %v30, %v34
  %v39 = vunpack.c.l.b16 %v24
  %v40 = vunpack.c.l.b16 %v25
  %v41 = vpack.c.b16 %v40, %v39
  %v46 = vunpack.c.l.b16 %v26
  %v47 = vunpack.c.l.b16 %v27
  %v48 = vunpack.c.l.b16 %v28
  %v49 = vunpack.c.l.b16 %v29
  %v50 = vpack.c.b16 %v47, %v46
  %v51 = vpack.c.b16 %v49, %v48
  %vm54 = vcmask 261120
  %v56 = vsel %vm54, %v41, 0
  %58 = vmatprep.subr.bf16.mxu0 0
  %59 = vmatpush1.bf16.msra.mxu0 0
  %60 = vmatprep.subr.bf16.mxu0 0
  %61 = vmatpush1.bf16.msra.mxu0 0
  %62 = vmatprep.subr.bf16.mxu0 0
  %63 = vmatpush1.bf16.msra.mxu0 0
  %64 = vmatprep.subr.bf16.mxu0 0
  %65 = vmatpush1.bf16.msra.mxu0 0
  %66 = vmatprep.subr.bf16.mxu0 0
  %67 = vmatpush1.bf16.msra.mxu0 0
  %68 = vmatprep.subr.bf16.mxu0 0
  %69 = vmatpush1.bf16.msra.mxu0 0
  %70 = vmatprep.subr.bf16.mxu0 0
  %71 = vmatpush1.bf16.msra.mxu0 %v51
  %72 = vmatprep.subr.bf16.mxu0 0
  %73 = vmatpush1.bf16.msra.mxu0 %v50
  %74 = vmatprep.subr.bf16.mxu0 0
  %75 = vmatpush2.bf16.msra.mxu0 0
  %76 = vmatprep.subr.bf16.mxu0 0
  %77 = vmatpush2.bf16.msra.mxu0 0
  %78 = vmatprep.subr.bf16.mxu0 0
  %79 = vmatpush2.bf16.msra.mxu0 0
  %80 = vmatprep.subr.bf16.mxu0 0
  %81 = vmatpush2.bf16.msra.mxu0 0
  %82 = vmatprep.subr.bf16.mxu0 0
  %83 = vmatpush2.bf16.msra.mxu0 0
  %84 = vmatprep.subr.bf16.mxu0 0
  %85 = vmatpush2.bf16.msra.mxu0 0
  %86 = vmatprep.subr.bf16.mxu0 0
  %87 = vmatpush2.bf16.msra.mxu0 0
  %88 = vmatprep.subr.bf16.mxu0 0
  %89 = vmatpush2.bf16.msra.mxu0 0
  %90 = vmatprep.mubr.bf16.mxu0 0
  %91 = vmatmul.mubr.bf16.gmra.mxu0 %v56
  %v92 = vpop.f32.mrf.mxu0
  %v93 = vadd.f32 %v35, %v92
  %v94 = vpop.f32.mrf.mxu0
  %v95 = vpop.f32.mrf.mxu0
  %v96 = vadd.f32 %v35, %v95
  %v97 = vpop.f32.mrf.mxu0
  %98 = vdwg.mxu0
  %v99 = vld [vmem:[%s3] sm:$0xf]
  %v100 = vld [vmem:[%s3 + $0x4] sm:$0xf]
  %v101 = vunpack.c.l.bf16 %v99
  %v102 = vunpack.c.l.bf16 %v100
  %v103 = vadd.f32 %v93, %v101
  %v104 = vadd.f32 %v96, %v102
  %v105 = vld [vmem:[%s4] sm:$0x1]
  %v106 = vld [vmem:[%s5] sm:$0x1]
  %v107 = vsel %vm54, %v103, 0.0
  %108 = vadd.xlane.f32.xlu0 %v107
  %v109 = vpop.xlane.xlu0 %108
  %v110 = vsel %vm54, %v104, 0.0
  %111 = vadd.xlane.f32.xlu0 %v110
  %v112 = vpop.xlane.xlu0 %111
  %v113 = vrcp.pop 32.0
  %v114 = vmul.f32 %v109, %v113
  %v115 = vmul.f32 %v112, %v113
  %v116 = vsub.f32 %v103, %v114
  %v117 = vsub.f32 %v104, %v115
  %v118 = vmul.f32 %v116, %v116
  %v119 = vmul.f32 %v117, %v117
  %v120 = vsel %vm54, %v118, 0.0
  %121 = vadd.xlane.f32.xlu0 %v120
  %v122 = vpop.xlane.xlu0 %121
  %v123 = vsel %vm54, %v119, 0.0
  %124 = vadd.xlane.f32.xlu0 %v123
  %v125 = vpop.xlane.xlu0 %124
  %v126 = vmul.f32 %v122, %v113
  %v127 = vmul.f32 %v125, %v113
  %v128 = vadd.f32 %v126, 1e-05
  %v129 = vadd.f32 %v127, 1e-05
  %v130 = vrsqrt.pop %v128
  %v131 = vrsqrt.pop %v129
  %v132 = vmul.f32 %v116, %v130
  %v133 = vmul.f32 %v117, %v131
  %v135 = vlaneseq
  %v136 = vshrl.u32 %v135, 7
  %v137 = vsub.s32 0, %v136
  %v138 = vrot.slane %v105, %v137
  %v140 = vmul.f32 %v132, %v138
  %v141 = vmul.f32 %v133, %v138
  %v143 = vlaneseq
  %v144 = vshrl.u32 %v143, 7
  %v145 = vsub.s32 0, %v144
  %v146 = vrot.slane %v106, %v145
  %v148 = vadd.f32 %v140, %v146
  %v149 = vadd.f32 %v141, %v146
  %v150 = vpack.c.bf16 %v149, %v148
  %v152 = vunpack.c.l.b16 %v150
  %v153 = vunpack.c.h.b16 %v150
  %v154 = vpack.c.b16 %v152, %v152
  %v155 = vpack.c.b16 %v153, %v153
  %vm158 = vcmask 257024
  %159 = vst.msk [vmem:[%s6] sm:$0xf] %vm158, %v154
  %160 = vst.msk [vmem:[%s6 + $0x4] sm:$0xf] %vm158, %v155
  // Predicated region
  $region26: #{xlmr_ic_ner_forward.16} parent=0 // pred_check
    _
  $region27: #{xlmr_ic_ner_forward.16} parent=0 // pred_check_branch
    %162 = sbr.rel (0) target = $region29
  $region28: #{xlmr_ic_ner_forward.16} parent=0 // pred_region
    _
  $region29: #{xlmr_ic_ner_forward.16} parent=0 // pred_fallthru
    _
  // Predicated region
  $region30: #{xlmr_ic_ner_forward.16} parent=0 // pred_check
    _
  $region31: #{xlmr_ic_ner_forward.16} parent=0 // pred_check_branch
    %164 = sbr.rel (0) target = $region33
  $region32: #{xlmr_ic_ner_forward.16} parent=0 // pred_region
    _
  $region33: #{xlmr_ic_ner_forward.16} parent=0 // pred_fallthru
    _

// kernel: xlmr_ic_ner_forward.13
$region0: #{xlmr_ic_ner_forward.13}
  #allocation0 [shape = 'u32[]', space=smem, size = 0x4, offset = 0x4, fixed_abs, tag = 'smem constant byte address 0x4 - core index']
  #allocation1 [shape = 'u32[144,128]{1,0:T(1,128)}', space=vmem, size = 0x12000, scoped, tag = 'internal scratch']
  %s0 = inlined_call_operand.vmem [shape: f32[16,32], index: 0, kind: input, shape index: {}]
  %s1 = inlined_call_operand.vmem [shape: f32[1,32], index: 1, kind: input, shape index: {}]
  %s2 = inlined_call_operand.vmem [shape: f32[1,32], index: 2, kind: input, shape index: {}]
  %s3 = inlined_call_operand.vmem [shape: bf16[16,32], index: 3, kind: output, shape index: {}]
  %s4 = sld [smem:[#allocation0]]
  $region22: #{xlmr_ic_ner_forward.13} parent=0
    _
  %s6 = ssub.s32 1, %s4
  %s7 = scalar_select 0, %s6, %s4
  // Predicated region
  $region2: #{xlmr_ic_ner_forward.13} parent=0 // pred_check
    _
  $region3: #{xlmr_ic_ner_forward.13} parent=0 // pred_check_branch
    %9 = sbr.rel (0) target = $region5
  $region4: #{xlmr_ic_ner_forward.13} parent=0 // pred_region
    _
  $region5: #{xlmr_ic_ner_forward.13} parent=0 // pred_fallthru
    _
  // Predicated region
  $region6: #{xlmr_ic_ner_forward.13} parent=0 // pred_check
    _
  $region7: #{xlmr_ic_ner_forward.13} parent=0 // pred_check_branch
    %11 = sbr.rel (0) target = $region9
  $region8: #{xlmr_ic_ner_forward.13} parent=0 // pred_region
    _
  $region9: #{xlmr_ic_ner_forward.13} parent=0 // pred_fallthru
    _
  // Predicated region
  $region10: #{xlmr_ic_ner_forward.13} parent=0 // pred_check
    _
  $region11: #{xlmr_ic_ner_forward.13} parent=0 // pred_check_branch
    %13 = sbr.rel (0) target = $region13
  $region12: #{xlmr_ic_ner_forward.13} parent=0 // pred_region
    _
  $region13: #{xlmr_ic_ner_forward.13} parent=0 // pred_fallthru
    _
  %v14 = vld [vmem:[%s0] sm:$0xff]
  %v15 = vld [vmem:[%s0 + $0x8] sm:$0xff]
  %v16 = vld [vmem:[%s1] sm:$0x1]
  %v17 = vld [vmem:[%s2] sm:$0x1]
  %vm18 = vcmask 261120
  %v19 = vsel %vm18, %v14, 0.0
  %20 = vadd.xlane.f32.xlu0 %v19
  %v21 = vpop.xlane.xlu0 %20
  %v22 = vsel %vm18, %v15, 0.0
  %23 = vadd.xlane.f32.xlu0 %v22
  %v24 = vpop.xlane.xlu0 %23
  %v25 = vrcp.pop 32.0
  %v26 = vmul.f32 %v21, %v25
  %v27 = vmul.f32 %v24, %v25
  %v28 = vsub.f32 %v14, %v26
  %v29 = vsub.f32 %v15, %v27
  %v30 = vmul.f32 %v28, %v28
  %v31 = vmul.f32 %v29, %v29
  %v32 = vsel %vm18, %v30, 0.0
  %33 = vadd.xlane.f32.xlu0 %v32
  %v34 = vpop.xlane.xlu0 %33
  %v35 = vsel %vm18, %v31, 0.0
  %36 = vadd.xlane.f32.xlu0 %v35
  %v37 = vpop.xlane.xlu0 %36
  %v38 = vmul.f32 %v34, %v25
  %v39 = vmul.f32 %v37, %v25
  %v40 = vadd.f32 %v38, 1e-05
  %v41 = vadd.f32 %v39, 1e-05
  %v42 = vrsqrt.pop %v40
  %v43 = vrsqrt.pop %v41
  %v44 = vmul.f32 %v28, %v42
  %v45 = vmul.f32 %v29, %v43
  %v47 = vlaneseq
  %v48 = vshrl.u32 %v47, 7
  %v49 = vsub.s32 0, %v48
  %v50 = vrot.slane %v16, %v49
  %v52 = vmul.f32 %v44, %v50
  %v53 = vmul.f32 %v45, %v50
  %v55 = vlaneseq
  %v56 = vshrl.u32 %v55, 7
  %v57 = vsub.s32 0, %v56
  %v58 = vrot.slane %v17, %v57
  %v60 = vadd.f32 %v52, %v58
  %v61 = vadd.f32 %v53, %v58
  %v62 = vpack.c.bf16 %v61, %v60
  %v64 = vunpack.c.l.b16 %v62
  %v65 = vunpack.c.h.b16 %v62
  %v66 = vpack.c.b16 %v64, %v64
  %v67 = vpack.c.b16 %v65, %v65
  %vm70 = vcmask 257024
  %71 = vst.msk [vmem:[%s3] sm:$0xf] %vm70, %v66
  %72 = vst.msk [vmem:[%s3 + $0x4] sm:$0xf] %vm70, %v67
  // Predicated region
  $region14: #{xlmr_ic_ner_forward.13} parent=0 // pred_check
    _
  $region15: #{xlmr_ic_ner_forward.13} parent=0 // pred_check_branch
    %74 = sbr.rel (0) target = $region17
  $region16: #{xlmr_ic_ner_forward.13} parent=0 // pred_region
    _
  $region17: #{xlmr_ic_ner_forward.13} parent=0 // pred_fallthru
    _
  // Predicated region
  $region18: #{xlmr_ic_ner_forward.13} parent=0 // pred_check
    _
  $region19: #{xlmr_ic_ner_forward.13} parent=0 // pred_check_branch
    %76 = sbr.rel (0) target = $region21
  $region20: #{xlmr_ic_ner_forward.13} parent=0 // pred_region
    _
  $region21: #{xlmr_ic_ner_forward.13} parent=0 // pred_fallthru
    _

// kernel: xlmr_ic_ner_forward.14
$region0: #{xlmr_ic_ner_forward.14}
  #allocation0 [shape = 'u32[]', space=smem, size = 0x4, offset = 0x4, fixed_abs, tag = 'smem constant byte address 0x4 - core index']
  #allocation1 [shape = 'u32[144,128]{1,0:T(1,128)}', space=vmem, size = 0x12000, scoped, tag = 'internal scratch']
  %s0 = inlined_call_operand.vmem [shape: bf16[16,32], index: 0, kind: input, shape index: {}]
  %s1 = inlined_call_operand.vmem [shape: bf16[32,96], index: 1, kind: input, shape index: {}]
  %s2 = inlined_call_operand.vmem [shape: f32[1,96], index: 2, kind: input, shape index: {}]
  %s3 = inlined_call_operand.vmem [shape: bf16[16,96], index: 3, kind: output, shape index: {}]
  %s4 = sld [smem:[#allocation0]]
  $region22: #{xlmr_ic_ner_forward.14} parent=0
    _
  %s6 = ssub.s32 1, %s4
  %s7 = scalar_select 0, %s6, %s4
  // Predicated region
  $region2: #{xlmr_ic_ner_forward.14} parent=0 // pred_check
    _
  $region3: #{xlmr_ic_ner_forward.14} parent=0 // pred_check_branch
    %9 = sbr.rel (0) target = $region5
  $region4: #{xlmr_ic_ner_forward.14} parent=0 // pred_region
    _
  $region5: #{xlmr_ic_ner_forward.14} parent=0 // pred_fallthru
    _
  // Predicated region
  $region6: #{xlmr_ic_ner_forward.14} parent=0 // pred_check
    _
  $region7: #{xlmr_ic_ner_forward.14} parent=0 // pred_check_branch
    %11 = sbr.rel (0) target = $region9
  $region8: #{xlmr_ic_ner_forward.14} parent=0 // pred_region
    _
  $region9: #{xlmr_ic_ner_forward.14} parent=0 // pred_fallthru
    _
  // Predicated region
  $region10: #{xlmr_ic_ner_forward.14} parent=0 // pred_check
    _
  $region11: #{xlmr_ic_ner_forward.14} parent=0 // pred_check_branch
    %13 = sbr.rel (0) target = $region13
  $region12: #{xlmr_ic_ner_forward.14} parent=0 // pred_region
    _
  $region13: #{xlmr_ic_ner_forward.14} parent=0 // pred_fallthru
    _
  %v15 = vld [vmem:[%s0] sm:$0xf]
  %v16 = vld [vmem:[%s0 + $0x4] sm:$0xf]
  %v17 = vld [vmem:[%s1] sm:$0xf]
  %v18 = vld [vmem:[%s1 + $0x4] sm:$0xf]
  %v19 = vld [vmem:[%s1 + $0x8] sm:$0xf]
  %v20 = vld [vmem:[%s1 + $0xc] sm:$0xf]
  %v21 = vld [vmem:[%s2] sm:$0x1]
  %v23 = vlaneseq
  %v24 = vshrl.u32 %v23, 7
  %v25 = vsub.s32 0, %v24
  %v26 = vrot.slane %v21, %v25
  %v30 = vunpack.c.l.b16 %v15
  %v31 = vunpack.c.l.b16 %v16
  %v32 = vpack.c.b16 %v31, %v30
  %v37 = vunpack.c.l.b16 %v17
  %v38 = vunpack.c.l.b16 %v18
  %v39 = vunpack.c.l.b16 %v19
  %v40 = vunpack.c.l.b16 %v20
  %v41 = vpack.c.b16 %v38, %v37
  %v42 = vpack.c.b16 %v40, %v39
  %vm45 = vcmask 261120
  %v47 = vsel %vm45, %v32, 0
  %49 = vmatprep.subr.bf16.mxu0 0
  %50 = vmatpush1.bf16.msra.mxu0 0
  %51 = vmatprep.subr.bf16.mxu0 0
  %52 = vmatpush1.bf16.msra.mxu0 0
  %53 = vmatprep.subr.bf16.mxu0 0
  %54 = vmatpush1.bf16.msra.mxu0 0
  %55 = vmatprep.subr.bf16.mxu0 0
  %56 = vmatpush1.bf16.msra.mxu0 0
  %57 = vmatprep.subr.bf16.mxu0 0
  %58 = vmatpush1.bf16.msra.mxu0 0
  %59 = vmatprep.subr.bf16.mxu0 0
  %60 = vmatpush1.bf16.msra.mxu0 0
  %61 = vmatprep.subr.bf16.mxu0 0
  %62 = vmatpush1.bf16.msra.mxu0 %v42
  %63 = vmatprep.subr.bf16.mxu0 0
  %64 = vmatpush1.bf16.msra.mxu0 %v41
  %65 = vmatprep.subr.bf16.mxu0 0
  %66 = vmatpush2.bf16.msra.mxu0 0
  %67 = vmatprep.subr.bf16.mxu0 0
  %68 = vmatpush2.bf16.msra.mxu0 0
  %69 = vmatprep.subr.bf16.mxu0 0
  %70 = vmatpush2.bf16.msra.mxu0 0
  %71 = vmatprep.subr.bf16.mxu0 0
  %72 = vmatpush2.bf16.msra.mxu0 0
  %73 = vmatprep.subr.bf16.mxu0 0
  %74 = vmatpush2.bf16.msra.mxu0 0
  %75 = vmatprep.subr.bf16.mxu0 0
  %76 = vmatpush2.bf16.msra.mxu0 0
  %77 = vmatprep.subr.bf16.mxu0 0
  %78 = vmatpush2.bf16.msra.mxu0 0
  %79 = vmatprep.subr.bf16.mxu0 0
  %80 = vmatpush2.bf16.msra.mxu0 0
  %81 = vmatprep.mubr.bf16.mxu0 0
  %82 = vmatmul.mubr.bf16.gmra.mxu0 %v47
  %v83 = vpop.f32.mrf.mxu0
  %v84 = vadd.f32 %v26, %v83
  %v85 = vpop.f32.mrf.mxu0
  %v86 = vpop.f32.mrf.mxu0
  %v87 = vadd.f32 %v26, %v86
  %v88 = vpop.f32.mrf.mxu0
  %89 = vdwg.mxu0
  %v90 = vpack.c.bf16 %v87, %v84
  %v92 = vunpack.c.l.b16 %v90
  %v93 = vunpack.c.h.b16 %v90
  %v94 = vpack.c.b16 %v92, %v92
  %v95 = vpack.c.b16 %v93, %v93
  %vm98 = vcmask 781312
  %99 = vst.msk [vmem:[%s3] sm:$0xf] %vm98, %v94
  %100 = vst.msk [vmem:[%s3 + $0x4] sm:$0xf] %vm98, %v95
  // Predicated region
  $region14: #{xlmr_ic_ner_forward.14} parent=0 // pred_check
    _
  $region15: #{xlmr_ic_ner_forward.14} parent=0 // pred_check_branch
    %102 = sbr.rel (0) target = $region17
  $region16: #{xlmr_ic_ner_forward.14} parent=0 // pred_region
    _
  $region17: #{xlmr_ic_ner_forward.14} parent=0 // pred_fallthru
    _
  // Predicated region
  $region18: #{xlmr_ic_ner_forward.14} parent=0 // pred_check
    _
  $region19: #{xlmr_ic_ner_forward.14} parent=0 // pred_check_branch
    %104 = sbr.rel (0) target = $region21
  $region20: #{xlmr_ic_ner_forward.14} parent=0 // pred_region
    _
  $region21: #{xlmr_ic_ner_forward.14} parent=0 // pred_fallthru
    _

// kernel: xlmr_ic_ner_forward.15
$region0: #{xlmr_ic_ner_forward.15}
  #allocation0 [shape = 'u32[]', space=smem, size = 0x4, offset = 0x4, fixed_abs, tag = 'smem constant byte address 0x4 - core index']
  #allocation1 [shape = 'u32[144,128]{1,0:T(1,128)}', space=vmem, size = 0x12000, scoped, tag = 'internal scratch']
  %s0 = inlined_call_operand.vmem [shape: bf16[2,8,96], index: 0, kind: input, shape index: {}]
  %s1 = inlined_call_operand.vmem [shape: bf16[2,8,32], index: 1, kind: output, shape index: {}]
  %s2 = sld [smem:[#allocation0]]
  $region37: #{xlmr_ic_ner_forward.15} parent=0
    _
  %s4 = ssub.s32 1, %s2
  %s5 = scalar_select 0, %s4, %s2
  loop: start=0, step=1, limit=4
  $region2: #{xlmr_ic_ner_forward.15} parent=0 // loop_pre_header
    _
  $region3: #{xlmr_ic_ner_forward.15} parent=0 // loop_header
    %s7 = sphi 0, %s11
    %p8 = scmp.ge.s32.totalorder %s7, 4
    %s17 = sphi 0, %s19
    %s20 = sphi 0, %s17
    %s21 = sphi 0, %s20
    %s37 = sphi 0, %s21
    %s43 = sphi 0, %s45
    %s46 = sphi 0, %s43
    %s47 = sphi 0, %s46
    %s63 = sphi 0, %s47
  $region4: #{xlmr_ic_ner_forward.15} parent=0 // loop_header_branch
    %10 = sbr.rel (%p8) target = $region8
  $region5: #{xlmr_ic_ner_forward.15} parent=0 // loop_body
    %s12 = ssub.s32 %s7, 1
    %s13 = ssub.s32 %s7, 2
    %s14 = sadd.s32 %s7, 1
    %s15 = ssub.s32 %s7, %s14
    %p16 = scmp.eq.s32.totalorder %s15, 0
    %s18 = sadd.s32 %s17, 1
    %s19 = scalar_select %p16, %s17, %s18
    %p22 = pneg %p16
    %p23 = scmp.eq.s32.totalorder %s7, 1
    %p24 = por %p22, %p23
    %p25 = scmp.ne.s32.totalorder %s17, %s20
    %p26 = scmp.eq.s32.totalorder %s7, 0
    %p27 = por %p25, %p26
    %p28 = scmp.ne.s32.totalorder %s17, %s20
    %p29 = scmp.eq.s32.totalorder %s12, 1
    %p30 = por %p28, %p29
    %p31 = scmp.ne.s32.totalorder %s20, %s21
    %p32 = scmp.eq.s32.totalorder %s12, 0
    %p33 = por %p31, %p32
    %p34 = scmp.ne.s32.totalorder %s20, %s21
    %p35 = scmp.eq.s32.totalorder %s13, 1
    %p36 = por %p34, %p35
    %p38 = scmp.ne.s32.totalorder %s21, %s37
    %p39 = scmp.eq.s32.totalorder %s13, 0
    %p40 = por %p38, %p39
    %s41 = ssub.s32 %s7, %s14
    %p42 = scmp.eq.s32.totalorder %s41, 0
    %s44 = sadd.s32 %s43, 1
    %s45 = scalar_select %p42, %s43, %s44
    %p48 = pneg %p42
    %p49 = scmp.eq.s32.totalorder %s7, 1
    %p50 = por %p48, %p49
    %p51 = scmp.ne.s32.totalorder %s43, %s46
    %p52 = scmp.eq.s32.totalorder %s7, 0
    %p53 = por %p51, %p52
    %p54 = scmp.ne.s32.totalorder %s43, %s46
    %p55 = scmp.eq.s32.totalorder %s12, 1
    %p56 = por %p54, %p55
    %p57 = scmp.ne.s32.totalorder %s46, %s47
    %p58 = scmp.eq.s32.totalorder %s12, 0
    %p59 = por %p57, %p58
    %p60 = scmp.ne.s32.totalorder %s46, %s47
    %p61 = scmp.eq.s32.totalorder %s13, 1
    %p62 = por %p60, %p61
    %p64 = scmp.ne.s32.totalorder %s47, %s63
    %p65 = scmp.eq.s32.totalorder %s13, 0
    %p66 = por %p64, %p65
    %p67 = scmp.le.s32.totalorder 1, %s7
    %p68 = scmp.lt.s32.totalorder %s7, 3
    %p69 = pnand %p67, %p68
    %p70 = pneg %p69
    // Predicated region
    $region9: #{xlmr_ic_ner_forward.15} parent=5 // pred_check
      _
    $region10: #{xlmr_ic_ner_forward.15} parent=5 // pred_check_branch
      %72 = sbr.rel (%p69) target = $region12
    $region11: #{xlmr_ic_ner_forward.15} parent=5 // pred_region
      %s73 = ssub.s32 %s7, 1
    $region12: #{xlmr_ic_ner_forward.15} parent=5 // pred_fallthru
      _
    %p74 = scmp.lt.s32.totalorder %s7, 2
    // Predicated region
    $region13: #{xlmr_ic_ner_forward.15} parent=5 // pred_check
      %p75 = pneg %p74
    $region14: #{xlmr_ic_ner_forward.15} parent=5 // pred_check_branch
      %77 = sbr.rel (%p75) target = $region16
    $region15: #{xlmr_ic_ner_forward.15} parent=5 // pred_region
      // Predicated region
      $region17: #{xlmr_ic_ner_forward.15} parent=15 // pred_check
        %p78 = pneg %p27
      $region18: #{xlmr_ic_ner_forward.15} parent=15 // pred_check_branch
        %80 = sbr.rel (%p78) target = $region20
      $region19: #{xlmr_ic_ner_forward.15} parent=15 // pred_region
        %p81 = scmp.lt.s32.totalorder %s7, 1
        %s82 = scalar_select %p81, %s7, 1
        %s83 = smul.addr %s82, 4
        %s84 = scalar_lea.vmem %s0, %s83
      $region20: #{xlmr_ic_ner_forward.15} parent=15 // pred_fallthru
        _
    $region16: #{xlmr_ic_ner_forward.15} parent=5 // pred_fallthru
      _
    %p85 = scmp.le.s32.totalorder 1, %s7
    %p86 = scmp.lt.s32.totalorder %s7, 3
    %p87 = pnand %p85, %p86
    %p88 = pneg %p87
    // Predicated region
    $region21: #{xlmr_ic_ner_forward.15} parent=5 // pred_check
      _
    $region22: #{xlmr_ic_ner_forward.15} parent=5 // pred_check_branch
      %90 = sbr.rel (%p87) target = $region24
    $region23: #{xlmr_ic_ner_forward.15} parent=5 // pred_region
      %s91 = ssub.s32 %s7, 1
      %p92 = scmp.lt.s32.totalorder %s12, 1
      %s93 = scalar_select %p92, %s12, 1
      %s94 = smul.addr %s93, 4
      %s95 = scalar_lea.vmem %s0, %s94
      %p96 = pneg %p33
      %p97 = pneg %p30
      %p98 = pneg %p59
      %p99 = pneg %p56
      %p100 = scmp.lt.s32.totalorder %s12, 1
      %s101 = scalar_select %p100, %s12, 1
      %s102 = smul.addr %s101, 4
      %s103 = scalar_lea.vmem %s1, %s102
      %p104 = scmp.lt.s32.totalorder %s12, 1
      %s105 = scalar_select %p104, %s12, 1
      %s106 = smul.addr %s105, 4
      %s107 = scalar_lea.vmem %s0, %s106
      %p108 = scmp.lt.s32.totalorder %s12, 1
      %s109 = scalar_select %p108, %s12, 1
      %s110 = smul.addr %s109, 4
      %s111 = scalar_lea.vmem %s1, %s110
      %v113 = vld [vmem:[%s107] sm:$0xf]
      %v114 = vunpack.c.l.bf16 %v113
      %v115 = vmul.f32 %v114, 0.35355338
      %v116 = vpack.c.bf16 %v115, %v115
      %v118 = vunpack.c.l.b16 %v113
      %v119 = vpack.c.b16 %v118, %v118
      %120 = vrot.lane.b32.xlu0 %v119, 96
      %v121 = vpop.permute.xlu0 %120
      %vm122 = vcmask 64512
      %v124 = vsel %vm122, %v116, 0
      %v127 = vsel %vm122, %v121, 0
      %129 = vmatprep.subr.bf16.mxu0 0
      %130 = vmatpush1.bf16.xpose.msra.mxu0 0
      %131 = vmatprep.subr.bf16.mxu0 0
      %132 = vmatpush1.bf16.xpose.msra.mxu0 0
      %133 = vmatprep.subr.bf16.mxu0 0
      %134 = vmatpush1.bf16.xpose.msra.mxu0 0
      %135 = vmatprep.subr.bf16.mxu0 0
      %136 = vmatpush1.bf16.xpose.msra.mxu0 0
      %137 = vmatprep.subr.bf16.mxu0 0
      %138 = vmatpush1.bf16.xpose.msra.mxu0 0
      %139 = vmatprep.subr.bf16.mxu0 0
      %140 = vmatpush1.bf16.xpose.msra.mxu0 0
      %141 = vmatprep.subr.bf16.mxu0 0
      %142 = vmatpush1.bf16.xpose.msra.mxu0 0
      %143 = vmatprep.subr.bf16.mxu0 0
      %144 = vmatpush1.bf16.xpose.msra.mxu0 %v127
      %145 = vmatprep.subr.bf16.mxu0 0
      %146 = vmatpush2.bf16.xpose.msra.mxu0 0
      %147 = vmatprep.subr.bf16.mxu0 0
      %148 = vmatpush2.bf16.xpose.msra.mxu0 0
      %149 = vmatprep.subr.bf16.mxu0 0
      %150 = vmatpush2.bf16.xpose.msra.mxu0 0
      %151 = vmatprep.subr.bf16.mxu0 0
      %152 = vmatpush2.bf16.xpose.msra.mxu0 0
      %153 = vmatprep.subr.bf16.mxu0 0
      %154 = vmatpush2.bf16.xpose.msra.mxu0 0
      %155 = vmatprep.subr.bf16.mxu0 0
      %156 = vmatpush2.bf16.xpose.msra.mxu0 0
      %157 = vmatprep.subr.bf16.mxu0 0
      %158 = vmatpush2.bf16.xpose.msra.mxu0 0
      %159 = vmatprep.subr.bf16.mxu0 0
      %160 = vmatpush2.bf16.xpose.msra.mxu0 0
      %161 = vmatprep.mubr.bf16.mxu0 0
      %162 = vmatmul.mubr.bf16.gmra.mxu0 %v124
      %v163 = vpop.f32.mrf.mxu0
      %v164 = vadd.f32 0.0, %v163
      %v165 = vpop.f32.mrf.mxu0
      %v166 = vpop.f32.mrf.mxu0
      %v167 = vpop.f32.mrf.mxu0
      %168 = vdwg.mxu0
      %v169 = vsel %vm122, %v164, -inf
      %170 = vmax.xlane.f32.xlu0 %v169
      %v171 = vpop.xlane.xlu0 %170
      %v172 = vsub.f32 %v164, %v171
      %v173 = vmul.f32 %v172, 1.442695
      %v174 = vpow.pop %v173
      %v175 = vsel %vm122, %v174, 0.0
      %176 = vadd.xlane.f32.xlu0 %v175
      %v177 = vpop.xlane.xlu0 %176
      %v178 = vrcp.pop %v177
      %v179 = vmul.f32 %v174, %v178
      %v180 = vpack.c.bf16 %v179, %v179
      %181 = vrot.lane.b32.xlu0 %v119, 64
      %v182 = vpop.permute.xlu0 %181
      %v184 = vsel %vm122, %v180, 0
      %vm186 = vcmask 1043456
      %v188 = vsel %vm186, %v182, 0
      %190 = vmatprep.subr.bf16.mxu0 0
      %191 = vmatpush1.bf16.msra.mxu0 0
      %192 = vmatprep.subr.bf16.mxu0 0
      %193 = vmatpush1.bf16.msra.mxu0 0
      %194 = vmatprep.subr.bf16.mxu0 0
      %195 = vmatpush1.bf16.msra.mxu0 0
      %196 = vmatprep.subr.bf16.mxu0 0
      %197 = vmatpush1.bf16.msra.mxu0 0
      %198 = vmatprep.subr.bf16.mxu0 0
      %199 = vmatpush1.bf16.msra.mxu0 0
      %200 = vmatprep.subr.bf16.mxu0 0
      %201 = vmatpush1.bf16.msra.mxu0 0
      %202 = vmatprep.subr.bf16.mxu0 0
      %203 = vmatpush1.bf16.msra.mxu0 0
      %204 = vmatprep.subr.bf16.mxu0 0
      %205 = vmatpush1.bf16.msra.mxu0 %v188
      %206 = vmatprep.subr.bf16.mxu0 0
      %207 = vmatpush2.bf16.msra.mxu0 0
      %208 = vmatprep.subr.bf16.mxu0 0
      %209 = vmatpush2.bf16.msra.mxu0 0
      %210 = vmatprep.subr.bf16.mxu0 0
      %211 = vmatpush2.bf16.msra.mxu0 0
      %212 = vmatprep.subr.bf16.mxu0 0
      %213 = vmatpush2.bf16.msra.mxu0 0
      %214 = vmatprep.subr.bf16.mxu0 0
      %215 = vmatpush2.bf16.msra.mxu0 0
      %216 = vmatprep.subr.bf16.mxu0 0
      %217 = vmatpush2.bf16.msra.mxu0 0
      %218 = vmatprep.subr.bf16.mxu0 0
      %219 = vmatpush2.bf16.msra.mxu0 0
      %220 = vmatprep.subr.bf16.mxu0 0
      %221 = vmatpush2.bf16.msra.mxu0 0
      %222 = vmatprep.mubr.bf16.mxu0 0
      %223 = vmatmul.mubr.bf16.gmra.mxu0 %v184
      %v224 = vpop.f32.mrf.mxu0
      %v225 = vadd.f32 0.0, %v224
      %v226 = vpop.f32.mrf.mxu0
      %v227 = vpop.f32.mrf.mxu0
      %v228 = vpop.f32.mrf.mxu0
      %229 = vdwg.mxu0
      %231 = vrot.lane.b32.xlu0 %v116, 120
      %v232 = vpop.permute.xlu0 %231
      %233 = vrot.lane.b32.xlu0 %v119, 88
      %v234 = vpop.permute.xlu0 %233
      %v236 = vsel %vm122, %v232, 0
      %v239 = vsel %vm122, %v234, 0
      %241 = vmatprep.subr.bf16.mxu0 0
      %242 = vmatpush1.bf16.xpose.msra.mxu0 0
      %243 = vmatprep.subr.bf16.mxu0 0
      %244 = vmatpush1.bf16.xpose.msra.mxu0 0
      %245 = vmatprep.subr.bf16.mxu0 0
      %246 = vmatpush1.bf16.xpose.msra.mxu0 0
      %247 = vmatprep.subr.bf16.mxu0 0
      %248 = vmatpush1.bf16.xpose.msra.mxu0 0
      %249 = vmatprep.subr.bf16.mxu0 0
      %250 = vmatpush1.bf16.xpose.msra.mxu0 0
      %251 = vmatprep.subr.bf16.mxu0 0
      %252 = vmatpush1.bf16.xpose.msra.mxu0 0
      %253 = vmatprep.subr.bf16.mxu0 0
      %254 = vmatpush1.bf16.xpose.msra.mxu0 0
      %255 = vmatprep.subr.bf16.mxu0 0
      %256 = vmatpush1.bf16.xpose.msra.mxu0 %v239
      %257 = vmatprep.subr.bf16.mxu0 0
      %258 = vmatpush2.bf16.xpose.msra.mxu0 0
      %259 = vmatprep.subr.bf16.mxu0 0
      %260 = vmatpush2.bf16.xpose.msra.mxu0 0
      %261 = vmatprep.subr.bf16.mxu0 0
      %262 = vmatpush2.bf16.xpose.msra.mxu0 0
      %263 = vmatprep.subr.bf16.mxu0 0
      %264 = vmatpush2.bf16.xpose.msra.mxu0 0
      %265 = vmatprep.subr.bf16.mxu0 0
      %266 = vmatpush2.bf16.xpose.msra.mxu0 0
      %267 = vmatprep.subr.bf16.mxu0 0
      %268 = vmatpush2.bf16.xpose.msra.mxu0 0
      %269 = vmatprep.subr.bf16.mxu0 0
      %270 = vmatpush2.bf16.xpose.msra.mxu0 0
      %271 = vmatprep.subr.bf16.mxu0 0
      %272 = vmatpush2.bf16.xpose.msra.mxu0 0
      %273 = vmatprep.mubr.bf16.mxu0 0
      %274 = vmatmul.mubr.bf16.gmra.mxu0 %v236
      %v275 = vpop.f32.mrf.mxu0
      %v276 = vadd.f32 0.0, %v275
      %v277 = vpop.f32.mrf.mxu0
      %v278 = vpop.f32.mrf.mxu0
      %v279 = vpop.f32.mrf.mxu0
      %280 = vdwg.mxu0
      %v281 = vsel %vm122, %v276, -inf
      %282 = vmax.xlane.f32.xlu0 %v281
      %v283 = vpop.xlane.xlu0 %282
      %v284 = vsub.f32 %v276, %v283
      %v285 = vmul.f32 %v284, 1.442695
      %v286 = vpow.pop %v285
      %v287 = vsel %vm122, %v286, 0.0
      %288 = vadd.xlane.f32.xlu0 %v287
      %v289 = vpop.xlane.xlu0 %288
      %v290 = vrcp.pop %v289
      %v291 = vmul.f32 %v286, %v290
      %v292 = vpack.c.bf16 %v291, %v291
      %293 = vrot.lane.b32.xlu0 %v119, 56
      %v294 = vpop.permute.xlu0 %293
      %v296 = vsel %vm122, %v292, 0
      %v299 = vsel %vm186, %v294, 0
      %301 = vmatprep.subr.bf16.mxu0 0
      %302 = vmatpush1.bf16.msra.mxu0 0
      %303 = vmatprep.subr.bf16.mxu0 0
      %304 = vmatpush1.bf16.msra.mxu0 0
      %305 = vmatprep.subr.bf16.mxu0 0
      %306 = vmatpush1.bf16.msra.mxu0 0
      %307 = vmatprep.subr.bf16.mxu0 0
      %308 = vmatpush1.bf16.msra.mxu0 0
      %309 = vmatprep.subr.bf16.mxu0 0
      %310 = vmatpush1.bf16.msra.mxu0 0
      %311 = vmatprep.subr.bf16.mxu0 0
      %312 = vmatpush1.bf16.msra.mxu0 0
      %313 = vmatprep.subr.bf16.mxu0 0
      %314 = vmatpush1.bf16.msra.mxu0 0
      %315 = vmatprep.subr.bf16.mxu0 0
      %316 = vmatpush1.bf16.msra.mxu0 %v299
      %317 = vmatprep.subr.bf16.mxu0 0
      %318 = vmatpush2.bf16.msra.mxu0 0
      %319 = vmatprep.subr.bf16.mxu0 0
      %320 = vmatpush2.bf16.msra.mxu0 0
      %321 = vmatprep.subr.bf16.mxu0 0
      %322 = vmatpush2.bf16.msra.mxu0 0
      %323 = vmatprep.subr.bf16.mxu0 0
      %324 = vmatpush2.bf16.msra.mxu0 0
      %325 = vmatprep.subr.bf16.mxu0 0
      %326 = vmatpush2.bf16.msra.mxu0 0
      %327 = vmatprep.subr.bf16.mxu0 0
      %328 = vmatpush2.bf16.msra.mxu0 0
      %329 = vmatprep.subr.bf16.mxu0 0
      %330 = vmatpush2.bf16.msra.mxu0 0
      %331 = vmatprep.subr.bf16.mxu0 0
      %332 = vmatpush2.bf16.msra.mxu0 0
      %333 = vmatprep.mubr.bf16.mxu0 0
      %334 = vmatmul.mubr.bf16.gmra.mxu0 %v296
      %v335 = vpop.f32.mrf.mxu0
      %v336 = vadd.f32 0.0, %v335
      %v337 = vpop.f32.mrf.mxu0
      %v338 = vpop.f32.mrf.mxu0
      %v339 = vpop.f32.mrf.mxu0
      %340 = vdwg.mxu0
      %341 = vrot.lane.b32.xlu0 %v116, 112
      %v342 = vpop.permute.xlu0 %341
      %343 = vrot.lane.b32.xlu0 %v119, 80
      %v344 = vpop.permute.xlu0 %343
      %v346 = vsel %vm122, %v342, 0
      %v349 = vsel %vm122, %v344, 0
      %351 = vmatprep.subr.bf16.mxu0 0
      %352 = vmatpush1.bf16.xpose.msra.mxu0 0
      %353 = vmatprep.subr.bf16.mxu0 0
      %354 = vmatpush1.bf16.xpose.msra.mxu0 0
      %355 = vmatprep.subr.bf16.mxu0 0
      %356 = vmatpush1.bf16.xpose.msra.mxu0 0
      %357 = vmatprep.subr.bf16.mxu0 0
      %358 = vmatpush1.bf16.xpose.msra.mxu0 0
      %359 = vmatprep.subr.bf16.mxu0 0
      %360 = vmatpush1.bf16.xpose.msra.mxu0 0
      %361 = vmatprep.subr.bf16.mxu0 0
      %362 = vmatpush1.bf16.xpose.msra.mxu0 0
      %363 = vmatprep.subr.bf16.mxu0 0
      %364 = vmatpush1.bf16.xpose.msra.mxu0 0
      %365 = vmatprep.subr.bf16.mxu0 0
      %366 = vmatpush1.bf16.xpose.msra.mxu0 %v349
      %367 = vmatprep.subr.bf16.mxu0 0
      %368 = vmatpush2.bf16.xpose.msra.mxu0 0
      %369 = vmatprep.subr.bf16.mxu0 0
      %370 = vmatpush2.bf16.xpose.msra.mxu0 0
      %371 = vmatprep.subr.bf16.mxu0 0
      %372 = vmatpush2.bf16.xpose.msra.mxu0 0
      %373 = vmatprep.subr.bf16.mxu0 0
      %374 = vmatpush2.bf16.xpose.msra.mxu0 0
      %375 = vmatprep.subr.bf16.mxu0 0
      %376 = vmatpush2.bf16.xpose.msra.mxu0 0
      %377 = vmatprep.subr.bf16.mxu0 0
      %378 = vmatpush2.bf16.xpose.msra.mxu0 0
      %379 = vmatprep.subr.bf16.mxu0 0
      %380 = vmatpush2.bf16.xpose.msra.mxu0 0
      %381 = vmatprep.subr.bf16.mxu0 0
      %382 = vmatpush2.bf16.xpose.msra.mxu0 0
      %383 = vmatprep.mubr.bf16.mxu0 0
      %384 = vmatmul.mubr.bf16.gmra.mxu0 %v346
      %v385 = vpop.f32.mrf.mxu0
      %v386 = vadd.f32 0.0, %v385
      %v387 = vpop.f32.mrf.mxu0
      %v388 = vpop.f32.mrf.mxu0
      %v389 = vpop.f32.mrf.mxu0
      %390 = vdwg.mxu0
      %v391 = vsel %vm122, %v386, -inf
      %392 = vmax.xlane.f32.xlu0 %v391
      %v393 = vpop.xlane.xlu0 %392
      %v394 = vsub.f32 %v386, %v393
      %v395 = vmul.f32 %v394, 1.442695
      %v396 = vpow.pop %v395
      %v397 = vsel %vm122, %v396, 0.0
      %398 = vadd.xlane.f32.xlu0 %v397
      %v399 = vpop.xlane.xlu0 %398
      %v400 = vrcp.pop %v399
      %v401 = vmul.f32 %v396, %v400
      %v402 = vpack.c.bf16 %v401, %v401
      %403 = vrot.lane.b32.xlu0 %v119, 48
      %v404 = vpop.permute.xlu0 %403
      %v406 = vsel %vm122, %v402, 0
      %v409 = vsel %vm186, %v404, 0
      %411 = vmatprep.subr.bf16.mxu0 0
      %412 = vmatpush1.bf16.msra.mxu0 0
      %413 = vmatprep.subr.bf16.mxu0 0
      %414 = vmatpush1.bf16.msra.mxu0 0
      %415 = vmatprep.subr.bf16.mxu0 0
      %416 = vmatpush1.bf16.msra.mxu0 0
      %417 = vmatprep.subr.bf16.mxu0 0
      %418 = vmatpush1.bf16.msra.mxu0 0
      %419 = vmatprep.subr.bf16.mxu0 0
      %420 = vmatpush1.bf16.msra.mxu0 0
      %421 = vmatprep.subr.bf16.mxu0 0
      %422 = vmatpush1.bf16.msra.mxu0 0
      %423 = vmatprep.subr.bf16.mxu0 0
      %424 = vmatpush1.bf16.msra.mxu0 0
      %425 = vmatprep.subr.bf16.mxu0 0
      %426 = vmatpush1.bf16.msra.mxu0 %v409
      %427 = vmatprep.subr.bf16.mxu0 0
      %428 = vmatpush2.bf16.msra.mxu0 0
      %429 = vmatprep.subr.bf16.mxu0 0
      %430 = vmatpush2.bf16.msra.mxu0 0
      %431 = vmatprep.subr.bf16.mxu0 0
      %432 = vmatpush2.bf16.msra.mxu0 0
      %433 = vmatprep.subr.bf16.mxu0 0
      %434 = vmatpush2.bf16.msra.mxu0 0
      %435 = vmatprep.subr.bf16.mxu0 0
      %436 = vmatpush2.bf16.msra.mxu0 0
      %437 = vmatprep.subr.bf16.mxu0 0
      %438 = vmatpush2.bf16.msra.mxu0 0
      %439 = vmatprep.subr.bf16.mxu0 0
      %440 = vmatpush2.bf16.msra.mxu0 0
      %441 = vmatprep.subr.bf16.mxu0 0
      %442 = vmatpush2.bf16.msra.mxu0 0
      %443 = vmatprep.mubr.bf16.mxu0 0
      %444 = vmatmul.mubr.bf16.gmra.mxu0 %v406
      %v445 = vpop.f32.mrf.mxu0
      %v446 = vadd.f32 0.0, %v445
      %v447 = vpop.f32.mrf.mxu0
      %v448 = vpop.f32.mrf.mxu0
      %v449 = vpop.f32.mrf.mxu0
      %450 = vdwg.mxu0
      %451 = vrot.lane.b32.xlu0 %v116, 104
      %v452 = vpop.permute.xlu0 %451
      %453 = vrot.lane.b32.xlu0 %v119, 72
      %v454 = vpop.permute.xlu0 %453
      %v456 = vsel %vm122, %v452, 0
      %v459 = vsel %vm122, %v454, 0
      %461 = vmatprep.subr.bf16.mxu0 0
      %462 = vmatpush1.bf16.xpose.msra.mxu0 0
      %463 = vmatprep.subr.bf16.mxu0 0
      %464 = vmatpush1.bf16.xpose.msra.mxu0 0
      %465 = vmatprep.subr.bf16.mxu0 0
      %466 = vmatpush1.bf16.xpose.msra.mxu0 0
      %467 = vmatprep.subr.bf16.mxu0 0
      %468 = vmatpush1.bf16.xpose.msra.mxu0 0
      %469 = vmatprep.subr.bf16.mxu0 0
      %470 = vmatpush1.bf16.xpose.msra.mxu0 0
      %471 = vmatprep.subr.bf16.mxu0 0
      %472 = vmatpush1.bf16.xpose.msra.mxu0 0
      %473 = vmatprep.subr.bf16.mxu0 0
      %474 = vmatpush1.bf16.xpose.msra.mxu0 0
      %475 = vmatprep.subr.bf16.mxu0 0
      %476 = vmatpush1.bf16.xpose.msra.mxu0 %v459
      %477 = vmatprep.subr.bf16.mxu0 0
      %478 = vmatpush2.bf16.xpose.msra.mxu0 0
      %479 = vmatprep.subr.bf16.mxu0 0
      %480 = vmatpush2.bf16.xpose.msra.mxu0 0
      %481 = vmatprep.subr.bf16.mxu0 0
      %482 = vmatpush2.bf16.xpose.msra.mxu0 0
      %483 = vmatprep.subr.bf16.mxu0 0
      %484 = vmatpush2.bf16.xpose.msra.mxu0 0
      %485 = vmatprep.subr.bf16.mxu0 0
      %486 = vmatpush2.bf16.xpose.msra.mxu0 0
      %487 = vmatprep.subr.bf16.mxu0 0
      %488 = vmatpush2.bf16.xpose.msra.mxu0 0
      %489 = vmatprep.subr.bf16.mxu0 0
      %490 = vmatpush2.bf16.xpose.msra.mxu0 0
      %491 = vmatprep.subr.bf16.mxu0 0
      %492 = vmatpush2.bf16.xpose.msra.mxu0 0
      %493 = vmatprep.mubr.bf16.mxu0 0
      %494 = vmatmul.mubr.bf16.gmra.mxu0 %v456
      %v495 = vpop.f32.mrf.mxu0
      %v496 = vadd.f32 0.0, %v495
      %v497 = vpop.f32.mrf.mxu0
      %v498 = vpop.f32.mrf.mxu0
      %v499 = vpop.f32.mrf.mxu0
      %500 = vdwg.mxu0
      %v501 = vsel %vm122, %v496, -inf
      %502 = vmax.xlane.f32.xlu0 %v501
      %v503 = vpop.xlane.xlu0 %502
      %v504 = vsub.f32 %v496, %v503
      %v505 = vmul.f32 %v504, 1.442695
      %v506 = vpow.pop %v505
      %v507 = vsel %vm122, %v506, 0.0
      %508 = vadd.xlane.f32.xlu0 %v507
      %v509 = vpop.xlane.xlu0 %508
      %v510 = vrcp.pop %v509
      %v511 = vmul.f32 %v506, %v510
      %v512 = vpack.c.bf16 %v511, %v511
      %513 = vrot.lane.b32.xlu0 %v119, 40
      %v514 = vpop.permute.xlu0 %513
      %v516 = vsel %vm122, %v512, 0
      %v519 = vsel %vm186, %v514, 0
      %521 = vmatprep.subr.bf16.mxu0 0
      %522 = vmatpush1.bf16.msra.mxu0 0
      %523 = vmatprep.subr.bf16.mxu0 0
      %524 = vmatpush1.bf16.msra.mxu0 0
      %525 = vmatprep.subr.bf16.mxu0 0
      %526 = vmatpush1.bf16.msra.mxu0 0
      %527 = vmatprep.subr.bf16.mxu0 0
      %528 = vmatpush1.bf16.msra.mxu0 0
      %529 = vmatprep.subr.bf16.mxu0 0
      %530 = vmatpush1.bf16.msra.mxu0 0
      %531 = vmatprep.subr.bf16.mxu0 0
      %532 = vmatpush1.bf16.msra.mxu0 0
      %533 = vmatprep.subr.bf16.mxu0 0
      %534 = vmatpush1.bf16.msra.mxu0 0
      %535 = vmatprep.subr.bf16.mxu0 0
      %536 = vmatpush1.bf16.msra.mxu0 %v519
      %537 = vmatprep.subr.bf16.mxu0 0
      %538 = vmatpush2.bf16.msra.mxu0 0
      %539 = vmatprep.subr.bf16.mxu0 0
      %540 = vmatpush2.bf16.msra.mxu0 0
      %541 = vmatprep.subr.bf16.mxu0 0
      %542 = vmatpush2.bf16.msra.mxu0 0
      %543 = vmatprep.subr.bf16.mxu0 0
      %544 = vmatpush2.bf16.msra.mxu0 0
      %545 = vmatprep.subr.bf16.mxu0 0
      %546 = vmatpush2.bf16.msra.mxu0 0
      %547 = vmatprep.subr.bf16.mxu0 0
      %548 = vmatpush2.bf16.msra.mxu0 0
      %549 = vmatprep.subr.bf16.mxu0 0
      %550 = vmatpush2.bf16.msra.mxu0 0
      %551 = vmatprep.subr.bf16.mxu0 0
      %552 = vmatpush2.bf16.msra.mxu0 0
      %553 = vmatprep.mubr.bf16.mxu0 0
      %554 = vmatmul.mubr.bf16.gmra.mxu0 %v516
      %v555 = vpop.f32.mrf.mxu0
      %v556 = vadd.f32 0.0, %v555
      %v557 = vpop.f32.mrf.mxu0
      %v558 = vpop.f32.mrf.mxu0
      %v559 = vpop.f32.mrf.mxu0
      %560 = vdwg.mxu0
      %562 = vrot.lane.b32.xlu0 %v336, 8
      %v563 = vpop.permute.xlu0 %562
      %566 = vrot.lane.b32.xlu0 %v446, 16
      %v567 = vpop.permute.xlu0 %566
      %570 = vrot.lane.b32.xlu0 %v556, 24
      %v571 = vpop.permute.xlu0 %570
      %v573 = vsel %vm122, %v225, %v563
      %vm574 = vcmask 130048
      %v575 = vsel %vm574, %v573, %v567
      %vm576 = vcmask 195584
      %v577 = vsel %vm576, %v575, %v571
      %v578 = vpack.c.bf16 %v577, %v577
      %vm579 = vcmask 257024
      %580 = vst.msk [vmem:[%s111] sm:$0xf] %vm579, %v578
      %p581 = scmp.lt.s32.totalorder %s12, 1
      %s582 = scalar_select %p581, %s12, 1
      %s583 = smul.addr %s582, 4
      %s584 = scalar_lea.vmem %s1, %s583
      // Predicated region
      $region25: #{xlmr_ic_ner_forward.15} parent=23 // pred_check
        %p585 = pneg %p56
      $region26: #{xlmr_ic_ner_forward.15} parent=23 // pred_check_branch
        %587 = sbr.rel (%p585) target = $region28
      $region27: #{xlmr_ic_ner_forward.15} parent=23 // pred_region
        _
      $region28: #{xlmr_ic_ner_forward.15} parent=23 // pred_fallthru
        _
    $region24: #{xlmr_ic_ner_forward.15} parent=5 // pred_fallthru
      _
    %p588 = scmp.le.s32.totalorder 2, %s7
    // Predicated region
    $region29: #{xlmr_ic_ner_forward.15} parent=5 // pred_check
      %p589 = pneg %p588
    $region30: #{xlmr_ic_ner_forward.15} parent=5 // pred_check_branch
      %591 = sbr.rel (%p589) target = $region32
    $region31: #{xlmr_ic_ner_forward.15} parent=5 // pred_region
      %s592 = ssub.s32 %s7, 2
      // Predicated region
      $region33: #{xlmr_ic_ner_forward.15} parent=31 // pred_check
        %p593 = pneg %p62
      $region34: #{xlmr_ic_ner_forward.15} parent=31 // pred_check_branch
        %595 = sbr.rel (%p593) target = $region36
      $region35: #{xlmr_ic_ner_forward.15} parent=31 // pred_region
        %p596 = scmp.lt.s32.totalorder %s13, 1
        %s597 = scalar_select %p596, %s13, 1
        %s598 = smul.addr %s597, 4
        %s599 = scalar_lea.vmem %s1, %s598
      $region36: #{xlmr_ic_ner_forward.15} parent=31 // pred_fallthru
        _
    $region32: #{xlmr_ic_ner_forward.15} parent=5 // pred_fallthru
      _
  $region6: #{xlmr_ic_ner_forward.15} parent=0 // loop_footer
    %s11 = sadd.s32 1, %s7
  $region7: #{xlmr_ic_ner_forward.15} parent=0 // loop_footer_branch
    %6 = sbr.rel target = $region3
  $region8: #{xlmr_ic_ner_forward.15} parent=0 // loop_exit
    _

// kernel: xlmr_ic_ner_forward.17
$region0: #{xlmr_ic_ner_forward.17}
  #allocation0 [shape = 'u32[]', space=smem, size = 0x4, offset = 0x4, fixed_abs, tag = 'smem constant byte address 0x4 - core index']
  #allocation1 [shape = 'u32[144,128]{1,0:T(1,128)}', space=vmem, size = 0x12000, scoped, tag = 'internal scratch']
  %s0 = inlined_call_operand.vmem [shape: bf16[16,32], index: 0, kind: input, shape index: {}]
  %s1 = inlined_call_operand.vmem [shape: bf16[32,64], index: 1, kind: input, shape index: {}]
  %s2 = inlined_call_operand.vmem [shape: f32[1,64], index: 2, kind: input, shape index: {}]
  %s3 = inlined_call_operand.vmem [shape: bf16[16,64], index: 3, kind: output, shape index: {}]
  %s4 = sld [smem:[#allocation0]]
  $region22: #{xlmr_ic_ner_forward.17} parent=0
    _
  %s6 = ssub.s32 1, %s4
  %s7 = scalar_select 0, %s6, %s4
  // Predicated region
  $region2: #{xlmr_ic_ner_forward.17} parent=0 // pred_check
    _
  $region3: #{xlmr_ic_ner_forward.17} parent=0 // pred_check_branch
    %9 = sbr.rel (0) target = $region5
  $region4: #{xlmr_ic_ner_forward.17} parent=0 // pred_region
    _
  $region5: #{xlmr_ic_ner_forward.17} parent=0 // pred_fallthru
    _
  // Predicated region
  $region6: #{xlmr_ic_ner_forward.17} parent=0 // pred_check
    _
  $region7: #{xlmr_ic_ner_forward.17} parent=0 // pred_check_branch
    %11 = sbr.rel (0) target = $region9
  $region8: #{xlmr_ic_ner_forward.17} parent=0 // pred_region
    _
  $region9: #{xlmr_ic_ner_forward.17} parent=0 // pred_fallthru
    _
  // Predicated region
  $region10: #{xlmr_ic_ner_forward.17} parent=0 // pred_check
    _
  $region11: #{xlmr_ic_ner_forward.17} parent=0 // pred_check_branch
    %13 = sbr.rel (0) target = $region13
  $region12: #{xlmr_ic_ner_forward.17} parent=0 // pred_region
    _
  $region13: #{xlmr_ic_ner_forward.17} parent=0 // pred_fallthru
    _
  %v15 = vld [vmem:[%s0] sm:$0xf]
  %v16 = vld [vmem:[%s0 + $0x4] sm:$0xf]
  %v17 = vld [vmem:[%s1] sm:$0xf]
  %v18 = vld [vmem:[%s1 + $0x4] sm:$0xf]
  %v19 = vld [vmem:[%s1 + $0x8] sm:$0xf]
  %v20 = vld [vmem:[%s1 + $0xc] sm:$0xf]
  %v21 = vld [vmem:[%s2] sm:$0x1]
  %v23 = vlaneseq
  %v24 = vshrl.u32 %v23, 7
  %v25 = vsub.s32 0, %v24
  %v26 = vrot.slane %v21, %v25
  %v30 = vunpack.c.l.b16 %v15
  %v31 = vunpack.c.l.b16 %v16
  %v32 = vpack.c.b16 %v31, %v30
  %v37 = vunpack.c.l.b16 %v17
  %v38 = vunpack.c.l.b16 %v18
  %v39 = vunpack.c.l.b16 %v19
  %v40 = vunpack.c.l.b16 %v20
  %v41 = vpack.c.b16 %v38, %v37
  %v42 = vpack.c.b16 %v40, %v39
  %vm45 = vcmask 261120
  %v47 = vsel %vm45, %v32, 0
  %49 = vmatprep.subr.bf16.mxu0 0
  %50 = vmatpush1.bf16.msra.mxu0 0
  %51 = vmatprep.subr.bf16.mxu0 0
  %52 = vmatpush1.bf16.msra.mxu0 0
  %53 = vmatprep.subr.bf16.mxu0 0
  %54 = vmatpush1.bf16.msra.mxu0 0
  %55 = vmatprep.subr.bf16.mxu0 0
  %56 = vmatpush1.bf16.msra.mxu0 0
  %57 = vmatprep.subr.bf16.mxu0 0
  %58 = vmatpush1.bf16.msra.mxu0 0
  %59 = vmatprep.subr.bf16.mxu0 0
  %60 = vmatpush1.bf16.msra.mxu0 0
  %61 = vmatprep.subr.bf16.mxu0 0
  %62 = vmatpush1.bf16.msra.mxu0 %v42
  %63 = vmatprep.subr.bf16.mxu0 0
  %64 = vmatpush1.bf16.msra.mxu0 %v41
  %65 = vmatprep.subr.bf16.mxu0 0
  %66 = vmatpush2.bf16.msra.mxu0 0
  %67 = vmatprep.subr.bf16.mxu0 0
  %68 = vmatpush2.bf16.msra.mxu0 0
  %69 = vmatprep.subr.bf16.mxu0 0
  %70 = vmatpush2.bf16.msra.mxu0 0
  %71 = vmatprep.subr.bf16.mxu0 0
  %72 = vmatpush2.bf16.msra.mxu0 0
  %73 = vmatprep.subr.bf16.mxu0 0
  %74 = vmatpush2.bf16.msra.mxu0 0
  %75 = vmatprep.subr.bf16.mxu0 0
  %76 = vmatpush2.bf16.msra.mxu0 0
  %77 = vmatprep.subr.bf16.mxu0 0
  %78 = vmatpush2.bf16.msra.mxu0 0
  %79 = vmatprep.subr.bf16.mxu0 0
  %80 = vmatpush2.bf16.msra.mxu0 0
  %81 = vmatprep.mubr.bf16.mxu0 0
  %82 = vmatmul.mubr.bf16.gmra.mxu0 %v47
  %v83 = vpop.f32.mrf.mxu0
  %v84 = vadd.f32 %v26, %v83
  %v85 = vpop.f32.mrf.mxu0
  %v86 = vpop.f32.mrf.mxu0
  %v87 = vadd.f32 %v26, %v86
  %v88 = vpop.f32.mrf.mxu0
  %89 = vdwg.mxu0
  %v90 = vmul.f32 %v84, %v84
  %v91 = vmul.f32 %v87, %v87
  %v92 = vmul.f32 %v84, %v90
  %v93 = vmul.f32 %v87, %v91
  %v94 = vmul.f32 %v92, 0.044715
  %v95 = vmul.f32 %v93, 0.044715
  %v96 = vadd.f32 %v84, %v94
  %v97 = vadd.f32 %v87, %v95
  %v98 = vmul.f32 %v96, 0.7978846
  %v99 = vmul.f32 %v97, 0.7978846
  %v100 = vtanh.pop %v98
  %v101 = vtanh.pop %v99
  %v102 = vadd.f32 %v100, 1.0
  %v103 = vadd.f32 %v101, 1.0
  %v104 = vmul.f32 %v102, 0.5
  %v105 = vmul.f32 %v103, 0.5
  %v106 = vmul.f32 %v84, %v104
  %v107 = vmul.f32 %v87, %v105
  %v108 = vpack.c.bf16 %v107, %v106
  %v110 = vunpack.c.l.b16 %v108
  %v111 = vunpack.c.h.b16 %v108
  %v112 = vpack.c.b16 %v110, %v110
  %v113 = vpack.c.b16 %v111, %v111
  %vm116 = vcmask 519168
  %117 = vst.msk [vmem:[%s3] sm:$0xf] %vm116, %v112
  %118 = vst.msk [vmem:[%s3 + $0x4] sm:$0xf] %vm116, %v113
  // Predicated region
  $region14: #{xlmr_ic_ner_forward.17} parent=0 // pred_check
    _
  $region15: #{xlmr_ic_ner_forward.17} parent=0 // pred_check_branch
    %120 = sbr.rel (0) target = $region17
  $region16: #{xlmr_ic_ner_forward.17} parent=0 // pred_region
    _
  $region17: #{xlmr_ic_ner_forward.17} parent=0 // pred_fallthru
    _
  // Predicated region
  $region18: #{xlmr_ic_ner_forward.17} parent=0 // pred_check
    _
  $region19: #{xlmr_ic_ner_forward.17} parent=0 // pred_check_branch
    %122 = sbr.rel (0) target = $region21
  $region20: #{xlmr_ic_ner_forward.17} parent=0 // pred_region
    _
  $region21: #{xlmr_ic_ner_forward.17} parent=0 // pred_fallthru
    _

// kernel: xlmr_ic_ner_forward.18
$region0: #{xlmr_ic_ner_forward.18}
  #allocation0 [shape = 'u32[]', space=smem, size = 0x4, offset = 0x4, fixed_abs, tag = 'smem constant byte address 0x4 - core index']
  #allocation1 [shape = 'u32[144,128]{1,0:T(1,128)}', space=vmem, size = 0x12000, scoped, tag = 'internal scratch']
  %s0 = inlined_call_operand.vmem [shape: bf16[16,64], index: 0, kind: input, shape index: {}]
  %s1 = inlined_call_operand.vmem [shape: bf16[64,32], index: 1, kind: input, shape index: {}]
  %s2 = inlined_call_operand.vmem [shape: f32[1,32], index: 2, kind: input, shape index: {}]
  %s3 = inlined_call_operand.vmem [shape: bf16[16,32], index: 3, kind: input, shape index: {}]
  %s4 = inlined_call_operand.vmem [shape: f32[1,32], index: 4, kind: input, shape index: {}]
  %s5 = inlined_call_operand.vmem [shape: f32[1,32], index: 5, kind: input, shape index: {}]
  %s6 = inlined_call_operand.vmem [shape: bf16[16,32], index: 6, kind: output, shape index: {}]
  %s7 = sld [smem:[#allocation0]]
  $region34: #{xlmr_ic_ner_forward.18} parent=0
    _
  %s9 = ssub.s32 1, %s7
  %s10 = scalar_select 0, %s9, %s7
  // Predicated region
  $region2: #{xlmr_ic_ner_forward.18} parent=0 // pred_check
    _
  $region3: #{xlmr_ic_ner_forward.18} parent=0 // pred_check_branch
    %12 = sbr.rel (0) target = $region5
  $region4: #{xlmr_ic_ner_forward.18} parent=0 // pred_region
    _
  $region5: #{xlmr_ic_ner_forward.18} parent=0 // pred_fallthru
    _
  // Predicated region
  $region6: #{xlmr_ic_ner_forward.18} parent=0 // pred_check
    _
  $region7: #{xlmr_ic_ner_forward.18} parent=0 // pred_check_branch
    %14 = sbr.rel (0) target = $region9
  $region8: #{xlmr_ic_ner_forward.18} parent=0 // pred_region
    _
  $region9: #{xlmr_ic_ner_forward.18} parent=0 // pred_fallthru
    _
  // Predicated region
  $region10: #{xlmr_ic_ner_forward.18} parent=0 // pred_check
    _
  $region11: #{xlmr_ic_ner_forward.18} parent=0 // pred_check_branch
    %16 = sbr.rel (0) target = $region13
  $region12: #{xlmr_ic_ner_forward.18} parent=0 // pred_region
    _
  $region13: #{xlmr_ic_ner_forward.18} parent=0 // pred_fallthru
    _
  // Predicated region
  $region14: #{xlmr_ic_ner_forward.18} parent=0 // pred_check
    _
  $region15: #{xlmr_ic_ner_forward.18} parent=0 // pred_check_branch
    %18 = sbr.rel (0) target = $region17
  $region16: #{xlmr_ic_ner_forward.18} parent=0 // pred_region
    _
  $region17: #{xlmr_ic_ner_forward.18} parent=0 // pred_fallthru
    _
  // Predicated region
  $region18: #{xlmr_ic_ner_forward.18} parent=0 // pred_check
    _
  $region19: #{xlmr_ic_ner_forward.18} parent=0 // pred_check_branch
    %20 = sbr.rel (0) target = $region21
  $region20: #{xlmr_ic_ner_forward.18} parent=0 // pred_region
    _
  $region21: #{xlmr_ic_ner_forward.18} parent=0 // pred_fallthru
    _
  // Predicated region
  $region22: #{xlmr_ic_ner_forward.18} parent=0 // pred_check
    _
  $region23: #{xlmr_ic_ner_forward.18} parent=0 // pred_check_branch
    %22 = sbr.rel (0) target = $region25
  $region24: #{xlmr_ic_ner_forward.18} parent=0 // pred_region
    _
  $region25: #{xlmr_ic_ner_forward.18} parent=0 // pred_fallthru
    _
  %v24 = vld [vmem:[%s0] sm:$0xf]
  %v25 = vld [vmem:[%s0 + $0x4] sm:$0xf]
  %v26 = vld [vmem:[%s1] sm:$0xf]
  %v27 = vld [vmem:[%s1 + $0x4] sm:$0xf]
  %v28 = vld [vmem:[%s1 + $0x8] sm:$0xf]
  %v29 = vld [vmem:[%s1 + $0xc] sm:$0xf]
  %v30 = vld [vmem:[%s1 + $0x10] sm:$0xf]
  %v31 = vld [vmem:[%s1 + $0x14] sm:$0xf]
  %v32 = vld [vmem:[%s1 + $0x18] sm:$0xf]
  %v33 = vld [vmem:[%s1 + $0x1c] sm:$0xf]
  %v34 = vld [vmem:[%s2] sm:$0x1]
  %v36 = vlaneseq
  %v37 = vshrl.u32 %v36, 7
  %v38 = vsub.s32 0, %v37
  %v39 = vrot.slane %v34, %v38
  %v43 = vunpack.c.l.b16 %v24
  %v44 = vunpack.c.l.b16 %v25
  %v45 = vpack.c.b16 %v44, %v43
  %v54 = vunpack.c.l.b16 %v26
  %v55 = vunpack.c.l.b16 %v27
  %v56 = vunpack.c.l.b16 %v28
  %v57 = vunpack.c.l.b16 %v29
  %v58 = vunpack.c.l.b16 %v30
  %v59 = vunpack.c.l.b16 %v31
  %v60 = vunpack.c.l.b16 %v32
  %v61 = vunpack.c.l.b16 %v33
  %v62 = vpack.c.b16 %v55, %v54
  %v63 = vpack.c.b16 %v57, %v56
  %v64 = vpack.c.b16 %v59, %v58
  %v65 = vpack.c.b16 %v61, %v60
  %vm70 = vcmask 523264
  %v72 = vsel %vm70, %v45, 0
  %74 = vmatprep.subr.bf16.mxu0 0
  %75 = vmatpush1.bf16.msra.mxu0 0
  %76 = vmatprep.subr.bf16.mxu0 0
  %77 = vmatpush1.bf16.msra.mxu0 0
  %78 = vmatprep.subr.bf16.mxu0 0
  %79 = vmatpush1.bf16.msra.mxu0 0
  %80 = vmatprep.subr.bf16.mxu0 0
  %81 = vmatpush1.bf16.msra.mxu0 0
  %82 = vmatprep.subr.bf16.mxu0 0
  %83 = vmatpush1.bf16.msra.mxu0 %v65
  %84 = vmatprep.subr.bf16.mxu0 0
  %85 = vmatpush1.bf16.msra.mxu0 %v64
  %86 = vmatprep.subr.bf16.mxu0 0
  %87 = vmatpush1.bf16.msra.mxu0 %v63
  %88 = vmatprep.subr.bf16.mxu0 0
  %89 = vmatpush1.bf16.msra.mxu0 %v62
  %90 = vmatprep.subr.bf16.mxu0 0
  %91 = vmatpush2.bf16.msra.mxu0 0
  %92 = vmatprep.subr.bf16.mxu0 0
  %93 = vmatpush2.bf16.msra.mxu0 0
  %94 = vmatprep.subr.bf16.mxu0 0
  %95 = vmatpush2.bf16.msra.mxu0 0
  %96 = vmatprep.subr.bf16.mxu0 0
  %97 = vmatpush2.bf16.msra.mxu0 0
  %98 = vmatprep.subr.bf16.mxu0 0
  %99 = vmatpush2.bf16.msra.mxu0 0
  %100 = vmatprep.subr.bf16.mxu0 0
  %101 = vmatpush2.bf16.msra.mxu0 0
  %102 = vmatprep.subr.bf16.mxu0 0
  %103 = vmatpush2.bf16.msra.mxu0 0
  %104 = vmatprep.subr.bf16.mxu0 0
  %105 = vmatpush2.bf16.msra.mxu0 0
  %106 = vmatprep.mubr.bf16.mxu0 0
  %107 = vmatmul.mubr.bf16.gmra.mxu0 %v72
  %v108 = vpop.f32.mrf.mxu0
  %v109 = vadd.f32 %v39, %v108
  %v110 = vpop.f32.mrf.mxu0
  %v111 = vpop.f32.mrf.mxu0
  %v112 = vadd.f32 %v39, %v111
  %v113 = vpop.f32.mrf.mxu0
  %114 = vdwg.mxu0
  %v115 = vld [vmem:[%s3] sm:$0xf]
  %v116 = vld [vmem:[%s3 + $0x4] sm:$0xf]
  %v117 = vunpack.c.l.bf16 %v115
  %v118 = vunpack.c.l.bf16 %v116
  %v119 = vadd.f32 %v109, %v117
  %v120 = vadd.f32 %v112, %v118
  %v121 = vld [vmem:[%s4] sm:$0x1]
  %v122 = vld [vmem:[%s5] sm:$0x1]
  %vm123 = vcmask 261120
  %v124 = vsel %vm123, %v119, 0.0
  %125 = vadd.xlane.f32.xlu0 %v124
  %v126 = vpop.xlane.xlu0 %125
  %v127 = vsel %vm123, %v120, 0.0
  %128 = vadd.xlane.f32.xlu0 %v127
  %v129 = vpop.xlane.xlu0 %128
  %v130 = vrcp.pop 32.0
  %v131 = vmul.f32 %v126, %v130
  %v132 = vmul.f32 %v129, %v130
  %v133 = vsub.f32 %v119, %v131
  %v134 = vsub.f32 %v120, %v132
  %v135 = vmul.f32 %v133, %v133
  %v136 = vmul.f32 %v134, %v134
  %v137 = vsel %vm123, %v135, 0.0
  %138 = vadd.xlane.f32.xlu0 %v137
  %v139 = vpop.xlane.xlu0 %138
  %v140 = vsel %vm123, %v136, 0.0
  %141 = vadd.xlane.f32.xlu0 %v140
  %v142 = vpop.xlane.xlu0 %141
  %v143 = vmul.f32 %v139, %v130
  %v144 = vmul.f32 %v142, %v130
  %v145 = vadd.f32 %v143, 1e-05
  %v146 = vadd.f32 %v144, 1e-05
  %v147 = vrsqrt.pop %v145
  %v148 = vrsqrt.pop %v146
  %v149 = vmul.f32 %v133, %v147
  %v150 = vmul.f32 %v134, %v148
  %v152 = vlaneseq
  %v153 = vshrl.u32 %v152, 7
  %v154 = vsub.s32 0, %v153
  %v155 = vrot.slane %v121, %v154
  %v157 = vmul.f32 %v149, %v155
  %v158 = vmul.f32 %v150, %v155
  %v160 = vlaneseq
  %v161 = vshrl.u32 %v160, 7
  %v162 = vsub.s32 0, %v161
  %v163 = vrot.slane %v122, %v162
  %v165 = vadd.f32 %v157, %v163
  %v166 = vadd.f32 %v158, %v163
  %v167 = vpack.c.bf16 %v166, %v165
  %v169 = vunpack.c.l.b16 %v167
  %v170 = vunpack.c.h.b16 %v167
  %v171 = vpack.c.b16 %v169, %v169
  %v172 = vpack.c.b16 %v170, %v170
  %vm175 = vcmask 257024
  %176 = vst.msk [vmem:[%s6] sm:$0xf] %vm175, %v171
  %177 = vst.msk [vmem:[%s6 + $0x4] sm:$0xf] %vm175, %v172
  // Predicated region
  $region26: #{xlmr_ic_ner_forward.18} parent=0 // pred_check
    _
  $region27: #{xlmr_ic_ner_forward.18} parent=0 // pred_check_branch
    %179 = sbr.rel (0) target = $region29
  $region28: #{xlmr_ic_ner_forward.18} parent=0 // pred_region
    _
  $region29: #{xlmr_ic_ner_forward.18} parent=0 // pred_fallthru
    _
  // Predicated region
  $region30: #{xlmr_ic_ner_forward.18} parent=0 // pred_check
    _
  $region31: #{xlmr_ic_ner_forward.18} parent=0 // pred_check_branch
    %181 = sbr.rel (0) target = $region33
  $region32: #{xlmr_ic_ner_forward.18} parent=0 // pred_region
    _
  $region33: #{xlmr_ic_ner_forward.18} parent=0 // pred_fallthru
    _

// kernel: xlmr_ic_ner_forward.25
$region0: #{xlmr_ic_ner_forward.25}
  #allocation0 [shape = 'u32[]', space=smem, size = 0x4, offset = 0x4, fixed_abs, tag = 'smem constant byte address 0x4 - core index']
  #allocation1 [shape = 'u32[144,128]{1,0:T(1,128)}', space=vmem, size = 0x12000, scoped, tag = 'internal scratch']
  %s0 = inlined_call_operand.vmem [shape: bf16[14,32], index: 0, kind: input, shape index: {}]
  %s1 = inlined_call_operand.vmem [shape: bf16[32,64], index: 1, kind: input, shape index: {}]
  %s2 = inlined_call_operand.vmem [shape: bf16[64,64], index: 2, kind: input, shape index: {}]
  %s3 = inlined_call_operand.vmem [shape: bf16[64,64], index: 3, kind: input, shape index: {}]
  %s4 = inlined_call_operand.vmem [shape: bf16[64,64], index: 4, kind: input, shape index: {}]
  %s5 = inlined_call_operand.vmem [shape: bf16[64,64], index: 5, kind: input, shape index: {}]
  %s6 = inlined_call_operand.vmem [shape: bf16[64,5], index: 6, kind: input, shape index: {}]
  %s7 = inlined_call_operand.vmem [shape: f32[1,64], index: 7, kind: input, shape index: {}]
  %s8 = inlined_call_operand.vmem [shape: f32[1,64], index: 8, kind: input, shape index: {}]
  %s9 = inlined_call_operand.vmem [shape: f32[1,64], index: 9, kind: input, shape index: {}]
  %s10 = inlined_call_operand.vmem [shape: f32[1,64], index: 10, kind: input, shape index: {}]
  %s11 = inlined_call_operand.vmem [shape: f32[1,64], index: 11, kind: input, shape index: {}]
  %s12 = inlined_call_operand.vmem [shape: f32[1,5], index: 12, kind: input, shape index: {}]
  %s13 = inlined_call_operand.vmem [shape: f32[14,5], index: 13, kind: output, shape index: {}]
  %s14 = sld [smem:[#allocation0]]
  $region62: #{xlmr_ic_ner_forward.25} parent=0
    _
  %s16 = ssub.s32 1, %s14
  %s17 = scalar_select 0, %s16, %s14
  // Predicated region
  $region2: #{xlmr_ic_ner_forward.25} parent=0 // pred_check
    _
  $region3: #{xlmr_ic_ner_forward.25} parent=0 // pred_check_branch
    %19 = sbr.rel (0) target = $region5
  $region4: #{xlmr_ic_ner_forward.25} parent=0 // pred_region
    _
  $region5: #{xlmr_ic_ner_forward.25} parent=0 // pred_fallthru
    _
  // Predicated region
  $region6: #{xlmr_ic_ner_forward.25} parent=0 // pred_check
    _
  $region7: #{xlmr_ic_ner_forward.25} parent=0 // pred_check_branch
    %21 = sbr.rel (0) target = $region9
  $region8: #{xlmr_ic_ner_forward.25} parent=0 // pred_region
    _
  $region9: #{xlmr_ic_ner_forward.25} parent=0 // pred_fallthru
    _
  // Predicated region
  $region10: #{xlmr_ic_ner_forward.25} parent=0 // pred_check
    _
  $region11: #{xlmr_ic_ner_forward.25} parent=0 // pred_check_branch
    %23 = sbr.rel (0) target = $region13
  $region12: #{xlmr_ic_ner_forward.25} parent=0 // pred_region
    _
  $region13: #{xlmr_ic_ner_forward.25} parent=0 // pred_fallthru
    _
  // Predicated region
  $region14: #{xlmr_ic_ner_forward.25} parent=0 // pred_check
    _
  $region15: #{xlmr_ic_ner_forward.25} parent=0 // pred_check_branch
    %25 = sbr.rel (0) target = $region17
  $region16: #{xlmr_ic_ner_forward.25} parent=0 // pred_region
    _
  $region17: #{xlmr_ic_ner_forward.25} parent=0 // pred_fallthru
    _
  // Predicated region
  $region18: #{xlmr_ic_ner_forward.25} parent=0 // pred_check
    _
  $region19: #{xlmr_ic_ner_forward.25} parent=0 // pred_check_branch
    %27 = sbr.rel (0) target = $region21
  $region20: #{xlmr_ic_ner_forward.25} parent=0 // pred_region
    _
  $region21: #{xlmr_ic_ner_forward.25} parent=0 // pred_fallthru
    _
  // Predicated region
  $region22: #{xlmr_ic_ner_forward.25} parent=0 // pred_check
    _
  $region23: #{xlmr_ic_ner_forward.25} parent=0 // pred_check_branch
    %29 = sbr.rel (0) target = $region25
  $region24: #{xlmr_ic_ner_forward.25} parent=0 // pred_region
    _
  $region25: #{xlmr_ic_ner_forward.25} parent=0 // pred_fallthru
    _
  // Predicated region
  $region26: #{xlmr_ic_ner_forward.25} parent=0 // pred_check
    _
  $region27: #{xlmr_ic_ner_forward.25} parent=0 // pred_check_branch
    %31 = sbr.rel (0) target = $region29
  $region28: #{xlmr_ic_ner_forward.25} parent=0 // pred_region
    _
  $region29: #{xlmr_ic_ner_forward.25} parent=0 // pred_fallthru
    _
  // Predicated region
  $region30: #{xlmr_ic_ner_forward.25} parent=0 // pred_check
    _
  $region31: #{xlmr_ic_ner_forward.25} parent=0 // pred_check_branch
    %33 = sbr.rel (0) target = $region33
  $region32: #{xlmr_ic_ner_forward.25} parent=0 // pred_region
    _
  $region33: #{xlmr_ic_ner_forward.25} parent=0 // pred_fallthru
    _
  // Predicated region
  $region34: #{xlmr_ic_ner_forward.25} parent=0 // pred_check
    _
  $region35: #{xlmr_ic_ner_forward.25} parent=0 // pred_check_branch
    %35 = sbr.rel (0) target = $region37
  $region36: #{xlmr_ic_ner_forward.25} parent=0 // pred_region
    _
  $region37: #{xlmr_ic_ner_forward.25} parent=0 // pred_fallthru
    _
  // Predicated region
  $region38: #{xlmr_ic_ner_forward.25} parent=0 // pred_check
    _
  $region39: #{xlmr_ic_ner_forward.25} parent=0 // pred_check_branch
    %37 = sbr.rel (0) target = $region41
  $region40: #{xlmr_ic_ner_forward.25} parent=0 // pred_region
    _
  $region41: #{xlmr_ic_ner_forward.25} parent=0 // pred_fallthru
    _
  // Predicated region
  $region42: #{xlmr_ic_ner_forward.25} parent=0 // pred_check
    _
  $region43: #{xlmr_ic_ner_forward.25} parent=0 // pred_check_branch
    %39 = sbr.rel (0) target = $region45
  $region44: #{xlmr_ic_ner_forward.25} parent=0 // pred_region
    _
  $region45: #{xlmr_ic_ner_forward.25} parent=0 // pred_fallthru
    _
  // Predicated region
  $region46: #{xlmr_ic_ner_forward.25} parent=0 // pred_check
    _
  $region47: #{xlmr_ic_ner_forward.25} parent=0 // pred_check_branch
    %41 = sbr.rel (0) target = $region49
  $region48: #{xlmr_ic_ner_forward.25} parent=0 // pred_region
    _
  $region49: #{xlmr_ic_ner_forward.25} parent=0 // pred_fallthru
    _
  // Predicated region
  $region50: #{xlmr_ic_ner_forward.25} parent=0 // pred_check
    _
  $region51: #{xlmr_ic_ner_forward.25} parent=0 // pred_check_branch
    %43 = sbr.rel (0) target = $region53
  $region52: #{xlmr_ic_ner_forward.25} parent=0 // pred_region
    _
  $region53: #{xlmr_ic_ner_forward.25} parent=0 // pred_fallthru
    _
  %v45 = vld [vmem:[%s0] sm:$0xf]
  %v46 = vld [vmem:[%s0 + $0x4] sm:$0x7]
  %v47 = vld [vmem:[%s1] sm:$0xf]
  %v48 = vld [vmem:[%s1 + $0x4] sm:$0xf]
  %v49 = vld [vmem:[%s1 + $0x8] sm:$0xf]
  %v50 = vld [vmem:[%s1 + $0xc] sm:$0xf]
  %v51 = vld [vmem:[%s7] sm:$0x1]
  %v53 = vlaneseq
  %v54 = vshrl.u32 %v53, 7
  %v55 = vsub.s32 0, %v54
  %v56 = vrot.slane %v51, %v55
  %v60 = vunpack.c.l.b16 %v45
  %v61 = vunpack.c.l.b16 %v46
  %v62 = vpack.c.b16 %v61, %v60
  %v67 = vunpack.c.l.b16 %v47
  %v68 = vunpack.c.l.b16 %v48
  %v69 = vunpack.c.l.b16 %v49
  %v70 = vunpack.c.l.b16 %v50
  %v71 = vpack.c.b16 %v68, %v67
  %v72 = vpack.c.b16 %v70, %v69
  %vm75 = vcmask 261120
  %v77 = vsel %vm75, %v62, 0
  %79 = vmatprep.subr.bf16.mxu0 0
  %80 = vmatpush1.bf16.msra.mxu0 0
  %81 = vmatprep.subr.bf16.mxu0 0
  %82 = vmatpush1.bf16.msra.mxu0 0
  %83 = vmatprep.subr.bf16.mxu0 0
  %84 = vmatpush1.bf16.msra.mxu0 0
  %85 = vmatprep.subr.bf16.mxu0 0
  %86 = vmatpush1.bf16.msra.mxu0 0
  %87 = vmatprep.subr.bf16.mxu0 0
  %88 = vmatpush1.bf16.msra.mxu0 0
  %89 = vmatprep.subr.bf16.mxu0 0
  %90 = vmatpush1.bf16.msra.mxu0 0
  %91 = vmatprep.subr.bf16.mxu0 0
  %92 = vmatpush1.bf16.msra.mxu0 %v72
  %93 = vmatprep.subr.bf16.mxu0 0
  %94 = vmatpush1.bf16.msra.mxu0 %v71
  %95 = vmatprep.subr.bf16.mxu0 0
  %96 = vmatpush2.bf16.msra.mxu0 0
  %97 = vmatprep.subr.bf16.mxu0 0
  %98 = vmatpush2.bf16.msra.mxu0 0
  %99 = vmatprep.subr.bf16.mxu0 0
  %100 = vmatpush2.bf16.msra.mxu0 0
  %101 = vmatprep.subr.bf16.mxu0 0
  %102 = vmatpush2.bf16.msra.mxu0 0
  %103 = vmatprep.subr.bf16.mxu0 0
  %104 = vmatpush2.bf16.msra.mxu0 0
  %105 = vmatprep.subr.bf16.mxu0 0
  %106 = vmatpush2.bf16.msra.mxu0 0
  %107 = vmatprep.subr.bf16.mxu0 0
  %108 = vmatpush2.bf16.msra.mxu0 0
  %109 = vmatprep.subr.bf16.mxu0 0
  %110 = vmatpush2.bf16.msra.mxu0 0
  %111 = vmatprep.mubr.bf16.mxu0 0
  %112 = vmatmul.mubr.bf16.gmra.mxu0 %v77
  %v113 = vpop.f32.mrf.mxu0
  %v114 = vadd.f32 %v56, %v113
  %v115 = vpop.f32.mrf.mxu0
  %v116 = vpop.f32.mrf.mxu0
  %v117 = vadd.f32 %v56, %v116
  %v118 = vpop.f32.mrf.mxu0
  %119 = vdwg.mxu0
  %v120 = vmax.f32 %v114, 0.0
  %v121 = vmax.f32 %v117, 0.0
  %v122 = vpack.c.bf16 %v121, %v120
  %v123 = vld [vmem:[%s2] sm:$0xf]
  %v124 = vld [vmem:[%s2 + $0x4] sm:$0xf]
  %v125 = vld [vmem:[%s2 + $0x8] sm:$0xf]
  %v126 = vld [vmem:[%s2 + $0xc] sm:$0xf]
  %v127 = vld [vmem:[%s2 + $0x10] sm:$0xf]
  %v128 = vld [vmem:[%s2 + $0x14] sm:$0xf]
  %v129 = vld [vmem:[%s2 + $0x18] sm:$0xf]
  %v130 = vld [vmem:[%s2 + $0x1c] sm:$0xf]
  %v131 = vld [vmem:[%s8] sm:$0x1]
  %v133 = vlaneseq
  %v134 = vshrl.u32 %v133, 7
  %v135 = vsub.s32 0, %v134
  %v136 = vrot.slane %v131, %v135
  %v146 = vunpack.c.l.b16 %v123
  %v147 = vunpack.c.l.b16 %v124
  %v148 = vunpack.c.l.b16 %v125
  %v149 = vunpack.c.l.b16 %v126
  %v150 = vunpack.c.l.b16 %v127
  %v151 = vunpack.c.l.b16 %v128
  %v152 = vunpack.c.l.b16 %v129
  %v153 = vunpack.c.l.b16 %v130
  %v154 = vpack.c.b16 %v147, %v146
  %v155 = vpack.c.b16 %v149, %v148
  %v156 = vpack.c.b16 %v151, %v150
  %v157 = vpack.c.b16 %v153, %v152
  %vm162 = vcmask 523264
  %v164 = vsel %vm162, %v122, 0
  %166 = vmatprep.subr.bf16.mxu0 0
  %167 = vmatpush1.bf16.msra.mxu0 0
  %168 = vmatprep.subr.bf16.mxu0 0
  %169 = vmatpush1.bf16.msra.mxu0 0
  %170 = vmatprep.subr.bf16.mxu0 0
  %171 = vmatpush1.bf16.msra.mxu0 0
  %172 = vmatprep.subr.bf16.mxu0 0
  %173 = vmatpush1.bf16.msra.mxu0 0
  %174 = vmatprep.subr.bf16.mxu0 0
  %175 = vmatpush1.bf16.msra.mxu0 %v157
  %176 = vmatprep.subr.bf16.mxu0 0
  %177 = vmatpush1.bf16.msra.mxu0 %v156
  %178 = vmatprep.subr.bf16.mxu0 0
  %179 = vmatpush1.bf16.msra.mxu0 %v155
  %180 = vmatprep.subr.bf16.mxu0 0
  %181 = vmatpush1.bf16.msra.mxu0 %v154
  %182 = vmatprep.subr.bf16.mxu0 0
  %183 = vmatpush2.bf16.msra.mxu0 0
  %184 = vmatprep.subr.bf16.mxu0 0
  %185 = vmatpush2.bf16.msra.mxu0 0
  %186 = vmatprep.subr.bf16.mxu0 0
  %187 = vmatpush2.bf16.msra.mxu0 0
  %188 = vmatprep.subr.bf16.mxu0 0
  %189 = vmatpush2.bf16.msra.mxu0 0
  %190 = vmatprep.subr.bf16.mxu0 0
  %191 = vmatpush2.bf16.msra.mxu0 0
  %192 = vmatprep.subr.bf16.mxu0 0
  %193 = vmatpush2.bf16.msra.mxu0 0
  %194 = vmatprep.subr.bf16.mxu0 0
  %195 = vmatpush2.bf16.msra.mxu0 0
  %196 = vmatprep.subr.bf16.mxu0 0
  %197 = vmatpush2.bf16.msra.mxu0 0
  %198 = vmatprep.mubr.bf16.mxu0 0
  %199 = vmatmul.mubr.bf16.gmra.mxu0 %v164
  %v200 = vpop.f32.mrf.mxu0
  %v201 = vadd.f32 %v136, %v200
  %v202 = vpop.f32.mrf.mxu0
  %v203 = vpop.f32.mrf.mxu0
  %v204 = vadd.f32 %v136, %v203
  %v205 = vpop.f32.mrf.mxu0
  %206 = vdwg.mxu0
  %v207 = vmax.f32 %v201, 0.0
  %v208 = vmax.f32 %v204, 0.0
  %v209 = vpack.c.bf16 %v208, %v207
  %v210 = vld [vmem:[%s3] sm:$0xf]
  %v211 = vld [vmem:[%s3 + $0x4] sm:$0xf]
  %v212 = vld [vmem:[%s3 + $0x8] sm:$0xf]
  %v213 = vld [vmem:[%s3 + $0xc] sm:$0xf]
  %v214 = vld [vmem:[%s3 + $0x10] sm:$0xf]
  %v215 = vld [vmem:[%s3 + $0x14] sm:$0xf]
  %v216 = vld [vmem:[%s3 + $0x18] sm:$0xf]
  %v217 = vld [vmem:[%s3 + $0x1c] sm:$0xf]
  %v218 = vld [vmem:[%s9] sm:$0x1]
  %v220 = vlaneseq
  %v221 = vshrl.u32 %v220, 7
  %v222 = vsub.s32 0, %v221
  %v223 = vrot.slane %v218, %v222
  %v233 = vunpack.c.l.b16 %v210
  %v234 = vunpack.c.l.b16 %v211
  %v235 = vunpack.c.l.b16 %v212
  %v236 = vunpack.c.l.b16 %v213
  %v237 = vunpack.c.l.b16 %v214
  %v238 = vunpack.c.l.b16 %v215
  %v239 = vunpack.c.l.b16 %v216
  %v240 = vunpack.c.l.b16 %v217
  %v241 = vpack.c.b16 %v234, %v233
  %v242 = vpack.c.b16 %v236, %v235
  %v243 = vpack.c.b16 %v238, %v237
  %v244 = vpack.c.b16 %v240, %v239
  %v250 = vsel %vm162, %v209, 0
  %252 = vmatprep.subr.bf16.mxu0 0
  %253 = vmatpush1.bf16.msra.mxu0 0
  %254 = vmatprep.subr.bf16.mxu0 0
  %255 = vmatpush1.bf16.msra.mxu0 0
  %256 = vmatprep.subr.bf16.mxu0 0
  %257 = vmatpush1.bf16.msra.mxu0 0
  %258 = vmatprep.subr.bf16.mxu0 0
  %259 = vmatpush1.bf16.msra.mxu0 0
  %260 = vmatprep.subr.bf16.mxu0 0
  %261 = vmatpush1.bf16.msra.mxu0 %v244
  %262 = vmatprep.subr.bf16.mxu0 0
  %263 = vmatpush1.bf16.msra.mxu0 %v243
  %264 = vmatprep.subr.bf16.mxu0 0
  %265 = vmatpush1.bf16.msra.mxu0 %v242
  %266 = vmatprep.subr.bf16.mxu0 0
  %267 = vmatpush1.bf16.msra.mxu0 %v241
  %268 = vmatprep.subr.bf16.mxu0 0
  %269 = vmatpush2.bf16.msra.mxu0 0
  %270 = vmatprep.subr.bf16.mxu0 0
  %271 = vmatpush2.bf16.msra.mxu0 0
  %272 = vmatprep.subr.bf16.mxu0 0
  %273 = vmatpush2.bf16.msra.mxu0 0
  %274 = vmatprep.subr.bf16.mxu0 0
  %275 = vmatpush2.bf16.msra.mxu0 0
  %276 = vmatprep.subr.bf16.mxu0 0
  %277 = vmatpush2.bf16.msra.mxu0 0
  %278 = vmatprep.subr.bf16.mxu0 0
  %279 = vmatpush2.bf16.msra.mxu0 0
  %280 = vmatprep.subr.bf16.mxu0 0
  %281 = vmatpush2.bf16.msra.mxu0 0
  %282 = vmatprep.subr.bf16.mxu0 0
  %283 = vmatpush2.bf16.msra.mxu0 0
  %284 = vmatprep.mubr.bf16.mxu0 0
  %285 = vmatmul.mubr.bf16.gmra.mxu0 %v250
  %v286 = vpop.f32.mrf.mxu0
  %v287 = vadd.f32 %v223, %v286
  %v288 = vpop.f32.mrf.mxu0
  %v289 = vpop.f32.mrf.mxu0
  %v290 = vadd.f32 %v223, %v289
  %v291 = vpop.f32.mrf.mxu0
  %292 = vdwg.mxu0
  %v293 = vmax.f32 %v287, 0.0
  %v294 = vmax.f32 %v290, 0.0
  %v295 = vpack.c.bf16 %v294, %v293
  %v296 = vld [vmem:[%s4] sm:$0xf]
  %v297 = vld [vmem:[%s4 + $0x4] sm:$0xf]
  %v298 = vld [vmem:[%s4 + $0x8] sm:$0xf]
  %v299 = vld [vmem:[%s4 + $0xc] sm:$0xf]
  %v300 = vld [vmem:[%s4 + $0x10] sm:$0xf]
  %v301 = vld [vmem:[%s4 + $0x14] sm:$0xf]
  %v302 = vld [vmem:[%s4 + $0x18] sm:$0xf]
  %v303 = vld [vmem:[%s4 + $0x1c] sm:$0xf]
  %v304 = vld [vmem:[%s10] sm:$0x1]
  %v306 = vlaneseq
  %v307 = vshrl.u32 %v306, 7
  %v308 = vsub.s32 0, %v307
  %v309 = vrot.slane %v304, %v308
  %v319 = vunpack.c.l.b16 %v296
  %v320 = vunpack.c.l.b16 %v297
  %v321 = vunpack.c.l.b16 %v298
  %v322 = vunpack.c.l.b16 %v299
  %v323 = vunpack.c.l.b16 %v300
  %v324 = vunpack.c.l.b16 %v301
  %v325 = vunpack.c.l.b16 %v302
  %v326 = vunpack.c.l.b16 %v303
  %v327 = vpack.c.b16 %v320, %v319
  %v328 = vpack.c.b16 %v322, %v321
  %v329 = vpack.c.b16 %v324, %v323
  %v330 = vpack.c.b16 %v326, %v325
  %v336 = vsel %vm162, %v295, 0
  %338 = vmatprep.subr.bf16.mxu0 0
  %339 = vmatpush1.bf16.msra.mxu0 0
  %340 = vmatprep.subr.bf16.mxu0 0
  %341 = vmatpush1.bf16.msra.mxu0 0
  %342 = vmatprep.subr.bf16.mxu0 0
  %343 = vmatpush1.bf16.msra.mxu0 0
  %344 = vmatprep.subr.bf16.mxu0 0
  %345 = vmatpush1.bf16.msra.mxu0 0
  %346 = vmatprep.subr.bf16.mxu0 0
  %347 = vmatpush1.bf16.msra.mxu0 %v330
  %348 = vmatprep.subr.bf16.mxu0 0
  %349 = vmatpush1.bf16.msra.mxu0 %v329
  %350 = vmatprep.subr.bf16.mxu0 0
  %351 = vmatpush1.bf16.msra.mxu0 %v328
  %352 = vmatprep.subr.bf16.mxu0 0
  %353 = vmatpush1.bf16.msra.mxu0 %v327
  %354 = vmatprep.subr.bf16.mxu0 0
  %355 = vmatpush2.bf16.msra.mxu0 0
  %356 = vmatprep.subr.bf16.mxu0 0
  %357 = vmatpush2.bf16.msra.mxu0 0
  %358 = vmatprep.subr.bf16.mxu0 0
  %359 = vmatpush2.bf16.msra.mxu0 0
  %360 = vmatprep.subr.bf16.mxu0 0
  %361 = vmatpush2.bf16.msra.mxu0 0
  %362 = vmatprep.subr.bf16.mxu0 0
  %363 = vmatpush2.bf16.msra.mxu0 0
  %364 = vmatprep.subr.bf16.mxu0 0
  %365 = vmatpush2.bf16.msra.mxu0 0
  %366 = vmatprep.subr.bf16.mxu0 0
  %367 = vmatpush2.bf16.msra.mxu0 0
  %368 = vmatprep.subr.bf16.mxu0 0
  %369 = vmatpush2.bf16.msra.mxu0 0
  %370 = vmatprep.mubr.bf16.mxu0 0
  %371 = vmatmul.mubr.bf16.gmra.mxu0 %v336
  %v372 = vpop.f32.mrf.mxu0
  %v373 = vadd.f32 %v309, %v372
  %v374 = vpop.f32.mrf.mxu0
  %v375 = vpop.f32.mrf.mxu0
  %v376 = vadd.f32 %v309, %v375
  %v377 = vpop.f32.mrf.mxu0
  %378 = vdwg.mxu0
  %v379 = vmax.f32 %v373, 0.0
  %v380 = vmax.f32 %v376, 0.0
  %v381 = vpack.c.bf16 %v380, %v379
  %v382 = vld [vmem:[%s5] sm:$0xf]
  %v383 = vld [vmem:[%s5 + $0x4] sm:$0xf]
  %v384 = vld [vmem:[%s5 + $0x8] sm:$0xf]
  %v385 = vld [vmem:[%s5 + $0xc] sm:$0xf]
  %v386 = vld [vmem:[%s5 + $0x10] sm:$0xf]
  %v387 = vld [vmem:[%s5 + $0x14] sm:$0xf]
  %v388 = vld [vmem:[%s5 + $0x18] sm:$0xf]
  %v389 = vld [vmem:[%s5 + $0x1c] sm:$0xf]
  %v390 = vld [vmem:[%s11] sm:$0x1]
  %v392 = vlaneseq
  %v393 = vshrl.u32 %v392, 7
  %v394 = vsub.s32 0, %v393
  %v395 = vrot.slane %v390, %v394
  %v405 = vunpack.c.l.b16 %v382
  %v406 = vunpack.c.l.b16 %v383
  %v407 = vunpack.c.l.b16 %v384
  %v408 = vunpack.c.l.b16 %v385
  %v409 = vunpack.c.l.b16 %v386
  %v410 = vunpack.c.l.b16 %v387
  %v411 = vunpack.c.l.b16 %v388
  %v412 = vunpack.c.l.b16 %v389
  %v413 = vpack.c.b16 %v406, %v405
  %v414 = vpack.c.b16 %v408, %v407
  %v415 = vpack.c.b16 %v410, %v409
  %v416 = vpack.c.b16 %v412, %v411
  %v422 = vsel %vm162, %v381, 0
  %424 = vmatprep.subr.bf16.mxu0 0
  %425 = vmatpush1.bf16.msra.mxu0 0
  %426 = vmatprep.subr.bf16.mxu0 0
  %427 = vmatpush1.bf16.msra.mxu0 0
  %428 = vmatprep.subr.bf16.mxu0 0
  %429 = vmatpush1.bf16.msra.mxu0 0
  %430 = vmatprep.subr.bf16.mxu0 0
  %431 = vmatpush1.bf16.msra.mxu0 0
  %432 = vmatprep.subr.bf16.mxu0 0
  %433 = vmatpush1.bf16.msra.mxu0 %v416
  %434 = vmatprep.subr.bf16.mxu0 0
  %435 = vmatpush1.bf16.msra.mxu0 %v415
  %436 = vmatprep.subr.bf16.mxu0 0
  %437 = vmatpush1.bf16.msra.mxu0 %v414
  %438 = vmatprep.subr.bf16.mxu0 0
  %439 = vmatpush1.bf16.msra.mxu0 %v413
  %440 = vmatprep.subr.bf16.mxu0 0
  %441 = vmatpush2.bf16.msra.mxu0 0
  %442 = vmatprep.subr.bf16.mxu0 0
  %443 = vmatpush2.bf16.msra.mxu0 0
  %444 = vmatprep.subr.bf16.mxu0 0
  %445 = vmatpush2.bf16.msra.mxu0 0
  %446 = vmatprep.subr.bf16.mxu0 0
  %447 = vmatpush2.bf16.msra.mxu0 0
  %448 = vmatprep.subr.bf16.mxu0 0
  %449 = vmatpush2.bf16.msra.mxu0 0
  %450 = vmatprep.subr.bf16.mxu0 0
  %451 = vmatpush2.bf16.msra.mxu0 0
  %452 = vmatprep.subr.bf16.mxu0 0
  %453 = vmatpush2.bf16.msra.mxu0 0
  %454 = vmatprep.subr.bf16.mxu0 0
  %455 = vmatpush2.bf16.msra.mxu0 0
  %456 = vmatprep.mubr.bf16.mxu0 0
  %457 = vmatmul.mubr.bf16.gmra.mxu0 %v422
  %v458 = vpop.f32.mrf.mxu0
  %v459 = vadd.f32 %v395, %v458
  %v460 = vpop.f32.mrf.mxu0
  %v461 = vpop.f32.mrf.mxu0
  %v462 = vadd.f32 %v395, %v461
  %v463 = vpop.f32.mrf.mxu0
  %464 = vdwg.mxu0
  %v465 = vmax.f32 %v459, 0.0
  %v466 = vmax.f32 %v462, 0.0
  %v467 = vpack.c.bf16 %v466, %v465
  %v468 = vld [vmem:[%s6] sm:$0xf]
  %v469 = vld [vmem:[%s6 + $0x4] sm:$0xf]
  %v470 = vld [vmem:[%s6 + $0x8] sm:$0xf]
  %v471 = vld [vmem:[%s6 + $0xc] sm:$0xf]
  %v472 = vld [vmem:[%s6 + $0x10] sm:$0xf]
  %v473 = vld [vmem:[%s6 + $0x14] sm:$0xf]
  %v474 = vld [vmem:[%s6 + $0x18] sm:$0xf]
  %v475 = vld [vmem:[%s6 + $0x1c] sm:$0xf]
  %v476 = vld [vmem:[%s12] sm:$0x1]
  %v478 = vlaneseq
  %v479 = vshrl.u32 %v478, 7
  %v480 = vsub.s32 0, %v479
  %v481 = vrot.slane %v476, %v480
  %v491 = vunpack.c.l.b16 %v468
  %v492 = vunpack.c.l.b16 %v469
  %v493 = vunpack.c.l.b16 %v470
  %v494 = vunpack.c.l.b16 %v471
  %v495 = vunpack.c.l.b16 %v472
  %v496 = vunpack.c.l.b16 %v473
  %v497 = vunpack.c.l.b16 %v474
  %v498 = vunpack.c.l.b16 %v475
  %v499 = vpack.c.b16 %v492, %v491
  %v500 = vpack.c.b16 %v494, %v493
  %v501 = vpack.c.b16 %v496, %v495
  %v502 = vpack.c.b16 %v498, %v497
  %v508 = vsel %vm162, %v467, 0
  %510 = vmatprep.subr.bf16.mxu0 0
  %511 = vmatpush1.bf16.msra.mxu0 0
  %512 = vmatprep.subr.bf16.mxu0 0
  %513 = vmatpush1.bf16.msra.mxu0 0
  %514 = vmatprep.subr.bf16.mxu0 0
  %515 = vmatpush1.bf16.msra.mxu0 0
  %516 = vmatprep.subr.bf16.mxu0 0
  %517 = vmatpush1.bf16.msra.mxu0 0
  %518 = vmatprep.subr.bf16.mxu0 0
  %519 = vmatpush1.bf16.msra.mxu0 %v502
  %520 = vmatprep.subr.bf16.mxu0 0
  %521 = vmatpush1.bf16.msra.mxu0 %v501
  %522 = vmatprep.subr.bf16.mxu0 0
  %523 = vmatpush1.bf16.msra.mxu0 %v500
  %524 = vmatprep.subr.bf16.mxu0 0
  %525 = vmatpush1.bf16.msra.mxu0 %v499
  %526 = vmatprep.subr.bf16.mxu0 0
  %527 = vmatpush2.bf16.msra.mxu0 0
  %528 = vmatprep.subr.bf16.mxu0 0
  %529 = vmatpush2.bf16.msra.mxu0 0
  %530 = vmatprep.subr.bf16.mxu0 0
  %531 = vmatpush2.bf16.msra.mxu0 0
  %532 = vmatprep.subr.bf16.mxu0 0
  %533 = vmatpush2.bf16.msra.mxu0 0
  %534 = vmatprep.subr.bf16.mxu0 0
  %535 = vmatpush2.bf16.msra.mxu0 0
  %536 = vmatprep.subr.bf16.mxu0 0
  %537 = vmatpush2.bf16.msra.mxu0 0
  %538 = vmatprep.subr.bf16.mxu0 0
  %539 = vmatpush2.bf16.msra.mxu0 0
  %540 = vmatprep.subr.bf16.mxu0 0
  %541 = vmatpush2.bf16.msra.mxu0 0
  %542 = vmatprep.mubr.bf16.mxu0 0
  %543 = vmatmul.mubr.bf16.gmra.mxu0 %v508
  %v544 = vpop.f32.mrf.mxu0
  %v545 = vadd.f32 %v481, %v544
  %v546 = vpop.f32.mrf.mxu0
  %v547 = vpop.f32.mrf.mxu0
  %v548 = vadd.f32 %v481, %v547
  %v549 = vpop.f32.mrf.mxu0
  %550 = vdwg.mxu0
  %vm551 = vcmask 39936
  %552 = vst.msk [vmem:[%s13] sm:$0xff] %vm551, %v545
  %vm553 = vcmask 37888
  %554 = vst.msk [vmem:[%s13 + $0x8] sm:$0x3f] %vm553, %v548
  // Predicated region
  $region54: #{xlmr_ic_ner_forward.25} parent=0 // pred_check
    _
  $region55: #{xlmr_ic_ner_forward.25} parent=0 // pred_check_branch
    %556 = sbr.rel (0) target = $region57
  $region56: #{xlmr_ic_ner_forward.25} parent=0 // pred_region
    _
  $region57: #{xlmr_ic_ner_forward.25} parent=0 // pred_fallthru
    _
  // Predicated region
  $region58: #{xlmr_ic_ner_forward.25} parent=0 // pred_check
    _
  $region59: #{xlmr_ic_ner_forward.25} parent=0 // pred_check_branch
    %558 = sbr.rel (0) target = $region61
  $region60: #{xlmr_ic_ner_forward.25} parent=0 // pred_region
    _
  $region61: #{xlmr_ic_ner_forward.25} parent=0 // pred_fallthru
    _

// kernel: xlmr_ic_ner_forward.24
$region0: #{xlmr_ic_ner_forward.24}
  #allocation0 [shape = 'u32[]', space=smem, size = 0x4, offset = 0x4, fixed_abs, tag = 'smem constant byte address 0x4 - core index']
  #allocation1 [shape = 'u32[144,128]{1,0:T(1,128)}', space=vmem, size = 0x12000, scoped, tag = 'internal scratch']
  %s0 = inlined_call_operand.vmem [shape: bf16[2,32], index: 0, kind: input, shape index: {}]
  %s1 = inlined_call_operand.vmem [shape: bf16[32,64], index: 1, kind: input, shape index: {}]
  %s2 = inlined_call_operand.vmem [shape: bf16[64,64], index: 2, kind: input, shape index: {}]
  %s3 = inlined_call_operand.vmem [shape: bf16[64,64], index: 3, kind: input, shape index: {}]
  %s4 = inlined_call_operand.vmem [shape: bf16[64,64], index: 4, kind: input, shape index: {}]
  %s5 = inlined_call_operand.vmem [shape: bf16[64,64], index: 5, kind: input, shape index: {}]
  %s6 = inlined_call_operand.vmem [shape: bf16[64,7], index: 6, kind: input, shape index: {}]
  %s7 = inlined_call_operand.vmem [shape: f32[1,64], index: 7, kind: input, shape index: {}]
  %s8 = inlined_call_operand.vmem [shape: f32[1,64], index: 8, kind: input, shape index: {}]
  %s9 = inlined_call_operand.vmem [shape: f32[1,64], index: 9, kind: input, shape index: {}]
  %s10 = inlined_call_operand.vmem [shape: f32[1,64], index: 10, kind: input, shape index: {}]
  %s11 = inlined_call_operand.vmem [shape: f32[1,64], index: 11, kind: input, shape index: {}]
  %s12 = inlined_call_operand.vmem [shape: f32[1,7], index: 12, kind: input, shape index: {}]
  %s13 = inlined_call_operand.hbm [shape: f32[2,7], index: 13, kind: output, shape index: {}]
  %s14 = sld [smem:[#allocation0]]
  $region62: #{xlmr_ic_ner_forward.24} parent=0
    _
  %s16 = ssub.s32 1, %s14
  %s17 = scalar_select 0, %s16, %s14
  $region1: #{xlmr_ic_ner_forward.24} parent=0
    #allocation2 [shape = 'u8[1024]{0}', space=vmem, size = 0x400, scoped, tag = 'output window, operand 0, single buffered']
    #allocation3 [shape = 's32[1]{0}', space=sflag, size = 0x4, scoped, tag = 'scoped memory for xlmr_ic_ner_forward.24']
    %18 = vsyncpa [#allocation3], 0
    // Predicated region
    $region2: #{xlmr_ic_ner_forward.24} parent=1 // pred_check
      _
    $region3: #{xlmr_ic_ner_forward.24} parent=1 // pred_check_branch
      %20 = sbr.rel (0) target = $region5
    $region4: #{xlmr_ic_ner_forward.24} parent=1 // pred_region
      _
    $region5: #{xlmr_ic_ner_forward.24} parent=1 // pred_fallthru
      _
    // Predicated region
    $region6: #{xlmr_ic_ner_forward.24} parent=1 // pred_check
      _
    $region7: #{xlmr_ic_ner_forward.24} parent=1 // pred_check_branch
      %22 = sbr.rel (0) target = $region9
    $region8: #{xlmr_ic_ner_forward.24} parent=1 // pred_region
      _
    $region9: #{xlmr_ic_ner_forward.24} parent=1 // pred_fallthru
      _
    // Predicated region
    $region10: #{xlmr_ic_ner_forward.24} parent=1 // pred_check
      _
    $region11: #{xlmr_ic_ner_forward.24} parent=1 // pred_check_branch
      %24 = sbr.rel (0) target = $region13
    $region12: #{xlmr_ic_ner_forward.24} parent=1 // pred_region
      _
    $region13: #{xlmr_ic_ner_forward.24} parent=1 // pred_fallthru
      _
    // Predicated region
    $region14: #{xlmr_ic_ner_forward.24} parent=1 // pred_check
      _
    $region15: #{xlmr_ic_ner_forward.24} parent=1 // pred_check_branch
      %26 = sbr.rel (0) target = $region17
    $region16: #{xlmr_ic_ner_forward.24} parent=1 // pred_region
      _
    $region17: #{xlmr_ic_ner_forward.24} parent=1 // pred_fallthru
      _
    // Predicated region
    $region18: #{xlmr_ic_ner_forward.24} parent=1 // pred_check
      _
    $region19: #{xlmr_ic_ner_forward.24} parent=1 // pred_check_branch
      %28 = sbr.rel (0) target = $region21
    $region20: #{xlmr_ic_ner_forward.24} parent=1 // pred_region
      _
    $region21: #{xlmr_ic_ner_forward.24} parent=1 // pred_fallthru
      _
    // Predicated region
    $region22: #{xlmr_ic_ner_forward.24} parent=1 // pred_check
      _
    $region23: #{xlmr_ic_ner_forward.24} parent=1 // pred_check_branch
      %30 = sbr.rel (0) target = $region25
    $region24: #{xlmr_ic_ner_forward.24} parent=1 // pred_region
      _
    $region25: #{xlmr_ic_ner_forward.24} parent=1 // pred_fallthru
      _
    // Predicated region
    $region26: #{xlmr_ic_ner_forward.24} parent=1 // pred_check
      _
    $region27: #{xlmr_ic_ner_forward.24} parent=1 // pred_check_branch
      %32 = sbr.rel (0) target = $region29
    $region28: #{xlmr_ic_ner_forward.24} parent=1 // pred_region
      _
    $region29: #{xlmr_ic_ner_forward.24} parent=1 // pred_fallthru
      _
    // Predicated region
    $region30: #{xlmr_ic_ner_forward.24} parent=1 // pred_check
      _
    $region31: #{xlmr_ic_ner_forward.24} parent=1 // pred_check_branch
      %34 = sbr.rel (0) target = $region33
    $region32: #{xlmr_ic_ner_forward.24} parent=1 // pred_region
      _
    $region33: #{xlmr_ic_ner_forward.24} parent=1 // pred_fallthru
      _
    // Predicated region
    $region34: #{xlmr_ic_ner_forward.24} parent=1 // pred_check
      _
    $region35: #{xlmr_ic_ner_forward.24} parent=1 // pred_check_branch
      %36 = sbr.rel (0) target = $region37
    $region36: #{xlmr_ic_ner_forward.24} parent=1 // pred_region
      _
    $region37: #{xlmr_ic_ner_forward.24} parent=1 // pred_fallthru
      _
    // Predicated region
    $region38: #{xlmr_ic_ner_forward.24} parent=1 // pred_check
      _
    $region39: #{xlmr_ic_ner_forward.24} parent=1 // pred_check_branch
      %38 = sbr.rel (0) target = $region41
    $region40: #{xlmr_ic_ner_forward.24} parent=1 // pred_region
      _
    $region41: #{xlmr_ic_ner_forward.24} parent=1 // pred_fallthru
      _
    // Predicated region
    $region42: #{xlmr_ic_ner_forward.24} parent=1 // pred_check
      _
    $region43: #{xlmr_ic_ner_forward.24} parent=1 // pred_check_branch
      %40 = sbr.rel (0) target = $region45
    $region44: #{xlmr_ic_ner_forward.24} parent=1 // pred_region
      _
    $region45: #{xlmr_ic_ner_forward.24} parent=1 // pred_fallthru
      _
    // Predicated region
    $region46: #{xlmr_ic_ner_forward.24} parent=1 // pred_check
      _
    $region47: #{xlmr_ic_ner_forward.24} parent=1 // pred_check_branch
      %42 = sbr.rel (0) target = $region49
    $region48: #{xlmr_ic_ner_forward.24} parent=1 // pred_region
      _
    $region49: #{xlmr_ic_ner_forward.24} parent=1 // pred_fallthru
      _
    // Predicated region
    $region50: #{xlmr_ic_ner_forward.24} parent=1 // pred_check
      _
    $region51: #{xlmr_ic_ner_forward.24} parent=1 // pred_check_branch
      %44 = sbr.rel (0) target = $region53
    $region52: #{xlmr_ic_ner_forward.24} parent=1 // pred_region
      _
    $region53: #{xlmr_ic_ner_forward.24} parent=1 // pred_fallthru
      _
    %v46 = vld [vmem:[%s0] sm:$0x1]
    %v47 = vld [vmem:[%s1] sm:$0xf]
    %v48 = vld [vmem:[%s1 + $0x4] sm:$0xf]
    %v49 = vld [vmem:[%s1 + $0x8] sm:$0xf]
    %v50 = vld [vmem:[%s1 + $0xc] sm:$0xf]
    %v51 = vld [vmem:[%s7] sm:$0x1]
    %v53 = vlaneseq
    %v54 = vshrl.u32 %v53, 7
    %v55 = vsub.s32 0, %v54
    %v56 = vrot.slane %v51, %v55
    %v62 = vunpack.c.l.b16 %v47
    %v63 = vunpack.c.l.b16 %v48
    %v64 = vunpack.c.l.b16 %v49
    %v65 = vunpack.c.l.b16 %v50
    %v66 = vpack.c.b16 %v63, %v62
    %v67 = vpack.c.b16 %v65, %v64
    %vm70 = vcmask 261120
    %v72 = vsel %vm70, %v46, 0
    %74 = vmatprep.subr.bf16.mxu0 0
    %75 = vmatpush1.bf16.msra.mxu0 0
    %76 = vmatprep.subr.bf16.mxu0 0
    %77 = vmatpush1.bf16.msra.mxu0 0
    %78 = vmatprep.subr.bf16.mxu0 0
    %79 = vmatpush1.bf16.msra.mxu0 0
    %80 = vmatprep.subr.bf16.mxu0 0
    %81 = vmatpush1.bf16.msra.mxu0 0
    %82 = vmatprep.subr.bf16.mxu0 0
    %83 = vmatpush1.bf16.msra.mxu0 0
    %84 = vmatprep.subr.bf16.mxu0 0
    %85 = vmatpush1.bf16.msra.mxu0 0
    %86 = vmatprep.subr.bf16.mxu0 0
    %87 = vmatpush1.bf16.msra.mxu0 %v67
    %88 = vmatprep.subr.bf16.mxu0 0
    %89 = vmatpush1.bf16.msra.mxu0 %v66
    %90 = vmatprep.subr.bf16.mxu0 0
    %91 = vmatpush2.bf16.msra.mxu0 0
    %92 = vmatprep.subr.bf16.mxu0 0
    %93 = vmatpush2.bf16.msra.mxu0 0
    %94 = vmatprep.subr.bf16.mxu0 0
    %95 = vmatpush2.bf16.msra.mxu0 0
    %96 = vmatprep.subr.bf16.mxu0 0
    %97 = vmatpush2.bf16.msra.mxu0 0
    %98 = vmatprep.subr.bf16.mxu0 0
    %99 = vmatpush2.bf16.msra.mxu0 0
    %100 = vmatprep.subr.bf16.mxu0 0
    %101 = vmatpush2.bf16.msra.mxu0 0
    %102 = vmatprep.subr.bf16.mxu0 0
    %103 = vmatpush2.bf16.msra.mxu0 0
    %104 = vmatprep.subr.bf16.mxu0 0
    %105 = vmatpush2.bf16.msra.mxu0 0
    %106 = vmatprep.mubr.bf16.mxu0 0
    %107 = vmatmul.mubr.bf16.gmra.mxu0 %v72
    %v108 = vpop.f32.mrf.mxu0
    %v109 = vadd.f32 %v56, %v108
    %v110 = vpop.f32.mrf.mxu0
    %v111 = vpop.f32.mrf.mxu0
    %v112 = vpop.f32.mrf.mxu0
    %113 = vdwg.mxu0
    %v114 = vmax.f32 %v109, 0.0
    %v115 = vpack.c.bf16 %v114, %v114
    %v116 = vld [vmem:[%s2] sm:$0xf]
    %v117 = vld [vmem:[%s2 + $0x4] sm:$0xf]
    %v118 = vld [vmem:[%s2 + $0x8] sm:$0xf]
    %v119 = vld [vmem:[%s2 + $0xc] sm:$0xf]
    %v120 = vld [vmem:[%s2 + $0x10] sm:$0xf]
    %v121 = vld [vmem:[%s2 + $0x14] sm:$0xf]
    %v122 = vld [vmem:[%s2 + $0x18] sm:$0xf]
    %v123 = vld [vmem:[%s2 + $0x1c] sm:$0xf]
    %v124 = vld [vmem:[%s8] sm:$0x1]
    %v126 = vlaneseq
    %v127 = vshrl.u32 %v126, 7
    %v128 = vsub.s32 0, %v127
    %v129 = vrot.slane %v124, %v128
    %v139 = vunpack.c.l.b16 %v116
    %v140 = vunpack.c.l.b16 %v117
    %v141 = vunpack.c.l.b16 %v118
    %v142 = vunpack.c.l.b16 %v119
    %v143 = vunpack.c.l.b16 %v120
    %v144 = vunpack.c.l.b16 %v121
    %v145 = vunpack.c.l.b16 %v122
    %v146 = vunpack.c.l.b16 %v123
    %v147 = vpack.c.b16 %v140, %v139
    %v148 = vpack.c.b16 %v142, %v141
    %v149 = vpack.c.b16 %v144, %v143
    %v150 = vpack.c.b16 %v146, %v145
    %vm155 = vcmask 523264
    %v157 = vsel %vm155, %v115, 0
    %159 = vmatprep.subr.bf16.mxu0 0
    %160 = vmatpush1.bf16.msra.mxu0 0
    %161 = vmatprep.subr.bf16.mxu0 0
    %162 = vmatpush1.bf16.msra.mxu0 0
    %163 = vmatprep.subr.bf16.mxu0 0
    %164 = vmatpush1.bf16.msra.mxu0 0
    %165 = vmatprep.subr.bf16.mxu0 0
    %166 = vmatpush1.bf16.msra.mxu0 0
    %167 = vmatprep.subr.bf16.mxu0 0
    %168 = vmatpush1.bf16.msra.mxu0 %v150
    %169 = vmatprep.subr.bf16.mxu0 0
    %170 = vmatpush1.bf16.msra.mxu0 %v149
    %171 = vmatprep.subr.bf16.mxu0 0
    %172 = vmatpush1.bf16.msra.mxu0 %v148
    %173 = vmatprep.subr.bf16.mxu0 0
    %174 = vmatpush1.bf16.msra.mxu0 %v147
    %175 = vmatprep.subr.bf16.mxu0 0
    %176 = vmatpush2.bf16.msra.mxu0 0
    %177 = vmatprep.subr.bf16.mxu0 0
    %178 = vmatpush2.bf16.msra.mxu0 0
    %179 = vmatprep.subr.bf16.mxu0 0
    %180 = vmatpush2.bf16.msra.mxu0 0
    %181 = vmatprep.subr.bf16.mxu0 0
    %182 = vmatpush2.bf16.msra.mxu0 0
    %183 = vmatprep.subr.bf16.mxu0 0
    %184 = vmatpush2.bf16.msra.mxu0 0
    %185 = vmatprep.subr.bf16.mxu0 0
    %186 = vmatpush2.bf16.msra.mxu0 0
    %187 = vmatprep.subr.bf16.mxu0 0
    %188 = vmatpush2.bf16.msra.mxu0 0
    %189 = vmatprep.subr.bf16.mxu0 0
    %190 = vmatpush2.bf16.msra.mxu0 0
    %191 = vmatprep.mubr.bf16.mxu0 0
    %192 = vmatmul.mubr.bf16.gmra.mxu0 %v157
    %v193 = vpop.f32.mrf.mxu0
    %v194 = vadd.f32 %v129, %v193
    %v195 = vpop.f32.mrf.mxu0
    %v196 = vpop.f32.mrf.mxu0
    %v197 = vpop.f32.mrf.mxu0
    %198 = vdwg.mxu0
    %v199 = vmax.f32 %v194, 0.0
    %v200 = vpack.c.bf16 %v199, %v199
    %v201 = vld [vmem:[%s3] sm:$0xf]
    %v202 = vld [vmem:[%s3 + $0x4] sm:$0xf]
    %v203 = vld [vmem:[%s3 + $0x8] sm:$0xf]
    %v204 = vld [vmem:[%s3 + $0xc] sm:$0xf]
    %v205 = vld [vmem:[%s3 + $0x10] sm:$0xf]
    %v206 = vld [vmem:[%s3 + $0x14] sm:$0xf]
    %v207 = vld [vmem:[%s3 + $0x18] sm:$0xf]
    %v208 = vld [vmem:[%s3 + $0x1c] sm:$0xf]
    %v209 = vld [vmem:[%s9] sm:$0x1]
    %v211 = vlaneseq
    %v212 = vshrl.u32 %v211, 7
    %v213 = vsub.s32 0, %v212
    %v214 = vrot.slane %v209, %v213
    %v224 = vunpack.c.l.b16 %v201
    %v225 = vunpack.c.l.b16 %v202
    %v226 = vunpack.c.l.b16 %v203
    %v227 = vunpack.c.l.b16 %v204
    %v228 = vunpack.c.l.b16 %v205
    %v229 = vunpack.c.l.b16 %v206
    %v230 = vunpack.c.l.b16 %v207
    %v231 = vunpack.c.l.b16 %v208
    %v232 = vpack.c.b16 %v225, %v224
    %v233 = vpack.c.b16 %v227, %v226
    %v234 = vpack.c.b16 %v229, %v228
    %v235 = vpack.c.b16 %v231, %v230
    %v241 = vsel %vm155, %v200, 0
    %243 = vmatprep.subr.bf16.mxu0 0
    %244 = vmatpush1.bf16.msra.mxu0 0
    %245 = vmatprep.subr.bf16.mxu0 0
    %246 = vmatpush1.bf16.msra.mxu0 0
    %247 = vmatprep.subr.bf16.mxu0 0
    %248 = vmatpush1.bf16.msra.mxu0 0
    %249 = vmatprep.subr.bf16.mxu0 0
    %250 = vmatpush1.bf16.msra.mxu0 0
    %251 = vmatprep.subr.bf16.mxu0 0
    %252 = vmatpush1.bf16.msra.mxu0 %v235
    %253 = vmatprep.subr.bf16.mxu0 0
    %254 = vmatpush1.bf16.msra.mxu0 %v234
    %255 = vmatprep.subr.bf16.mxu0 0
    %256 = vmatpush1.bf16.msra.mxu0 %v233
    %257 = vmatprep.subr.bf16.mxu0 0
    %258 = vmatpush1.bf16.msra.mxu0 %v232
    %259 = vmatprep.subr.bf16.mxu0 0
    %260 = vmatpush2.bf16.msra.mxu0 0
    %261 = vmatprep.subr.bf16.mxu0 0
    %262 = vmatpush2.bf16.msra.mxu0 0
    %263 = vmatprep.subr.bf16.mxu0 0
    %264 = vmatpush2.bf16.msra.mxu0 0
    %265 = vmatprep.subr.bf16.mxu0 0
    %266 = vmatpush2.bf16.msra.mxu0 0
    %267 = vmatprep.subr.bf16.mxu0 0
    %268 = vmatpush2.bf16.msra.mxu0 0
    %269 = vmatprep.subr.bf16.mxu0 0
    %270 = vmatpush2.bf16.msra.mxu0 0
    %271 = vmatprep.subr.bf16.mxu0 0
    %272 = vmatpush2.bf16.msra.mxu0 0
    %273 = vmatprep.subr.bf16.mxu0 0
    %274 = vmatpush2.bf16.msra.mxu0 0
    %275 = vmatprep.mubr.bf16.mxu0 0
    %276 = vmatmul.mubr.bf16.gmra.mxu0 %v241
    %v277 = vpop.f32.mrf.mxu0
    %v278 = vadd.f32 %v214, %v277
    %v279 = vpop.f32.mrf.mxu0
    %v280 = vpop.f32.mrf.mxu0
    %v281 = vpop.f32.mrf.mxu0
    %282 = vdwg.mxu0
    %v283 = vmax.f32 %v278, 0.0
    %v284 = vpack.c.bf16 %v283, %v283
    %v285 = vld [vmem:[%s4] sm:$0xf]
    %v286 = vld [vmem:[%s4 + $0x4] sm:$0xf]
    %v287 = vld [vmem:[%s4 + $0x8] sm:$0xf]
    %v288 = vld [vmem:[%s4 + $0xc] sm:$0xf]
    %v289 = vld [vmem:[%s4 + $0x10] sm:$0xf]
    %v290 = vld [vmem:[%s4 + $0x14] sm:$0xf]
    %v291 = vld [vmem:[%s4 + $0x18] sm:$0xf]
    %v292 = vld [vmem:[%s4 + $0x1c] sm:$0xf]
    %v293 = vld [vmem:[%s10] sm:$0x1]
    %v295 = vlaneseq
    %v296 = vshrl.u32 %v295, 7
    %v297 = vsub.s32 0, %v296
    %v298 = vrot.slane %v293, %v297
    %v308 = vunpack.c.l.b16 %v285
    %v309 = vunpack.c.l.b16 %v286
    %v310 = vunpack.c.l.b16 %v287
    %v311 = vunpack.c.l.b16 %v288
    %v312 = vunpack.c.l.b16 %v289
    %v313 = vunpack.c.l.b16 %v290
    %v314 = vunpack.c.l.b16 %v291
    %v315 = vunpack.c.l.b16 %v292
    %v316 = vpack.c.b16 %v309, %v308
    %v317 = vpack.c.b16 %v311, %v310
    %v318 = vpack.c.b16 %v313, %v312
    %v319 = vpack.c.b16 %v315, %v314
    %v325 = vsel %vm155, %v284, 0
    %327 = vmatprep.subr.bf16.mxu0 0
    %328 = vmatpush1.bf16.msra.mxu0 0
    %329 = vmatprep.subr.bf16.mxu0 0
    %330 = vmatpush1.bf16.msra.mxu0 0
    %331 = vmatprep.subr.bf16.mxu0 0
    %332 = vmatpush1.bf16.msra.mxu0 0
    %333 = vmatprep.subr.bf16.mxu0 0
    %334 = vmatpush1.bf16.msra.mxu0 0
    %335 = vmatprep.subr.bf16.mxu0 0
    %336 = vmatpush1.bf16.msra.mxu0 %v319
    %337 = vmatprep.subr.bf16.mxu0 0
    %338 = vmatpush1.bf16.msra.mxu0 %v318
    %339 = vmatprep.subr.bf16.mxu0 0
    %340 = vmatpush1.bf16.msra.mxu0 %v317
    %341 = vmatprep.subr.bf16.mxu0 0
    %342 = vmatpush1.bf16.msra.mxu0 %v316
    %343 = vmatprep.subr.bf16.mxu0 0
    %344 = vmatpush2.bf16.msra.mxu0 0
    %345 = vmatprep.subr.bf16.mxu0 0
    %346 = vmatpush2.bf16.msra.mxu0 0
    %347 = vmatprep.subr.bf16.mxu0 0
    %348 = vmatpush2.bf16.msra.mxu0 0
    %349 = vmatprep.subr.bf16.mxu0 0
    %350 = vmatpush2.bf16.msra.mxu0 0
    %351 = vmatprep.subr.bf16.mxu0 0
    %352 = vmatpush2.bf16.msra.mxu0 0
    %353 = vmatprep.subr.bf16.mxu0 0
    %354 = vmatpush2.bf16.msra.mxu0 0
    %355 = vmatprep.subr.bf16.mxu0 0
    %356 = vmatpush2.bf16.msra.mxu0 0
    %357 = vmatprep.subr.bf16.mxu0 0
    %358 = vmatpush2.bf16.msra.mxu0 0
    %359 = vmatprep.mubr.bf16.mxu0 0
    %360 = vmatmul.mubr.bf16.gmra.mxu0 %v325
    %v361 = vpop.f32.mrf.mxu0
    %v362 = vadd.f32 %v298, %v361
    %v363 = vpop.f32.mrf.mxu0
    %v364 = vpop.f32.mrf.mxu0
    %v365 = vpop.f32.mrf.mxu0
    %366 = vdwg.mxu0
    %v367 = vmax.f32 %v362, 0.0
    %v368 = vpack.c.bf16 %v367, %v367
    %v369 = vld [vmem:[%s5] sm:$0xf]
    %v370 = vld [vmem:[%s5 + $0x4] sm:$0xf]
    %v371 = vld [vmem:[%s5 + $0x8] sm:$0xf]
    %v372 = vld [vmem:[%s5 + $0xc] sm:$0xf]
    %v373 = vld [vmem:[%s5 + $0x10] sm:$0xf]
    %v374 = vld [vmem:[%s5 + $0x14] sm:$0xf]
    %v375 = vld [vmem:[%s5 + $0x18] sm:$0xf]
    %v376 = vld [vmem:[%s5 + $0x1c] sm:$0xf]
    %v377 = vld [vmem:[%s11] sm:$0x1]
    %v379 = vlaneseq
    %v380 = vshrl.u32 %v379, 7
    %v381 = vsub.s32 0, %v380
    %v382 = vrot.slane %v377, %v381
    %v392 = vunpack.c.l.b16 %v369
    %v393 = vunpack.c.l.b16 %v370
    %v394 = vunpack.c.l.b16 %v371
    %v395 = vunpack.c.l.b16 %v372
    %v396 = vunpack.c.l.b16 %v373
    %v397 = vunpack.c.l.b16 %v374
    %v398 = vunpack.c.l.b16 %v375
    %v399 = vunpack.c.l.b16 %v376
    %v400 = vpack.c.b16 %v393, %v392
    %v401 = vpack.c.b16 %v395, %v394
    %v402 = vpack.c.b16 %v397, %v396
    %v403 = vpack.c.b16 %v399, %v398
    %v409 = vsel %vm155, %v368, 0
    %411 = vmatprep.subr.bf16.mxu0 0
    %412 = vmatpush1.bf16.msra.mxu0 0
    %413 = vmatprep.subr.bf16.mxu0 0
    %414 = vmatpush1.bf16.msra.mxu0 0
    %415 = vmatprep.subr.bf16.mxu0 0
    %416 = vmatpush1.bf16.msra.mxu0 0
    %417 = vmatprep.subr.bf16.mxu0 0
    %418 = vmatpush1.bf16.msra.mxu0 0
    %419 = vmatprep.subr.bf16.mxu0 0
    %420 = vmatpush1.bf16.msra.mxu0 %v403
    %421 = vmatprep.subr.bf16.mxu0 0
    %422 = vmatpush1.bf16.msra.mxu0 %v402
    %423 = vmatprep.subr.bf16.mxu0 0
    %424 = vmatpush1.bf16.msra.mxu0 %v401
    %425 = vmatprep.subr.bf16.mxu0 0
    %426 = vmatpush1.bf16.msra.mxu0 %v400
    %427 = vmatprep.subr.bf16.mxu0 0
    %428 = vmatpush2.bf16.msra.mxu0 0
    %429 = vmatprep.subr.bf16.mxu0 0
    %430 = vmatpush2.bf16.msra.mxu0 0
    %431 = vmatprep.subr.bf16.mxu0 0
    %432 = vmatpush2.bf16.msra.mxu0 0
    %433 = vmatprep.subr.bf16.mxu0 0
    %434 = vmatpush2.bf16.msra.mxu0 0
    %435 = vmatprep.subr.bf16.mxu0 0
    %436 = vmatpush2.bf16.msra.mxu0 0
    %437 = vmatprep.subr.bf16.mxu0 0
    %438 = vmatpush2.bf16.msra.mxu0 0
    %439 = vmatprep.subr.bf16.mxu0 0
    %440 = vmatpush2.bf16.msra.mxu0 0
    %441 = vmatprep.subr.bf16.mxu0 0
    %442 = vmatpush2.bf16.msra.mxu0 0
    %443 = vmatprep.mubr.bf16.mxu0 0
    %444 = vmatmul.mubr.bf16.gmra.mxu0 %v409
    %v445 = vpop.f32.mrf.mxu0
    %v446 = vadd.f32 %v382, %v445
    %v447 = vpop.f32.mrf.mxu0
    %v448 = vpop.f32.mrf.mxu0
    %v449 = vpop.f32.mrf.mxu0
    %450 = vdwg.mxu0
    %v451 = vmax.f32 %v446, 0.0
    %v452 = vpack.c.bf16 %v451, %v451
    %v453 = vld [vmem:[%s6] sm:$0xf]
    %v454 = vld [vmem:[%s6 + $0x4] sm:$0xf]
    %v455 = vld [vmem:[%s6 + $0x8] sm:$0xf]
    %v456 = vld [vmem:[%s6 + $0xc] sm:$0xf]
    %v457 = vld [vmem:[%s6 + $0x10] sm:$0xf]
    %v458 = vld [vmem:[%s6 + $0x14] sm:$0xf]
    %v459 = vld [vmem:[%s6 + $0x18] sm:$0xf]
    %v460 = vld [vmem:[%s6 + $0x1c] sm:$0xf]
    %v461 = vld [vmem:[%s12] sm:$0x1]
    %v463 = vlaneseq
    %v464 = vshrl.u32 %v463, 7
    %v465 = vsub.s32 0, %v464
    %v466 = vrot.slane %v461, %v465
    %v476 = vunpack.c.l.b16 %v453
    %v477 = vunpack.c.l.b16 %v454
    %v478 = vunpack.c.l.b16 %v455
    %v479 = vunpack.c.l.b16 %v456
    %v480 = vunpack.c.l.b16 %v457
    %v481 = vunpack.c.l.b16 %v458
    %v482 = vunpack.c.l.b16 %v459
    %v483 = vunpack.c.l.b16 %v460
    %v484 = vpack.c.b16 %v477, %v476
    %v485 = vpack.c.b16 %v479, %v478
    %v486 = vpack.c.b16 %v481, %v480
    %v487 = vpack.c.b16 %v483, %v482
    %v493 = vsel %vm155, %v452, 0
    %495 = vmatprep.subr.bf16.mxu0 0
    %496 = vmatpush1.bf16.msra.mxu0 0
    %497 = vmatprep.subr.bf16.mxu0 0
    %498 = vmatpush1.bf16.msra.mxu0 0
    %499 = vmatprep.subr.bf16.mxu0 0
    %500 = vmatpush1.bf16.msra.mxu0 0
    %501 = vmatprep.subr.bf16.mxu0 0
    %502 = vmatpush1.bf16.msra.mxu0 0
    %503 = vmatprep.subr.bf16.mxu0 0
    %504 = vmatpush1.bf16.msra.mxu0 %v487
    %505 = vmatprep.subr.bf16.mxu0 0
    %506 = vmatpush1.bf16.msra.mxu0 %v486
    %507 = vmatprep.subr.bf16.mxu0 0
    %508 = vmatpush1.bf16.msra.mxu0 %v485
    %509 = vmatprep.subr.bf16.mxu0 0
    %510 = vmatpush1.bf16.msra.mxu0 %v484
    %511 = vmatprep.subr.bf16.mxu0 0
    %512 = vmatpush2.bf16.msra.mxu0 0
    %513 = vmatprep.subr.bf16.mxu0 0
    %514 = vmatpush2.bf16.msra.mxu0 0
    %515 = vmatprep.subr.bf16.mxu0 0
    %516 = vmatpush2.bf16.msra.mxu0 0
    %517 = vmatprep.subr.bf16.mxu0 0
    %518 = vmatpush2.bf16.msra.mxu0 0
    %519 = vmatprep.subr.bf16.mxu0 0
    %520 = vmatpush2.bf16.msra.mxu0 0
    %521 = vmatprep.subr.bf16.mxu0 0
    %522 = vmatpush2.bf16.msra.mxu0 0
    %523 = vmatprep.subr.bf16.mxu0 0
    %524 = vmatpush2.bf16.msra.mxu0 0
    %525 = vmatprep.subr.bf16.mxu0 0
    %526 = vmatpush2.bf16.msra.mxu0 0
    %527 = vmatprep.mubr.bf16.mxu0 0
    %528 = vmatmul.mubr.bf16.gmra.mxu0 %v493
    %v529 = vpop.f32.mrf.mxu0
    %v530 = vadd.f32 %v466, %v529
    %v531 = vpop.f32.mrf.mxu0
    %v532 = vpop.f32.mrf.mxu0
    %v533 = vpop.f32.mrf.mxu0
    %534 = vdwg.mxu0
    %vm535 = vcmask 50176
    %536 = vst.msk [vmem:[#allocation2] sm:$0x3] %vm535, %v530
    // Predicated region
    $region54: #{xlmr_ic_ner_forward.24} parent=1 // pred_check
      _
    $region55: #{xlmr_ic_ner_forward.24} parent=1 // pred_check_branch
      %538 = sbr.rel (0) target = $region57
    $region56: #{xlmr_ic_ner_forward.24} parent=1 // pred_region
      %s540 = ssub.s32 32, 32
      %541 = vsyncadd [#allocation3], %s540
      %s543 = sshll.u32 [#allocation2], 4
      %s544 = int_to_ptr.vmem [resolvable:$true] %s543
      %546 = dma.vmem_to_hbm [thread:$0]  %s544, 32, %s13, [#allocation3]
    $region57: #{xlmr_ic_ner_forward.24} parent=1 // pred_fallthru
      _
    // Predicated region
    $region58: #{xlmr_ic_ner_forward.24} parent=1 // pred_check
      _
    $region59: #{xlmr_ic_ner_forward.24} parent=1 // pred_check_branch
      %548 = sbr.rel (0) target = $region61
    $region60: #{xlmr_ic_ner_forward.24} parent=1 // pred_region
      %549 = dma.done [#allocation3], 32
    $region61: #{xlmr_ic_ner_forward.24} parent=1 // pred_fallthru
      _
    %550 = vsyncpa [#allocation3], 1

</llo_original>
